<compile_context>
chip_gen: v5e
topology: v5e:2x2
jax: 0.10.0
libtpu: 0.0.40
codegen_flags: <defaults>
</compile_context>

<pallas_src>
import functools
import math

import jax
import jax.numpy as jnp
from jax.experimental import pallas as pl
from jax.experimental.pallas import tpu as pltpu


def _conv3x3_kernel(x_ref, w_ref, b_ref, o_ref, *, H, W):
    """Fused-im2col 3x3 / stride-1 / pad-1 conv for one batch element.

    x_ref: (H+2, W+2, C)   bf16  zero-padded NHWC image (batch dim squeezed)
    w_ref: (9, C, Co_pad)  bf16  tap-major weights, C_out zero-padded to 128 lanes
    b_ref: (1, Co_pad)     f32   bias (zeros when bias=False)
    o_ref: (H*W, Co_pad)   f32   flattened, lane-dense output block
    """
    C = x_ref.shape[-1]
    Co_pad = o_ref.shape[-1]

    acc = jnp.zeros((H * W, Co_pad), jnp.float32)
    # 9 accumulated MXU matmuls over shifted VMEM windows (no HBM im2col).
    for kh in range(3):
        for kw in range(3):
            a = x_ref[kh:kh + H, kw:kw + W, :]          # (H, W, C) bf16 slice
            a = a.reshape(H * W, C)                     # layout no-op (W % 8 == 0)
            acc += jnp.dot(a, w_ref[kh * 3 + kw],       # (C, Co_pad) bf16
                           preferred_element_type=jnp.float32)
    # Co_pad is a multiple of 128 -> unmasked, lane-dense vector stores.
    o_ref[...] = acc + b_ref[...]


def _conv3x3_pallas(x_pad, w_taps, b_pad, H, W):
    """x_pad: (N, H+2, W+2, C) bf16; returns (N, H*W, Co_pad) f32."""
    N, Hp2, Wp2, C = x_pad.shape
    Co_pad = w_taps.shape[-1]

    kernel = functools.partial(_conv3x3_kernel, H=H, W=W)

    flops = 2 * N * H * W * 9 * C * Co_pad
    bytes_accessed = (x_pad.size * x_pad.dtype.itemsize
                      + w_taps.size * w_taps.dtype.itemsize
                      + b_pad.size * 4
                      + N * H * W * Co_pad * 4)

    return pl.pallas_call(
        kernel,
        out_shape=jax.ShapeDtypeStruct((N, H * W, Co_pad), jnp.float32),
        grid=(N,),
        in_specs=[
            # per-batch padded image block (batch dim squeezed away)
            pl.BlockSpec((None, Hp2, Wp2, C), lambda n: (n, 0, 0, 0)),
            # weights: constant block index -> fetched once, stays resident
            pl.BlockSpec((9, C, Co_pad), lambda n: (0, 0, 0)),
            # bias row (zeros when bias=False)
            pl.BlockSpec((1, Co_pad), lambda n: (0, 0)),
        ],
        out_specs=pl.BlockSpec((None, H * W, Co_pad), lambda n: (n, 0, 0)),
        compiler_params=pltpu.CompilerParams(
            dimension_semantics=("parallel",)),
        cost_estimate=pl.CostEstimate(
            flops=flops, transcendentals=0, bytes_accessed=bytes_accessed),
    )(x_pad, w_taps, b_pad)


class OverlapPatchEmbedPallas:
    """JAX/Pallas equivalent of the PyTorch OverlapPatchEmbed module."""

    def __init__(self, in_c=16, embed_dim=48, bias=False, *, key):
        self.in_c = in_c
        self.embed_dim = embed_dim
        self.use_bias = bias

        fan_in = in_c * 3 * 3
        bound = 1.0 / math.sqrt(fan_in)
        k_w, k_b = jax.random.split(key)

        # Conv2d 'proj' weight, OIHW, deterministic kaiming-uniform-like init.
        self.proj_w = jax.random.uniform(
            k_w, (embed_dim, in_c, 3, 3),
            minval=-bound, maxval=bound, dtype=jnp.float32)
        if bias:
            self.proj_b = jax.random.uniform(
                k_b, (embed_dim,), minval=-bound, maxval=bound, dtype=jnp.float32)
        else:
            self.proj_b = jnp.zeros((embed_dim,), jnp.float32)

        # ---- hoisted, call-invariant layout work (review item) ----
        # Pad C_out to a lane-dense multiple of 128 for unmasked stores.
        self.c_out_pad = ((embed_dim + 127) // 128) * 128
        w_hwio = jnp.transpose(self.proj_w, (2, 3, 1, 0))        # (3,3,C,Co)
        w_taps = w_hwio.reshape(9, in_c, embed_dim)              # tap-major
        w_taps = jnp.pad(w_taps,
                         ((0, 0), (0, 0), (0, self.c_out_pad - embed_dim)))
        self.w_taps = w_taps.astype(jnp.bfloat16)                # bf16 MXU operand
        self.b_pad = jnp.pad(self.proj_b,
                             (0, self.c_out_pad - embed_dim)
                             ).reshape(1, self.c_out_pad).astype(jnp.float32)

    def __call__(self, x):
        # x: (N, C, H, W) float32, NCHW like PyTorch.
        N, C, H, W = x.shape
        assert C == self.in_c

        # NCHW -> NHWC, zero-pad spatial by 1, cast to bf16 (XLA fuses under jit).
        x_nhwc = jnp.transpose(x, (0, 2, 3, 1))
        x_pad = jnp.pad(x_nhwc, ((0, 0), (1, 1), (1, 1), (0, 0))
                        ).astype(jnp.bfloat16)

        out = _conv3x3_pallas(x_pad, self.w_taps, self.b_pad, H, W)  # (N, H*W, Co_pad)
        out = out[:, :, :self.embed_dim].reshape(N, H, W, self.embed_dim)
        return jnp.transpose(out, (0, 3, 1, 2))                      # back to NCHW


if __name__ == "__main__":
    key = jax.random.PRNGKey(0)
    k_model, k_x = jax.random.split(key)

    in_c, embed_dim = 16, 48           # module defaults
    N, H, W = 2, 16, 16

    model = OverlapPatchEmbedPallas(in_c=in_c, embed_dim=embed_dim,
                                    bias=False, key=k_model)
    x = jax.random.normal(k_x, (N, in_c, H, W), dtype=jnp.float32)

    fwd = jax.jit(model.__call__)
    out = jax.block_until_ready(fwd(x))

    assert out.shape == (N, embed_dim, H, W), out.shape

    # Reference: XLA conv with the same f32 weights (== nn.Conv2d k=3, s=1, p=1, no bias).
    ref = jax.lax.conv_general_dilated(
        x, model.proj_w, window_strides=(1, 1), padding=((1, 1), (1, 1)),
        dimension_numbers=("NCHW", "OIHW", "NCHW"))
    # bf16 MXU operands with f32 accumulation -> loosened tolerance vs f32 reference.
    assert jnp.allclose(out, ref, atol=3e-2, rtol=3e-2), \
        float(jnp.max(jnp.abs(out - ref)))

    print("KERNEL_OK")
</pallas_src>

<mosaic_0001>
module attributes {stable_mosaic.version = 11 : i64} {
  func.func @_conv3x3_kernel(%arg0: i32, %arg1: memref<1x18x18x16xbf16, #tpu.memory_space<vmem>>, %arg2: memref<9x16x128xbf16, #tpu.memory_space<vmem>>, %arg3: memref<1x128xf32, #tpu.memory_space<vmem>>, %arg4: memref<1x256x128xf32, #tpu.memory_space<vmem>>) attributes {dimension_semantics = [#tpu.dimension_semantics<parallel>], iteration_bounds = array<i64: 2>, scalar_prefetch = 0 : i64, scratch_operands = 0 : i64, tpu.core_type = #tpu.core_type<tc>, window_params = [{transform_indices = @transform_0, window_bounds = array<i64: 1, 18, 18, 16>}, {pipeline_mode = #tpu.pipeline_mode<synchronous>, transform_indices = @transform_1, window_bounds = array<i64: 9, 16, 128>}, {pipeline_mode = #tpu.pipeline_mode<synchronous>, transform_indices = @transform_2, window_bounds = array<i64: 1, 128>}, {transform_indices = @transform_3, window_bounds = array<i64: 1, 256, 128>}]} {
    %cst = arith.constant 0.000000e+00 : f32
    %0 = vector.broadcast %cst : f32 to vector<256x128xf32>
    %c0 = arith.constant 0 : index
    %c0_0 = arith.constant 0 : index
    %c0_1 = arith.constant 0 : index
    %c0_2 = arith.constant 0 : index
    %1 = vector.load %arg1[%c0, %c0_0, %c0_1, %c0_2] : memref<1x18x18x16xbf16, #tpu.memory_space<vmem>>, vector<1x16x16x16xbf16>
    %2 = vector.shape_cast %1 : vector<1x16x16x16xbf16> to vector<16x16x16xbf16>
    %3 = vector.shape_cast %2 : vector<16x16x16xbf16> to vector<256x16xbf16>
    %c0_3 = arith.constant 0 : index
    %c0_4 = arith.constant 0 : index
    %c0_5 = arith.constant 0 : index
    %4 = vector.load %arg2[%c0_3, %c0_4, %c0_5] : memref<9x16x128xbf16, #tpu.memory_space<vmem>>, vector<1x16x128xbf16>
    %5 = vector.shape_cast %4 : vector<1x16x128xbf16> to vector<16x128xbf16>
    %cst_6 = arith.constant dense<0.000000e+00> : vector<256x128xf32>
    %6 = tpu.matmul %3, %5, %cst_6 {dimension_numbers = #tpu.dot_dimension_numbers<[1], [0], [0], [1], [0, 0, 1, 1], [], []>} : vector<256x16xbf16>, vector<16x128xbf16>, vector<256x128xf32> -> vector<256x128xf32>
    %7 = arith.addf %0, %6 : vector<256x128xf32>
    %c0_7 = arith.constant 0 : index
    %c0_8 = arith.constant 0 : index
    %c1 = arith.constant 1 : index
    %c0_9 = arith.constant 0 : index
    %8 = vector.load %arg1[%c0_7, %c0_8, %c1, %c0_9] : memref<1x18x18x16xbf16, #tpu.memory_space<vmem>>, vector<1x16x16x16xbf16>
    %9 = vector.shape_cast %8 : vector<1x16x16x16xbf16> to vector<16x16x16xbf16>
    %10 = vector.shape_cast %9 : vector<16x16x16xbf16> to vector<256x16xbf16>
    %c1_10 = arith.constant 1 : index
    %c0_11 = arith.constant 0 : index
    %c0_12 = arith.constant 0 : index
    %11 = vector.load %arg2[%c1_10, %c0_11, %c0_12] : memref<9x16x128xbf16, #tpu.memory_space<vmem>>, vector<1x16x128xbf16>
    %12 = vector.shape_cast %11 : vector<1x16x128xbf16> to vector<16x128xbf16>
    %cst_13 = arith.constant dense<0.000000e+00> : vector<256x128xf32>
    %13 = tpu.matmul %10, %12, %cst_13 {dimension_numbers = #tpu.dot_dimension_numbers<[1], [0], [0], [1], [0, 0, 1, 1], [], []>} : vector<256x16xbf16>, vector<16x128xbf16>, vector<256x128xf32> -> vector<256x128xf32>
    %14 = arith.addf %7, %13 : vector<256x128xf32>
    %c0_14 = arith.constant 0 : index
    %c0_15 = arith.constant 0 : index
    %c2 = arith.constant 2 : index
    %c0_16 = arith.constant 0 : index
    %15 = vector.load %arg1[%c0_14, %c0_15, %c2, %c0_16] : memref<1x18x18x16xbf16, #tpu.memory_space<vmem>>, vector<1x16x16x16xbf16>
    %16 = vector.shape_cast %15 : vector<1x16x16x16xbf16> to vector<16x16x16xbf16>
    %17 = vector.shape_cast %16 : vector<16x16x16xbf16> to vector<256x16xbf16>
    %c2_17 = arith.constant 2 : index
    %c0_18 = arith.constant 0 : index
    %c0_19 = arith.constant 0 : index
    %18 = vector.load %arg2[%c2_17, %c0_18, %c0_19] : memref<9x16x128xbf16, #tpu.memory_space<vmem>>, vector<1x16x128xbf16>
    %19 = vector.shape_cast %18 : vector<1x16x128xbf16> to vector<16x128xbf16>
    %cst_20 = arith.constant dense<0.000000e+00> : vector<256x128xf32>
    %20 = tpu.matmul %17, %19, %cst_20 {dimension_numbers = #tpu.dot_dimension_numbers<[1], [0], [0], [1], [0, 0, 1, 1], [], []>} : vector<256x16xbf16>, vector<16x128xbf16>, vector<256x128xf32> -> vector<256x128xf32>
    %21 = arith.addf %14, %20 : vector<256x128xf32>
    %c0_21 = arith.constant 0 : index
    %c1_22 = arith.constant 1 : index
    %c0_23 = arith.constant 0 : index
    %c0_24 = arith.constant 0 : index
    %22 = vector.load %arg1[%c0_21, %c1_22, %c0_23, %c0_24] : memref<1x18x18x16xbf16, #tpu.memory_space<vmem>>, vector<1x16x16x16xbf16>
    %23 = vector.shape_cast %22 : vector<1x16x16x16xbf16> to vector<16x16x16xbf16>
    %24 = vector.shape_cast %23 : vector<16x16x16xbf16> to vector<256x16xbf16>
    %c3 = arith.constant 3 : index
    %c0_25 = arith.constant 0 : index
    %c0_26 = arith.constant 0 : index
    %25 = vector.load %arg2[%c3, %c0_25, %c0_26] : memref<9x16x128xbf16, #tpu.memory_space<vmem>>, vector<1x16x128xbf16>
    %26 = vector.shape_cast %25 : vector<1x16x128xbf16> to vector<16x128xbf16>
    %cst_27 = arith.constant dense<0.000000e+00> : vector<256x128xf32>
    %27 = tpu.matmul %24, %26, %cst_27 {dimension_numbers = #tpu.dot_dimension_numbers<[1], [0], [0], [1], [0, 0, 1, 1], [], []>} : vector<256x16xbf16>, vector<16x128xbf16>, vector<256x128xf32> -> vector<256x128xf32>
    %28 = arith.addf %21, %27 : vector<256x128xf32>
    %c0_28 = arith.constant 0 : index
    %c1_29 = arith.constant 1 : index
    %c1_30 = arith.constant 1 : index
    %c0_31 = arith.constant 0 : index
    %29 = vector.load %arg1[%c0_28, %c1_29, %c1_30, %c0_31] : memref<1x18x18x16xbf16, #tpu.memory_space<vmem>>, vector<1x16x16x16xbf16>
    %30 = vector.shape_cast %29 : vector<1x16x16x16xbf16> to vector<16x16x16xbf16>
    %31 = vector.shape_cast %30 : vector<16x16x16xbf16> to vector<256x16xbf16>
    %c4 = arith.constant 4 : index
    %c0_32 = arith.constant 0 : index
    %c0_33 = arith.constant 0 : index
    %32 = vector.load %arg2[%c4, %c0_32, %c0_33] : memref<9x16x128xbf16, #tpu.memory_space<vmem>>, vector<1x16x128xbf16>
    %33 = vector.shape_cast %32 : vector<1x16x128xbf16> to vector<16x128xbf16>
    %cst_34 = arith.constant dense<0.000000e+00> : vector<256x128xf32>
    %34 = tpu.matmul %31, %33, %cst_34 {dimension_numbers = #tpu.dot_dimension_numbers<[1], [0], [0], [1], [0, 0, 1, 1], [], []>} : vector<256x16xbf16>, vector<16x128xbf16>, vector<256x128xf32> -> vector<256x128xf32>
    %35 = arith.addf %28, %34 : vector<256x128xf32>
    %c0_35 = arith.constant 0 : index
    %c1_36 = arith.constant 1 : index
    %c2_37 = arith.constant 2 : index
    %c0_38 = arith.constant 0 : index
    %36 = vector.load %arg1[%c0_35, %c1_36, %c2_37, %c0_38] : memref<1x18x18x16xbf16, #tpu.memory_space<vmem>>, vector<1x16x16x16xbf16>
    %37 = vector.shape_cast %36 : vector<1x16x16x16xbf16> to vector<16x16x16xbf16>
    %38 = vector.shape_cast %37 : vector<16x16x16xbf16> to vector<256x16xbf16>
    %c5 = arith.constant 5 : index
    %c0_39 = arith.constant 0 : index
    %c0_40 = arith.constant 0 : index
    %39 = vector.load %arg2[%c5, %c0_39, %c0_40] : memref<9x16x128xbf16, #tpu.memory_space<vmem>>, vector<1x16x128xbf16>
    %40 = vector.shape_cast %39 : vector<1x16x128xbf16> to vector<16x128xbf16>
    %cst_41 = arith.constant dense<0.000000e+00> : vector<256x128xf32>
    %41 = tpu.matmul %38, %40, %cst_41 {dimension_numbers = #tpu.dot_dimension_numbers<[1], [0], [0], [1], [0, 0, 1, 1], [], []>} : vector<256x16xbf16>, vector<16x128xbf16>, vector<256x128xf32> -> vector<256x128xf32>
    %42 = arith.addf %35, %41 : vector<256x128xf32>
    %c0_42 = arith.constant 0 : index
    %c2_43 = arith.constant 2 : index
    %c0_44 = arith.constant 0 : index
    %c0_45 = arith.constant 0 : index
    %43 = vector.load %arg1[%c0_42, %c2_43, %c0_44, %c0_45] : memref<1x18x18x16xbf16, #tpu.memory_space<vmem>>, vector<1x16x16x16xbf16>
    %44 = vector.shape_cast %43 : vector<1x16x16x16xbf16> to vector<16x16x16xbf16>
    %45 = vector.shape_cast %44 : vector<16x16x16xbf16> to vector<256x16xbf16>
    %c6 = arith.constant 6 : index
    %c0_46 = arith.constant 0 : index
    %c0_47 = arith.constant 0 : index
    %46 = vector.load %arg2[%c6, %c0_46, %c0_47] : memref<9x16x128xbf16, #tpu.memory_space<vmem>>, vector<1x16x128xbf16>
    %47 = vector.shape_cast %46 : vector<1x16x128xbf16> to vector<16x128xbf16>
    %cst_48 = arith.constant dense<0.000000e+00> : vector<256x128xf32>
    %48 = tpu.matmul %45, %47, %cst_48 {dimension_numbers = #tpu.dot_dimension_numbers<[1], [0], [0], [1], [0, 0, 1, 1], [], []>} : vector<256x16xbf16>, vector<16x128xbf16>, vector<256x128xf32> -> vector<256x128xf32>
    %49 = arith.addf %42, %48 : vector<256x128xf32>
    %c0_49 = arith.constant 0 : index
    %c2_50 = arith.constant 2 : index
    %c1_51 = arith.constant 1 : index
    %c0_52 = arith.constant 0 : index
    %50 = vector.load %arg1[%c0_49, %c2_50, %c1_51, %c0_52] : memref<1x18x18x16xbf16, #tpu.memory_space<vmem>>, vector<1x16x16x16xbf16>
    %51 = vector.shape_cast %50 : vector<1x16x16x16xbf16> to vector<16x16x16xbf16>
    %52 = vector.shape_cast %51 : vector<16x16x16xbf16> to vector<256x16xbf16>
    %c7 = arith.constant 7 : index
    %c0_53 = arith.constant 0 : index
    %c0_54 = arith.constant 0 : index
    %53 = vector.load %arg2[%c7, %c0_53, %c0_54] : memref<9x16x128xbf16, #tpu.memory_space<vmem>>, vector<1x16x128xbf16>
    %54 = vector.shape_cast %53 : vector<1x16x128xbf16> to vector<16x128xbf16>
    %cst_55 = arith.constant dense<0.000000e+00> : vector<256x128xf32>
    %55 = tpu.matmul %52, %54, %cst_55 {dimension_numbers = #tpu.dot_dimension_numbers<[1], [0], [0], [1], [0, 0, 1, 1], [], []>} : vector<256x16xbf16>, vector<16x128xbf16>, vector<256x128xf32> -> vector<256x128xf32>
    %56 = arith.addf %49, %55 : vector<256x128xf32>
    %c0_56 = arith.constant 0 : index
    %c2_57 = arith.constant 2 : index
    %c2_58 = arith.constant 2 : index
    %c0_59 = arith.constant 0 : index
    %57 = vector.load %arg1[%c0_56, %c2_57, %c2_58, %c0_59] : memref<1x18x18x16xbf16, #tpu.memory_space<vmem>>, vector<1x16x16x16xbf16>
    %58 = vector.shape_cast %57 : vector<1x16x16x16xbf16> to vector<16x16x16xbf16>
    %59 = vector.shape_cast %58 : vector<16x16x16xbf16> to vector<256x16xbf16>
    %c8 = arith.constant 8 : index
    %c0_60 = arith.constant 0 : index
    %c0_61 = arith.constant 0 : index
    %60 = vector.load %arg2[%c8, %c0_60, %c0_61] : memref<9x16x128xbf16, #tpu.memory_space<vmem>>, vector<1x16x128xbf16>
    %61 = vector.shape_cast %60 : vector<1x16x128xbf16> to vector<16x128xbf16>
    %cst_62 = arith.constant dense<0.000000e+00> : vector<256x128xf32>
    %62 = tpu.matmul %59, %61, %cst_62 {dimension_numbers = #tpu.dot_dimension_numbers<[1], [0], [0], [1], [0, 0, 1, 1], [], []>} : vector<256x16xbf16>, vector<16x128xbf16>, vector<256x128xf32> -> vector<256x128xf32>
    %63 = arith.addf %56, %62 : vector<256x128xf32>
    %c0_63 = arith.constant 0 : index
    %c0_64 = arith.constant 0 : index
    %64 = vector.load %arg3[%c0_63, %c0_64] : memref<1x128xf32, #tpu.memory_space<vmem>>, vector<1x128xf32>
    %65 = vector.broadcast %64 : vector<1x128xf32> to vector<256x128xf32>
    %66 = arith.addf %63, %65 : vector<256x128xf32>
    %c0_65 = arith.constant 0 : index
    %c0_66 = arith.constant 0 : index
    %c0_67 = arith.constant 0 : index
    %67 = vector.load %arg4[%c0_65, %c0_66, %c0_67] : memref<1x256x128xf32, #tpu.memory_space<vmem>>, vector<1x256x128xf32>
    %68 = vector.shape_cast %67 : vector<1x256x128xf32> to vector<256x128xf32>
    %69 = vector.shape_cast %66 : vector<256x128xf32> to vector<1x256x128xf32>
    tpu.vector_store %arg4[%c0_65, %c0_66, %c0_67], %69 {strides = array<i32>} : memref<1x256x128xf32, #tpu.memory_space<vmem>>, vector<1x256x128xf32>,
    return
  }
  func.func @transform_0(%arg0: i32) -> (i32, i32, i32, i32) {
    %c0_i32 = arith.constant 0 : i32
    %c0_i32_0 = arith.constant 0 : i32
    %c0_i32_1 = arith.constant 0 : i32
    %c0_i32_2 = arith.constant 0 : i32
    return %arg0, %c0_i32, %c0_i32_0, %c0_i32_1 : i32, i32, i32, i32
  }
  func.func @transform_1(%arg0: i32) -> (i32, i32, i32) {
    %c0_i32 = arith.constant 0 : i32
    %c0_i32_0 = arith.constant 0 : i32
    %c0_i32_1 = arith.constant 0 : i32
    %c0_i32_2 = arith.constant 0 : i32
    return %c0_i32, %c0_i32_0, %c0_i32_1 : i32, i32, i32
  }
  func.func @transform_2(%arg0: i32) -> (i32, i32) {
    %c0_i32 = arith.constant 0 : i32
    %c0_i32_0 = arith.constant 0 : i32
    %c0_i32_1 = arith.constant 0 : i32
    return %c0_i32, %c0_i32_0 : i32, i32
  }
  func.func @transform_3(%arg0: i32) -> (i32, i32, i32) {
    %c0_i32 = arith.constant 0 : i32
    %c0_i32_0 = arith.constant 0 : i32
    %c0_i32_1 = arith.constant 0 : i32
    return %arg0, %c0_i32, %c0_i32_0 : i32, i32, i32
  }
}

</mosaic_0001>

<llo_original>
// kernel: a_call__.1
$region0: #{a_call__.1}
  #allocation0 [shape = 'u32[]', space=smem, size = 0x4, offset = 0x4, fixed_abs, tag = 'smem constant byte address 0x4 - core index']
  #allocation1 [shape = 'u32[72,128]{1,0:T(1,128)}', space=vmem, size = 0x9000, scoped, tag = 'internal scratch']
  %s0 = inlined_call_operand.vmem [shape: bf16[2,18,18,16], index: 0, kind: input, shape index: {}]
  %s1 = inlined_call_operand.vmem [shape: bf16[9,16,128], index: 1, kind: input, shape index: {}]
  %s2 = inlined_call_operand.vmem [shape: f32[1,128], index: 2, kind: input, shape index: {}]
  %s3 = inlined_call_operand.hbm [shape: f32[2,256,128], index: 3, kind: output, shape index: {}]
  %s4 = sld [smem:[#allocation0]]
  $region45: #{a_call__.1} parent=0
    _
  %s6 = ssub.s32 1, %s4
  %s7 = scalar_select 0, %s6, %s4
  $region1: #{a_call__.1} parent=0
    #allocation2 [shape = 'u8[262144]{0}', space=vmem, size = 0x40000, scoped, tag = 'output window, operand 0']
    #allocation3 [shape = 's32[2]{0}', space=sflag, size = 0x8, scoped, tag = 'scoped memory for a_call__.1']
    %8 = vsyncpa [#allocation3], 0
    %s9 = scalar_lea.sflag [#allocation3], 1
    %10 = vsyncpa %s9, 0
    loop: start=0, step=1, limit=4
    $region2: #{a_call__.1} parent=1 // loop_pre_header
      _
    $region3: #{a_call__.1} parent=1 // loop_header
      %s12 = sphi 0, %s16
      %p13 = scmp.ge.s32.totalorder %s12, 4
      %s22 = sphi 0, %s24
      %s25 = sphi 0, %s22
      %s26 = sphi 0, %s25
      %s42 = sphi 0, %s26
      %s46 = sphi 0, %s46
      %s48 = sphi 0, %s46
      %s49 = sphi 0, %s48
      %s63 = sphi 0, %s49
      %s67 = sphi 0, %s67
      %s69 = sphi 0, %s67
      %s70 = sphi 0, %s69
      %s84 = sphi 0, %s70
      %s90 = sphi 0, %s92
      %s93 = sphi 0, %s90
      %s94 = sphi 0, %s93
      %s110 = sphi 0, %s94
    $region4: #{a_call__.1} parent=1 // loop_header_branch
      %15 = sbr.rel (%p13) target = $region8
    $region5: #{a_call__.1} parent=1 // loop_body
      %s17 = ssub.s32 %s12, 1
      %s18 = ssub.s32 %s12, 2
      %s19 = sadd.s32 %s12, 1
      %s20 = ssub.s32 %s12, %s19
      %p21 = scmp.eq.s32.totalorder %s20, 0
      %s23 = sadd.s32 %s22, 1
      %s24 = scalar_select %p21, %s22, %s23
      %p27 = pneg %p21
      %p28 = scmp.eq.s32.totalorder %s12, 1
      %p29 = por %p27, %p28
      %p30 = scmp.ne.s32.totalorder %s22, %s25
      %p31 = scmp.eq.s32.totalorder %s12, 0
      %p32 = por %p30, %p31
      %p33 = scmp.ne.s32.totalorder %s22, %s25
      %p34 = scmp.eq.s32.totalorder %s17, 1
      %p35 = por %p33, %p34
      %p36 = scmp.ne.s32.totalorder %s25, %s26
      %p37 = scmp.eq.s32.totalorder %s17, 0
      %p38 = por %p36, %p37
      %p39 = scmp.ne.s32.totalorder %s25, %s26
      %p40 = scmp.eq.s32.totalorder %s18, 1
      %p41 = por %p39, %p40
      %p43 = scmp.ne.s32.totalorder %s26, %s42
      %p44 = scmp.eq.s32.totalorder %s18, 0
      %p45 = por %p43, %p44
      %s47 = sadd.s32 %s46, 1
      %p50 = scmp.eq.s32.totalorder %s12, 1
      %p51 = scmp.ne.s32.totalorder %s46, %s48
      %p52 = scmp.eq.s32.totalorder %s12, 0
      %p53 = por %p51, %p52
      %p54 = scmp.ne.s32.totalorder %s46, %s48
      %p55 = scmp.eq.s32.totalorder %s17, 1
      %p56 = por %p54, %p55
      %p57 = scmp.ne.s32.totalorder %s48, %s49
      %p58 = scmp.eq.s32.totalorder %s17, 0
      %p59 = por %p57, %p58
      %p60 = scmp.ne.s32.totalorder %s48, %s49
      %p61 = scmp.eq.s32.totalorder %s18, 1
      %p62 = por %p60, %p61
      %p64 = scmp.ne.s32.totalorder %s49, %s63
      %p65 = scmp.eq.s32.totalorder %s18, 0
      %p66 = por %p64, %p65
      %s68 = sadd.s32 %s67, 1
      %p71 = scmp.eq.s32.totalorder %s12, 1
      %p72 = scmp.ne.s32.totalorder %s67, %s69
      %p73 = scmp.eq.s32.totalorder %s12, 0
      %p74 = por %p72, %p73
      %p75 = scmp.ne.s32.totalorder %s67, %s69
      %p76 = scmp.eq.s32.totalorder %s17, 1
      %p77 = por %p75, %p76
      %p78 = scmp.ne.s32.totalorder %s69, %s70
      %p79 = scmp.eq.s32.totalorder %s17, 0
      %p80 = por %p78, %p79
      %p81 = scmp.ne.s32.totalorder %s69, %s70
      %p82 = scmp.eq.s32.totalorder %s18, 1
      %p83 = por %p81, %p82
      %p85 = scmp.ne.s32.totalorder %s70, %s84
      %p86 = scmp.eq.s32.totalorder %s18, 0
      %p87 = por %p85, %p86
      %s88 = ssub.s32 %s12, %s19
      %p89 = scmp.eq.s32.totalorder %s88, 0
      %s91 = sadd.s32 %s90, 1
      %s92 = scalar_select %p89, %s90, %s91
      %p95 = pneg %p89
      %p96 = scmp.eq.s32.totalorder %s12, 1
      %p97 = por %p95, %p96
      %p98 = scmp.ne.s32.totalorder %s90, %s93
      %p99 = scmp.eq.s32.totalorder %s12, 0
      %p100 = por %p98, %p99
      %p101 = scmp.ne.s32.totalorder %s90, %s93
      %p102 = scmp.eq.s32.totalorder %s17, 1
      %p103 = por %p101, %p102
      %p104 = scmp.ne.s32.totalorder %s93, %s94
      %p105 = scmp.eq.s32.totalorder %s17, 0
      %p106 = por %p104, %p105
      %p107 = scmp.ne.s32.totalorder %s93, %s94
      %p108 = scmp.eq.s32.totalorder %s18, 1
      %p109 = por %p107, %p108
      %p111 = scmp.ne.s32.totalorder %s94, %s110
      %p112 = scmp.eq.s32.totalorder %s18, 0
      %p113 = por %p111, %p112
      %p114 = scmp.le.s32.totalorder 1, %s12
      %p115 = scmp.lt.s32.totalorder %s12, 3
      %p116 = pnand %p114, %p115
      %p117 = pneg %p116
      // Predicated region
      $region9: #{a_call__.1} parent=5 // pred_check
        _
      $region10: #{a_call__.1} parent=5 // pred_check_branch
        %119 = sbr.rel (%p116) target = $region12
      $region11: #{a_call__.1} parent=5 // pred_region
        %s120 = ssub.s32 %s12, 1
        // Predicated region
        $region13: #{a_call__.1} parent=11 // pred_check
          %p121 = pneg %p59
        $region14: #{a_call__.1} parent=11 // pred_check_branch
          %123 = sbr.rel (%p121) target = $region16
        $region15: #{a_call__.1} parent=11 // pred_region
          _
        $region16: #{a_call__.1} parent=11 // pred_fallthru
          _
        // Predicated region
        $region17: #{a_call__.1} parent=11 // pred_check
          %p124 = pneg %p80
        $region18: #{a_call__.1} parent=11 // pred_check_branch
          %126 = sbr.rel (%p124) target = $region20
        $region19: #{a_call__.1} parent=11 // pred_region
          _
        $region20: #{a_call__.1} parent=11 // pred_fallthru
          _
      $region12: #{a_call__.1} parent=5 // pred_fallthru
        _
      %p127 = scmp.lt.s32.totalorder %s12, 2
      // Predicated region
      $region21: #{a_call__.1} parent=5 // pred_check
        %p128 = pneg %p127
      $region22: #{a_call__.1} parent=5 // pred_check_branch
        %130 = sbr.rel (%p128) target = $region24
      $region23: #{a_call__.1} parent=5 // pred_region
        // Predicated region
        $region25: #{a_call__.1} parent=23 // pred_check
          %p131 = pneg %p32
        $region26: #{a_call__.1} parent=23 // pred_check_branch
          %133 = sbr.rel (%p131) target = $region28
        $region27: #{a_call__.1} parent=23 // pred_region
          %p134 = scmp.lt.s32.totalorder %s12, 1
          %s135 = scalar_select %p134, %s12, 1
          %s136 = smul.addr %s135, 54
          %s137 = smul.addr %s136, 4
          %s138 = scalar_lea.vmem %s0, %s137
        $region28: #{a_call__.1} parent=23 // pred_fallthru
          _
      $region24: #{a_call__.1} parent=5 // pred_fallthru
        _
      %p139 = scmp.le.s32.totalorder 1, %s12
      %p140 = scmp.lt.s32.totalorder %s12, 3
      %p141 = pnand %p139, %p140
      %p142 = pneg %p141
      // Predicated region
      $region29: #{a_call__.1} parent=5 // pred_check
        _
      $region30: #{a_call__.1} parent=5 // pred_check_branch
        %144 = sbr.rel (%p141) target = $region32
      $region31: #{a_call__.1} parent=5 // pred_region
        %s145 = ssub.s32 %s12, 1
        %p146 = scmp.lt.s32.totalorder %s17, 1
        %s147 = scalar_select %p146, %s17, 1
        %s148 = smul.addr %s147, 54
        %s149 = smul.addr %s148, 4
        %s150 = scalar_lea.vmem %s0, %s149
        %p151 = pneg %p38
        %p152 = pneg %p35
        %p153 = pneg %p59
        %p154 = pneg %p56
        %p155 = pneg %p80
        %p156 = pneg %p77
        %p157 = pneg %p106
        %p158 = pneg %p103
        %s159 = sand.u32 %s93, 1
        %s160 = scalar_lea.sflag [#allocation3], %s159
        %s161 = sand.u32 %s93, 1
        %s162 = smul.addr %s161, 256
        %s163 = scalar_lea.vmem [#allocation2], %s162
        %p164 = scmp.lt.s32.totalorder %s17, 1
        %s165 = scalar_select %p164, %s17, 1
        %s166 = smul.addr %s165, 54
        %s167 = smul.addr %s166, 4
        %s168 = scalar_lea.vmem %s0, %s167
        %v170 = vld [vmem:[%s168] sm:$0xf]
        %v171 = vld [vmem:[%s168 + $0x4] sm:$0xf]
        %v172 = vld [vmem:[%s168 + $0xc] sm:$0xf]
        %v173 = vld [vmem:[%s168 + $0x10] sm:$0xf]
        %v174 = vld [vmem:[%s168 + $0x18] sm:$0xf]
        %v175 = vld [vmem:[%s168 + $0x1c] sm:$0xf]
        %v176 = vld [vmem:[%s168 + $0x24] sm:$0xf]
        %v177 = vld [vmem:[%s168 + $0x28] sm:$0xf]
        %v178 = vld [vmem:[%s168 + $0x30] sm:$0xf]
        %v179 = vld [vmem:[%s168 + $0x34] sm:$0xf]
        %v180 = vld [vmem:[%s168 + $0x3c] sm:$0xf]
        %v181 = vld [vmem:[%s168 + $0x40] sm:$0xf]
        %v182 = vld [vmem:[%s168 + $0x48] sm:$0xf]
        %v183 = vld [vmem:[%s168 + $0x4c] sm:$0xf]
        %v184 = vld [vmem:[%s168 + $0x54] sm:$0xf]
        %v185 = vld [vmem:[%s168 + $0x58] sm:$0xf]
        %v186 = vld [vmem:[%s168 + $0x60] sm:$0xf]
        %v187 = vld [vmem:[%s168 + $0x64] sm:$0xf]
        %v188 = vld [vmem:[%s168 + $0x6c] sm:$0xf]
        %v189 = vld [vmem:[%s168 + $0x70] sm:$0xf]
        %v190 = vld [vmem:[%s168 + $0x78] sm:$0xf]
        %v191 = vld [vmem:[%s168 + $0x7c] sm:$0xf]
        %v192 = vld [vmem:[%s168 + $0x84] sm:$0xf]
        %v193 = vld [vmem:[%s168 + $0x88] sm:$0xf]
        %v194 = vld [vmem:[%s168 + $0x90] sm:$0xf]
        %v195 = vld [vmem:[%s168 + $0x94] sm:$0xf]
        %v196 = vld [vmem:[%s168 + $0x9c] sm:$0xf]
        %v197 = vld [vmem:[%s168 + $0xa0] sm:$0xf]
        %v198 = vld [vmem:[%s168 + $0xa8] sm:$0xf]
        %v199 = vld [vmem:[%s168 + $0xac] sm:$0xf]
        %v200 = vld [vmem:[%s168 + $0xb4] sm:$0xf]
        %v201 = vld [vmem:[%s168 + $0xb8] sm:$0xf]
        %v202 = vld [vmem:[%s1] sm:$0xf]
        %v203 = vld [vmem:[%s1 + $0x4] sm:$0xf]
        %v204 = vld [vmem:[%s168 + $0x8] sm:$0x1]
        %v205 = vld [vmem:[%s168 + $0x14] sm:$0x1]
        %v206 = vld [vmem:[%s168 + $0x20] sm:$0x1]
        %v207 = vld [vmem:[%s168 + $0x2c] sm:$0x1]
        %v208 = vld [vmem:[%s168 + $0x38] sm:$0x1]
        %v209 = vld [vmem:[%s168 + $0x44] sm:$0x1]
        %v210 = vld [vmem:[%s168 + $0x50] sm:$0x1]
        %v211 = vld [vmem:[%s168 + $0x5c] sm:$0x1]
        %v212 = vld [vmem:[%s168 + $0x68] sm:$0x1]
        %v213 = vld [vmem:[%s168 + $0x74] sm:$0x1]
        %v214 = vld [vmem:[%s168 + $0x80] sm:$0x1]
        %v215 = vld [vmem:[%s168 + $0x8c] sm:$0x1]
        %v216 = vld [vmem:[%s168 + $0x98] sm:$0x1]
        %v217 = vld [vmem:[%s168 + $0xa4] sm:$0x1]
        %v218 = vld [vmem:[%s168 + $0xb0] sm:$0x1]
        %v219 = vld [vmem:[%s168 + $0xbc] sm:$0x1]
        %vm220 = vsmask.f32 3328
        %vm221 = vsmask.f32 7440
        %vm222 = vmor %vm220, %vm221
        %v224 = vshrl.u32 %v170, 16
        %v226 = vrot.slane %v224, 4
        %v227 = vshll.u32 %v170, 16
        %v229 = vrot.slane %v227, 5
        %v230 = vor.u32 %v226, %v229
        %v231 = vrot.slane %v230, 4
        %v233 = vshll.u32 %v171, 16
        %v235 = vrot.slane %v233, 5
        %v236 = vsel %vm222, %v231, %v235
        %v237 = vshrl.u32 %v171, 16
        %v239 = vrot.slane %v237, 4
        %v240 = vor.u32 %v239, %v235
        %v241 = vrot.slane %v240, 4
        %v243 = vshll.u32 %v204, 16
        %v245 = vrot.slane %v243, 5
        %v246 = vsel %vm222, %v241, %v245
        %v248 = vshrl.u32 %v172, 16
        %v250 = vrot.slane %v248, 4
        %v251 = vshll.u32 %v172, 16
        %v253 = vrot.slane %v251, 5
        %v254 = vor.u32 %v250, %v253
        %v255 = vrot.slane %v254, 4
        %v257 = vshll.u32 %v173, 16
        %v259 = vrot.slane %v257, 5
        %v260 = vsel %vm222, %v255, %v259
        %v261 = vshrl.u32 %v173, 16
        %v263 = vrot.slane %v261, 4
        %v264 = vor.u32 %v263, %v259
        %v265 = vrot.slane %v264, 4
        %v267 = vshll.u32 %v205, 16
        %v269 = vrot.slane %v267, 5
        %v270 = vsel %vm222, %v265, %v269
        %v272 = vshrl.u32 %v174, 16
        %v274 = vrot.slane %v272, 4
        %v275 = vshll.u32 %v174, 16
        %v277 = vrot.slane %v275, 5
        %v278 = vor.u32 %v274, %v277
        %v279 = vrot.slane %v278, 4
        %v281 = vshll.u32 %v175, 16
        %v283 = vrot.slane %v281, 5
        %v284 = vsel %vm222, %v279, %v283
        %v285 = vshrl.u32 %v175, 16
        %v287 = vrot.slane %v285, 4
        %v288 = vor.u32 %v287, %v283
        %v289 = vrot.slane %v288, 4
        %v291 = vshll.u32 %v206, 16
        %v293 = vrot.slane %v291, 5
        %v294 = vsel %vm222, %v289, %v293
        %v296 = vshrl.u32 %v176, 16
        %v298 = vrot.slane %v296, 4
        %v299 = vshll.u32 %v176, 16
        %v301 = vrot.slane %v299, 5
        %v302 = vor.u32 %v298, %v301
        %v303 = vrot.slane %v302, 4
        %v305 = vshll.u32 %v177, 16
        %v307 = vrot.slane %v305, 5
        %v308 = vsel %vm222, %v303, %v307
        %v309 = vshrl.u32 %v177, 16
        %v311 = vrot.slane %v309, 4
        %v312 = vor.u32 %v311, %v307
        %v313 = vrot.slane %v312, 4
        %v315 = vshll.u32 %v207, 16
        %v317 = vrot.slane %v315, 5
        %v318 = vsel %vm222, %v313, %v317
        %v320 = vshrl.u32 %v178, 16
        %v322 = vrot.slane %v320, 4
        %v323 = vshll.u32 %v178, 16
        %v325 = vrot.slane %v323, 5
        %v326 = vor.u32 %v322, %v325
        %v327 = vrot.slane %v326, 4
        %v329 = vshll.u32 %v179, 16
        %v331 = vrot.slane %v329, 5
        %v332 = vsel %vm222, %v327, %v331
        %v333 = vshrl.u32 %v179, 16
        %v335 = vrot.slane %v333, 4
        %v336 = vor.u32 %v335, %v331
        %v337 = vrot.slane %v336, 4
        %v339 = vshll.u32 %v208, 16
        %v341 = vrot.slane %v339, 5
        %v342 = vsel %vm222, %v337, %v341
        %v344 = vshrl.u32 %v180, 16
        %v346 = vrot.slane %v344, 4
        %v347 = vshll.u32 %v180, 16
        %v349 = vrot.slane %v347, 5
        %v350 = vor.u32 %v346, %v349
        %v351 = vrot.slane %v350, 4
        %v353 = vshll.u32 %v181, 16
        %v355 = vrot.slane %v353, 5
        %v356 = vsel %vm222, %v351, %v355
        %v357 = vshrl.u32 %v181, 16
        %v359 = vrot.slane %v357, 4
        %v360 = vor.u32 %v359, %v355
        %v361 = vrot.slane %v360, 4
        %v363 = vshll.u32 %v209, 16
        %v365 = vrot.slane %v363, 5
        %v366 = vsel %vm222, %v361, %v365
        %v368 = vshrl.u32 %v182, 16
        %v370 = vrot.slane %v368, 4
        %v371 = vshll.u32 %v182, 16
        %v373 = vrot.slane %v371, 5
        %v374 = vor.u32 %v370, %v373
        %v375 = vrot.slane %v374, 4
        %v377 = vshll.u32 %v183, 16
        %v379 = vrot.slane %v377, 5
        %v380 = vsel %vm222, %v375, %v379
        %v381 = vshrl.u32 %v183, 16
        %v383 = vrot.slane %v381, 4
        %v384 = vor.u32 %v383, %v379
        %v385 = vrot.slane %v384, 4
        %v387 = vshll.u32 %v210, 16
        %v389 = vrot.slane %v387, 5
        %v390 = vsel %vm222, %v385, %v389
        %v392 = vshrl.u32 %v184, 16
        %v394 = vrot.slane %v392, 4
        %v395 = vshll.u32 %v184, 16
        %v397 = vrot.slane %v395, 5
        %v398 = vor.u32 %v394, %v397
        %v399 = vrot.slane %v398, 4
        %v401 = vshll.u32 %v185, 16
        %v403 = vrot.slane %v401, 5
        %v404 = vsel %vm222, %v399, %v403
        %v405 = vshrl.u32 %v185, 16
        %v407 = vrot.slane %v405, 4
        %v408 = vor.u32 %v407, %v403
        %v409 = vrot.slane %v408, 4
        %v411 = vshll.u32 %v211, 16
        %v413 = vrot.slane %v411, 5
        %v414 = vsel %vm222, %v409, %v413
        %v416 = vshrl.u32 %v186, 16
        %v418 = vrot.slane %v416, 4
        %v419 = vshll.u32 %v186, 16
        %v421 = vrot.slane %v419, 5
        %v422 = vor.u32 %v418, %v421
        %v423 = vrot.slane %v422, 4
        %v425 = vshll.u32 %v187, 16
        %v427 = vrot.slane %v425, 5
        %v428 = vsel %vm222, %v423, %v427
        %v429 = vshrl.u32 %v187, 16
        %v431 = vrot.slane %v429, 4
        %v432 = vor.u32 %v431, %v427
        %v433 = vrot.slane %v432, 4
        %v435 = vshll.u32 %v212, 16
        %v437 = vrot.slane %v435, 5
        %v438 = vsel %vm222, %v433, %v437
        %v440 = vshrl.u32 %v188, 16
        %v442 = vrot.slane %v440, 4
        %v443 = vshll.u32 %v188, 16
        %v445 = vrot.slane %v443, 5
        %v446 = vor.u32 %v442, %v445
        %v447 = vrot.slane %v446, 4
        %v449 = vshll.u32 %v189, 16
        %v451 = vrot.slane %v449, 5
        %v452 = vsel %vm222, %v447, %v451
        %v453 = vshrl.u32 %v189, 16
        %v455 = vrot.slane %v453, 4
        %v456 = vor.u32 %v455, %v451
        %v457 = vrot.slane %v456, 4
        %v459 = vshll.u32 %v213, 16
        %v461 = vrot.slane %v459, 5
        %v462 = vsel %vm222, %v457, %v461
        %v464 = vshrl.u32 %v190, 16
        %v466 = vrot.slane %v464, 4
        %v467 = vshll.u32 %v190, 16
        %v469 = vrot.slane %v467, 5
        %v470 = vor.u32 %v466, %v469
        %v471 = vrot.slane %v470, 4
        %v473 = vshll.u32 %v191, 16
        %v475 = vrot.slane %v473, 5
        %v476 = vsel %vm222, %v471, %v475
        %v477 = vshrl.u32 %v191, 16
        %v479 = vrot.slane %v477, 4
        %v480 = vor.u32 %v479, %v475
        %v481 = vrot.slane %v480, 4
        %v483 = vshll.u32 %v214, 16
        %v485 = vrot.slane %v483, 5
        %v486 = vsel %vm222, %v481, %v485
        %v488 = vshrl.u32 %v192, 16
        %v490 = vrot.slane %v488, 4
        %v491 = vshll.u32 %v192, 16
        %v493 = vrot.slane %v491, 5
        %v494 = vor.u32 %v490, %v493
        %v495 = vrot.slane %v494, 4
        %v497 = vshll.u32 %v193, 16
        %v499 = vrot.slane %v497, 5
        %v500 = vsel %vm222, %v495, %v499
        %v501 = vshrl.u32 %v193, 16
        %v503 = vrot.slane %v501, 4
        %v504 = vor.u32 %v503, %v499
        %v505 = vrot.slane %v504, 4
        %v507 = vshll.u32 %v215, 16
        %v509 = vrot.slane %v507, 5
        %v510 = vsel %vm222, %v505, %v509
        %v512 = vshrl.u32 %v194, 16
        %v514 = vrot.slane %v512, 4
        %v515 = vshll.u32 %v194, 16
        %v517 = vrot.slane %v515, 5
        %v518 = vor.u32 %v514, %v517
        %v519 = vrot.slane %v518, 4
        %v521 = vshll.u32 %v195, 16
        %v523 = vrot.slane %v521, 5
        %v524 = vsel %vm222, %v519, %v523
        %v525 = vshrl.u32 %v195, 16
        %v527 = vrot.slane %v525, 4
        %v528 = vor.u32 %v527, %v523
        %v529 = vrot.slane %v528, 4
        %v531 = vshll.u32 %v216, 16
        %v533 = vrot.slane %v531, 5
        %v534 = vsel %vm222, %v529, %v533
        %v536 = vshrl.u32 %v196, 16
        %v538 = vrot.slane %v536, 4
        %v539 = vshll.u32 %v196, 16
        %v541 = vrot.slane %v539, 5
        %v542 = vor.u32 %v538, %v541
        %v543 = vrot.slane %v542, 4
        %v545 = vshll.u32 %v197, 16
        %v547 = vrot.slane %v545, 5
        %v548 = vsel %vm222, %v543, %v547
        %v549 = vshrl.u32 %v197, 16
        %v551 = vrot.slane %v549, 4
        %v552 = vor.u32 %v551, %v547
        %v553 = vrot.slane %v552, 4
        %v555 = vshll.u32 %v217, 16
        %v557 = vrot.slane %v555, 5
        %v558 = vsel %vm222, %v553, %v557
        %v560 = vshrl.u32 %v198, 16
        %v562 = vrot.slane %v560, 4
        %v563 = vshll.u32 %v198, 16
        %v565 = vrot.slane %v563, 5
        %v566 = vor.u32 %v562, %v565
        %v567 = vrot.slane %v566, 4
        %v569 = vshll.u32 %v199, 16
        %v571 = vrot.slane %v569, 5
        %v572 = vsel %vm222, %v567, %v571
        %v573 = vshrl.u32 %v199, 16
        %v575 = vrot.slane %v573, 4
        %v576 = vor.u32 %v575, %v571
        %v577 = vrot.slane %v576, 4
        %v579 = vshll.u32 %v218, 16
        %v581 = vrot.slane %v579, 5
        %v582 = vsel %vm222, %v577, %v581
        %v584 = vshrl.u32 %v200, 16
        %v586 = vrot.slane %v584, 4
        %v587 = vshll.u32 %v200, 16
        %v589 = vrot.slane %v587, 5
        %v590 = vor.u32 %v586, %v589
        %v591 = vrot.slane %v590, 4
        %v593 = vshll.u32 %v201, 16
        %v595 = vrot.slane %v593, 5
        %v596 = vsel %vm222, %v591, %v595
        %v597 = vshrl.u32 %v201, 16
        %v599 = vrot.slane %v597, 4
        %v600 = vor.u32 %v599, %v595
        %v601 = vrot.slane %v600, 4
        %v603 = vshll.u32 %v219, 16
        %v605 = vrot.slane %v603, 5
        %v606 = vsel %vm222, %v601, %v605
        %s607 = scalar_lea.vmem %s1, 8
        %v608 = vld [vmem:[%s607] sm:$0xf]
        %v609 = vld [vmem:[%s607 + $0x4] sm:$0xf]
        %v610 = vunpack.c.l.b16 %v236
        %v611 = vunpack.c.l.b16 %v246
        %v612 = vunpack.c.l.b16 %v260
        %v613 = vunpack.c.l.b16 %v270
        %v614 = vunpack.c.l.b16 %v284
        %v615 = vunpack.c.l.b16 %v294
        %v616 = vunpack.c.l.b16 %v308
        %v617 = vunpack.c.l.b16 %v318
        %v618 = vunpack.c.l.b16 %v332
        %v619 = vunpack.c.l.b16 %v342
        %v620 = vunpack.c.l.b16 %v356
        %v621 = vunpack.c.l.b16 %v366
        %v622 = vunpack.c.l.b16 %v380
        %v623 = vunpack.c.l.b16 %v390
        %v624 = vunpack.c.l.b16 %v404
        %v625 = vunpack.c.l.b16 %v414
        %v626 = vunpack.c.l.b16 %v428
        %v627 = vunpack.c.l.b16 %v438
        %v628 = vunpack.c.l.b16 %v452
        %v629 = vunpack.c.l.b16 %v462
        %v630 = vunpack.c.l.b16 %v476
        %v631 = vunpack.c.l.b16 %v486
        %v632 = vunpack.c.l.b16 %v500
        %v633 = vunpack.c.l.b16 %v510
        %v634 = vunpack.c.l.b16 %v524
        %v635 = vunpack.c.l.b16 %v534
        %v636 = vunpack.c.l.b16 %v548
        %v637 = vunpack.c.l.b16 %v558
        %v638 = vunpack.c.l.b16 %v572
        %v639 = vunpack.c.l.b16 %v582
        %v640 = vunpack.c.l.b16 %v596
        %v641 = vunpack.c.l.b16 %v606
        %v642 = vpack.c.b16 %v611, %v610
        %v643 = vpack.c.b16 %v613, %v612
        %v644 = vpack.c.b16 %v615, %v614
        %v645 = vpack.c.b16 %v617, %v616
        %v646 = vpack.c.b16 %v619, %v618
        %v647 = vpack.c.b16 %v621, %v620
        %v648 = vpack.c.b16 %v623, %v622
        %v649 = vpack.c.b16 %v625, %v624
        %v650 = vpack.c.b16 %v627, %v626
        %v651 = vpack.c.b16 %v629, %v628
        %v652 = vpack.c.b16 %v631, %v630
        %v653 = vpack.c.b16 %v633, %v632
        %v654 = vpack.c.b16 %v635, %v634
        %v655 = vpack.c.b16 %v637, %v636
        %v656 = vpack.c.b16 %v639, %v638
        %v657 = vpack.c.b16 %v641, %v640
        %v660 = vunpack.c.l.b16 %v608
        %v661 = vunpack.c.l.b16 %v609
        %v662 = vpack.c.b16 %v661, %v660
        %vm664 = vcmask 130048
        %v666 = vsel %vm664, %v642, 0
        %v669 = vsel %vm664, %v643, 0
        %v672 = vsel %vm664, %v644, 0
        %v675 = vsel %vm664, %v645, 0
        %v678 = vsel %vm664, %v646, 0
        %v681 = vsel %vm664, %v647, 0
        %v684 = vsel %vm664, %v648, 0
        %v687 = vsel %vm664, %v649, 0
        %v690 = vsel %vm664, %v650, 0
        %v693 = vsel %vm664, %v651, 0
        %v696 = vsel %vm664, %v652, 0
        %v699 = vsel %vm664, %v653, 0
        %v702 = vsel %vm664, %v654, 0
        %v705 = vsel %vm664, %v655, 0
        %v708 = vsel %vm664, %v656, 0
        %v711 = vsel %vm664, %v657, 0
        %713 = vmatpush.bf16.msra.mxu0 0
        %714 = vmatpush.bf16.msra.mxu0 0
        %715 = vmatpush.bf16.msra.mxu0 0
        %716 = vmatpush.bf16.msra.mxu0 0
        %717 = vmatpush.bf16.msra.mxu0 0
        %718 = vmatpush.bf16.msra.mxu0 0
        %719 = vmatpush.bf16.msra.mxu0 0
        %720 = vmatpush.bf16.msra.mxu0 %v662
        %721 = vmatmul.bf16.gmra.mxu0 %v666
        %v722 = vpop.f32.mrf.mxu0
        %v723 = vadd.f32 0.0, %v722
        %v724 = vpop.f32.mrf.mxu0
        %v725 = vadd.f32 0.0, %v724
        %726 = vmatmul.bf16.gmra.mxu0 %v669
        %v727 = vpop.f32.mrf.mxu0
        %v728 = vadd.f32 0.0, %v727
        %v729 = vpop.f32.mrf.mxu0
        %v730 = vadd.f32 0.0, %v729
        %731 = vmatmul.bf16.gmra.mxu0 %v672
        %v732 = vpop.f32.mrf.mxu0
        %v733 = vadd.f32 0.0, %v732
        %v734 = vpop.f32.mrf.mxu0
        %v735 = vadd.f32 0.0, %v734
        %736 = vmatmul.bf16.gmra.mxu0 %v675
        %v737 = vpop.f32.mrf.mxu0
        %v738 = vadd.f32 0.0, %v737
        %v739 = vpop.f32.mrf.mxu0
        %v740 = vadd.f32 0.0, %v739
        %741 = vmatmul.bf16.gmra.mxu0 %v678
        %v742 = vpop.f32.mrf.mxu0
        %v743 = vadd.f32 0.0, %v742
        %v744 = vpop.f32.mrf.mxu0
        %v745 = vadd.f32 0.0, %v744
        %746 = vmatmul.bf16.gmra.mxu0 %v681
        %v747 = vpop.f32.mrf.mxu0
        %v748 = vadd.f32 0.0, %v747
        %v749 = vpop.f32.mrf.mxu0
        %v750 = vadd.f32 0.0, %v749
        %751 = vmatmul.bf16.gmra.mxu0 %v684
        %v752 = vpop.f32.mrf.mxu0
        %v753 = vadd.f32 0.0, %v752
        %v754 = vpop.f32.mrf.mxu0
        %v755 = vadd.f32 0.0, %v754
        %756 = vmatmul.bf16.gmra.mxu0 %v687
        %v757 = vpop.f32.mrf.mxu0
        %v758 = vadd.f32 0.0, %v757
        %v759 = vpop.f32.mrf.mxu0
        %v760 = vadd.f32 0.0, %v759
        %761 = vmatmul.bf16.gmra.mxu0 %v690
        %v762 = vpop.f32.mrf.mxu0
        %v763 = vadd.f32 0.0, %v762
        %v764 = vpop.f32.mrf.mxu0
        %v765 = vadd.f32 0.0, %v764
        %766 = vmatmul.bf16.gmra.mxu0 %v693
        %v767 = vpop.f32.mrf.mxu0
        %v768 = vadd.f32 0.0, %v767
        %v769 = vpop.f32.mrf.mxu0
        %v770 = vadd.f32 0.0, %v769
        %771 = vmatmul.bf16.gmra.mxu0 %v696
        %v772 = vpop.f32.mrf.mxu0
        %v773 = vadd.f32 0.0, %v772
        %v774 = vpop.f32.mrf.mxu0
        %v775 = vadd.f32 0.0, %v774
        %776 = vmatmul.bf16.gmra.mxu0 %v699
        %v777 = vpop.f32.mrf.mxu0
        %v778 = vadd.f32 0.0, %v777
        %v779 = vpop.f32.mrf.mxu0
        %v780 = vadd.f32 0.0, %v779
        %781 = vmatmul.bf16.gmra.mxu0 %v702
        %v782 = vpop.f32.mrf.mxu0
        %v783 = vadd.f32 0.0, %v782
        %v784 = vpop.f32.mrf.mxu0
        %v785 = vadd.f32 0.0, %v784
        %786 = vmatmul.bf16.gmra.mxu0 %v705
        %v787 = vpop.f32.mrf.mxu0
        %v788 = vadd.f32 0.0, %v787
        %v789 = vpop.f32.mrf.mxu0
        %v790 = vadd.f32 0.0, %v789
        %791 = vmatmul.bf16.gmra.mxu0 %v708
        %v792 = vpop.f32.mrf.mxu0
        %v793 = vadd.f32 0.0, %v792
        %v794 = vpop.f32.mrf.mxu0
        %v795 = vadd.f32 0.0, %v794
        %796 = vmatmul.bf16.gmra.mxu0 %v711
        %v797 = vpop.f32.mrf.mxu0
        %v798 = vadd.f32 0.0, %v797
        %v799 = vpop.f32.mrf.mxu0
        %v800 = vadd.f32 0.0, %v799
        %801 = vdwg.mxu0
        %v834 = vunpack.c.l.b16 %v170
        %v835 = vunpack.c.l.b16 %v171
        %v836 = vunpack.c.l.b16 %v172
        %v837 = vunpack.c.l.b16 %v173
        %v838 = vunpack.c.l.b16 %v174
        %v839 = vunpack.c.l.b16 %v175
        %v840 = vunpack.c.l.b16 %v176
        %v841 = vunpack.c.l.b16 %v177
        %v842 = vunpack.c.l.b16 %v178
        %v843 = vunpack.c.l.b16 %v179
        %v844 = vunpack.c.l.b16 %v180
        %v845 = vunpack.c.l.b16 %v181
        %v846 = vunpack.c.l.b16 %v182
        %v847 = vunpack.c.l.b16 %v183
        %v848 = vunpack.c.l.b16 %v184
        %v849 = vunpack.c.l.b16 %v185
        %v850 = vunpack.c.l.b16 %v186
        %v851 = vunpack.c.l.b16 %v187
        %v852 = vunpack.c.l.b16 %v188
        %v853 = vunpack.c.l.b16 %v189
        %v854 = vunpack.c.l.b16 %v190
        %v855 = vunpack.c.l.b16 %v191
        %v856 = vunpack.c.l.b16 %v192
        %v857 = vunpack.c.l.b16 %v193
        %v858 = vunpack.c.l.b16 %v194
        %v859 = vunpack.c.l.b16 %v195
        %v860 = vunpack.c.l.b16 %v196
        %v861 = vunpack.c.l.b16 %v197
        %v862 = vunpack.c.l.b16 %v198
        %v863 = vunpack.c.l.b16 %v199
        %v864 = vunpack.c.l.b16 %v200
        %v865 = vunpack.c.l.b16 %v201
        %v866 = vpack.c.b16 %v835, %v834
        %v867 = vpack.c.b16 %v837, %v836
        %v868 = vpack.c.b16 %v839, %v838
        %v869 = vpack.c.b16 %v841, %v840
        %v870 = vpack.c.b16 %v843, %v842
        %v871 = vpack.c.b16 %v845, %v844
        %v872 = vpack.c.b16 %v847, %v846
        %v873 = vpack.c.b16 %v849, %v848
        %v874 = vpack.c.b16 %v851, %v850
        %v875 = vpack.c.b16 %v853, %v852
        %v876 = vpack.c.b16 %v855, %v854
        %v877 = vpack.c.b16 %v857, %v856
        %v878 = vpack.c.b16 %v859, %v858
        %v879 = vpack.c.b16 %v861, %v860
        %v880 = vpack.c.b16 %v863, %v862
        %v881 = vpack.c.b16 %v865, %v864
        %v884 = vunpack.c.l.b16 %v202
        %v885 = vunpack.c.l.b16 %v203
        %v886 = vpack.c.b16 %v885, %v884
        %v889 = vsel %vm664, %v866, 0
        %v892 = vsel %vm664, %v867, 0
        %v895 = vsel %vm664, %v868, 0
        %v898 = vsel %vm664, %v869, 0
        %v901 = vsel %vm664, %v870, 0
        %v904 = vsel %vm664, %v871, 0
        %v907 = vsel %vm664, %v872, 0
        %v910 = vsel %vm664, %v873, 0
        %v913 = vsel %vm664, %v874, 0
        %v916 = vsel %vm664, %v875, 0
        %v919 = vsel %vm664, %v876, 0
        %v922 = vsel %vm664, %v877, 0
        %v925 = vsel %vm664, %v878, 0
        %v928 = vsel %vm664, %v879, 0
        %v931 = vsel %vm664, %v880, 0
        %v934 = vsel %vm664, %v881, 0
        %936 = vmatpush.bf16.msra.mxu0 0
        %937 = vmatpush.bf16.msra.mxu0 0
        %938 = vmatpush.bf16.msra.mxu0 0
        %939 = vmatpush.bf16.msra.mxu0 0
        %940 = vmatpush.bf16.msra.mxu0 0
        %941 = vmatpush.bf16.msra.mxu0 0
        %942 = vmatpush.bf16.msra.mxu0 0
        %943 = vmatpush.bf16.msra.mxu0 %v886
        %944 = vmatmul.bf16.gmra.mxu0 %v889
        %v945 = vpop.f32.mrf.mxu0
        %v946 = vadd.f32 %v723, %v945
        %v947 = vpop.f32.mrf.mxu0
        %v948 = vadd.f32 %v725, %v947
        %949 = vmatmul.bf16.gmra.mxu0 %v892
        %v950 = vpop.f32.mrf.mxu0
        %v951 = vadd.f32 %v728, %v950
        %v952 = vpop.f32.mrf.mxu0
        %v953 = vadd.f32 %v730, %v952
        %954 = vmatmul.bf16.gmra.mxu0 %v895
        %v955 = vpop.f32.mrf.mxu0
        %v956 = vadd.f32 %v733, %v955
        %v957 = vpop.f32.mrf.mxu0
        %v958 = vadd.f32 %v735, %v957
        %959 = vmatmul.bf16.gmra.mxu0 %v898
        %v960 = vpop.f32.mrf.mxu0
        %v961 = vadd.f32 %v738, %v960
        %v962 = vpop.f32.mrf.mxu0
        %v963 = vadd.f32 %v740, %v962
        %964 = vmatmul.bf16.gmra.mxu0 %v901
        %v965 = vpop.f32.mrf.mxu0
        %v966 = vadd.f32 %v743, %v965
        %v967 = vpop.f32.mrf.mxu0
        %v968 = vadd.f32 %v745, %v967
        %969 = vmatmul.bf16.gmra.mxu0 %v904
        %v970 = vpop.f32.mrf.mxu0
        %v971 = vadd.f32 %v748, %v970
        %v972 = vpop.f32.mrf.mxu0
        %v973 = vadd.f32 %v750, %v972
        %974 = vmatmul.bf16.gmra.mxu0 %v907
        %v975 = vpop.f32.mrf.mxu0
        %v976 = vadd.f32 %v753, %v975
        %v977 = vpop.f32.mrf.mxu0
        %v978 = vadd.f32 %v755, %v977
        %979 = vmatmul.bf16.gmra.mxu0 %v910
        %v980 = vpop.f32.mrf.mxu0
        %v981 = vadd.f32 %v758, %v980
        %v982 = vpop.f32.mrf.mxu0
        %v983 = vadd.f32 %v760, %v982
        %984 = vmatmul.bf16.gmra.mxu0 %v913
        %v985 = vpop.f32.mrf.mxu0
        %v986 = vadd.f32 %v763, %v985
        %v987 = vpop.f32.mrf.mxu0
        %v988 = vadd.f32 %v765, %v987
        %989 = vmatmul.bf16.gmra.mxu0 %v916
        %v990 = vpop.f32.mrf.mxu0
        %v991 = vadd.f32 %v768, %v990
        %v992 = vpop.f32.mrf.mxu0
        %v993 = vadd.f32 %v770, %v992
        %994 = vmatmul.bf16.gmra.mxu0 %v919
        %v995 = vpop.f32.mrf.mxu0
        %v996 = vadd.f32 %v773, %v995
        %v997 = vpop.f32.mrf.mxu0
        %v998 = vadd.f32 %v775, %v997
        %999 = vmatmul.bf16.gmra.mxu0 %v922
        %v1000 = vpop.f32.mrf.mxu0
        %v1001 = vadd.f32 %v778, %v1000
        %v1002 = vpop.f32.mrf.mxu0
        %v1003 = vadd.f32 %v780, %v1002
        %1004 = vmatmul.bf16.gmra.mxu0 %v925
        %v1005 = vpop.f32.mrf.mxu0
        %v1006 = vadd.f32 %v783, %v1005
        %v1007 = vpop.f32.mrf.mxu0
        %v1008 = vadd.f32 %v785, %v1007
        %1009 = vmatmul.bf16.gmra.mxu0 %v928
        %v1010 = vpop.f32.mrf.mxu0
        %v1011 = vadd.f32 %v788, %v1010
        %v1012 = vpop.f32.mrf.mxu0
        %v1013 = vadd.f32 %v790, %v1012
        %1014 = vmatmul.bf16.gmra.mxu0 %v931
        %v1015 = vpop.f32.mrf.mxu0
        %v1016 = vadd.f32 %v793, %v1015
        %v1017 = vpop.f32.mrf.mxu0
        %v1018 = vadd.f32 %v795, %v1017
        %1019 = vmatmul.bf16.gmra.mxu0 %v934
        %v1020 = vpop.f32.mrf.mxu0
        %v1021 = vadd.f32 %v798, %v1020
        %v1022 = vpop.f32.mrf.mxu0
        %v1023 = vadd.f32 %v800, %v1022
        %1024 = vdwg.mxu0
        %v1025 = vld [vmem:[%s168] sm:$0xe]
        %v1026 = vld [vmem:[%s168 + $0xc] sm:$0xe]
        %v1027 = vld [vmem:[%s168 + $0x18] sm:$0xe]
        %v1028 = vld [vmem:[%s168 + $0x24] sm:$0xe]
        %v1029 = vld [vmem:[%s168 + $0x30] sm:$0xe]
        %v1030 = vld [vmem:[%s168 + $0x3c] sm:$0xe]
        %v1031 = vld [vmem:[%s168 + $0x48] sm:$0xe]
        %v1032 = vld [vmem:[%s168 + $0x54] sm:$0xe]
        %v1033 = vld [vmem:[%s168 + $0x60] sm:$0xe]
        %v1034 = vld [vmem:[%s168 + $0x6c] sm:$0xe]
        %v1035 = vld [vmem:[%s168 + $0x78] sm:$0xe]
        %v1036 = vld [vmem:[%s168 + $0x84] sm:$0xe]
        %v1037 = vld [vmem:[%s168 + $0x90] sm:$0xe]
        %v1038 = vld [vmem:[%s168 + $0x9c] sm:$0xe]
        %v1039 = vld [vmem:[%s168 + $0xa8] sm:$0xe]
        %v1040 = vld [vmem:[%s168 + $0xb4] sm:$0xe]
        %vm1073 = vcmask 1042432
        %vm1074 = vcmask 1046532
        %vm1075 = vmor %vm1073, %vm1074
        %v1076 = vrot.slane %v1025, 5
        %v1077 = vrot.slane %v1076, 4
        %v1078 = vrot.slane %v171, 5
        %v1079 = vsel %vm1075, %v1077, %v1078
        %v1080 = vrot.slane %v1078, 4
        %v1081 = vrot.slane %v204, 5
        %v1082 = vsel %vm1075, %v1080, %v1081
        %v1083 = vrot.slane %v1026, 5
        %v1084 = vrot.slane %v1083, 4
        %v1085 = vrot.slane %v173, 5
        %v1086 = vsel %vm1075, %v1084, %v1085
        %v1087 = vrot.slane %v1085, 4
        %v1088 = vrot.slane %v205, 5
        %v1089 = vsel %vm1075, %v1087, %v1088
        %v1090 = vrot.slane %v1027, 5
        %v1091 = vrot.slane %v1090, 4
        %v1092 = vrot.slane %v175, 5
        %v1093 = vsel %vm1075, %v1091, %v1092
        %v1094 = vrot.slane %v1092, 4
        %v1095 = vrot.slane %v206, 5
        %v1096 = vsel %vm1075, %v1094, %v1095
        %v1097 = vrot.slane %v1028, 5
        %v1098 = vrot.slane %v1097, 4
        %v1099 = vrot.slane %v177, 5
        %v1100 = vsel %vm1075, %v1098, %v1099
        %v1101 = vrot.slane %v1099, 4
        %v1102 = vrot.slane %v207, 5
        %v1103 = vsel %vm1075, %v1101, %v1102
        %v1104 = vrot.slane %v1029, 5
        %v1105 = vrot.slane %v1104, 4
        %v1106 = vrot.slane %v179, 5
        %v1107 = vsel %vm1075, %v1105, %v1106
        %v1108 = vrot.slane %v1106, 4
        %v1109 = vrot.slane %v208, 5
        %v1110 = vsel %vm1075, %v1108, %v1109
        %v1111 = vrot.slane %v1030, 5
        %v1112 = vrot.slane %v1111, 4
        %v1113 = vrot.slane %v181, 5
        %v1114 = vsel %vm1075, %v1112, %v1113
        %v1115 = vrot.slane %v1113, 4
        %v1116 = vrot.slane %v209, 5
        %v1117 = vsel %vm1075, %v1115, %v1116
        %v1118 = vrot.slane %v1031, 5
        %v1119 = vrot.slane %v1118, 4
        %v1120 = vrot.slane %v183, 5
        %v1121 = vsel %vm1075, %v1119, %v1120
        %v1122 = vrot.slane %v1120, 4
        %v1123 = vrot.slane %v210, 5
        %v1124 = vsel %vm1075, %v1122, %v1123
        %v1125 = vrot.slane %v1032, 5
        %v1126 = vrot.slane %v1125, 4
        %v1127 = vrot.slane %v185, 5
        %v1128 = vsel %vm1075, %v1126, %v1127
        %v1129 = vrot.slane %v1127, 4
        %v1130 = vrot.slane %v211, 5
        %v1131 = vsel %vm1075, %v1129, %v1130
        %v1132 = vrot.slane %v1033, 5
        %v1133 = vrot.slane %v1132, 4
        %v1134 = vrot.slane %v187, 5
        %v1135 = vsel %vm1075, %v1133, %v1134
        %v1136 = vrot.slane %v1134, 4
        %v1137 = vrot.slane %v212, 5
        %v1138 = vsel %vm1075, %v1136, %v1137
        %v1139 = vrot.slane %v1034, 5
        %v1140 = vrot.slane %v1139, 4
        %v1141 = vrot.slane %v189, 5
        %v1142 = vsel %vm1075, %v1140, %v1141
        %v1143 = vrot.slane %v1141, 4
        %v1144 = vrot.slane %v213, 5
        %v1145 = vsel %vm1075, %v1143, %v1144
        %v1146 = vrot.slane %v1035, 5
        %v1147 = vrot.slane %v1146, 4
        %v1148 = vrot.slane %v191, 5
        %v1149 = vsel %vm1075, %v1147, %v1148
        %v1150 = vrot.slane %v1148, 4
        %v1151 = vrot.slane %v214, 5
        %v1152 = vsel %vm1075, %v1150, %v1151
        %v1153 = vrot.slane %v1036, 5
        %v1154 = vrot.slane %v1153, 4
        %v1155 = vrot.slane %v193, 5
        %v1156 = vsel %vm1075, %v1154, %v1155
        %v1157 = vrot.slane %v1155, 4
        %v1158 = vrot.slane %v215, 5
        %v1159 = vsel %vm1075, %v1157, %v1158
        %v1160 = vrot.slane %v1037, 5
        %v1161 = vrot.slane %v1160, 4
        %v1162 = vrot.slane %v195, 5
        %v1163 = vsel %vm1075, %v1161, %v1162
        %v1164 = vrot.slane %v1162, 4
        %v1165 = vrot.slane %v216, 5
        %v1166 = vsel %vm1075, %v1164, %v1165
        %v1167 = vrot.slane %v1038, 5
        %v1168 = vrot.slane %v1167, 4
        %v1169 = vrot.slane %v197, 5
        %v1170 = vsel %vm1075, %v1168, %v1169
        %v1171 = vrot.slane %v1169, 4
        %v1172 = vrot.slane %v217, 5
        %v1173 = vsel %vm1075, %v1171, %v1172
        %v1174 = vrot.slane %v1039, 5
        %v1175 = vrot.slane %v1174, 4
        %v1176 = vrot.slane %v199, 5
        %v1177 = vsel %vm1075, %v1175, %v1176
        %v1178 = vrot.slane %v1176, 4
        %v1179 = vrot.slane %v218, 5
        %v1180 = vsel %vm1075, %v1178, %v1179
        %v1181 = vrot.slane %v1040, 5
        %v1182 = vrot.slane %v1181, 4
        %v1183 = vrot.slane %v201, 5
        %v1184 = vsel %vm1075, %v1182, %v1183
        %v1185 = vrot.slane %v1183, 4
        %v1186 = vrot.slane %v219, 5
        %v1187 = vsel %vm1075, %v1185, %v1186
        %s1188 = scalar_lea.vmem %s1, 16
        %v1189 = vld [vmem:[%s1188] sm:$0xf]
        %v1190 = vld [vmem:[%s1188 + $0x4] sm:$0xf]
        %v1191 = vunpack.c.l.b16 %v1079
        %v1192 = vunpack.c.l.b16 %v1082
        %v1193 = vunpack.c.l.b16 %v1086
        %v1194 = vunpack.c.l.b16 %v1089
        %v1195 = vunpack.c.l.b16 %v1093
        %v1196 = vunpack.c.l.b16 %v1096
        %v1197 = vunpack.c.l.b16 %v1100
        %v1198 = vunpack.c.l.b16 %v1103
        %v1199 = vunpack.c.l.b16 %v1107
        %v1200 = vunpack.c.l.b16 %v1110
        %v1201 = vunpack.c.l.b16 %v1114
        %v1202 = vunpack.c.l.b16 %v1117
        %v1203 = vunpack.c.l.b16 %v1121
        %v1204 = vunpack.c.l.b16 %v1124
        %v1205 = vunpack.c.l.b16 %v1128
        %v1206 = vunpack.c.l.b16 %v1131
        %v1207 = vunpack.c.l.b16 %v1135
        %v1208 = vunpack.c.l.b16 %v1138
        %v1209 = vunpack.c.l.b16 %v1142
        %v1210 = vunpack.c.l.b16 %v1145
        %v1211 = vunpack.c.l.b16 %v1149
        %v1212 = vunpack.c.l.b16 %v1152
        %v1213 = vunpack.c.l.b16 %v1156
        %v1214 = vunpack.c.l.b16 %v1159
        %v1215 = vunpack.c.l.b16 %v1163
        %v1216 = vunpack.c.l.b16 %v1166
        %v1217 = vunpack.c.l.b16 %v1170
        %v1218 = vunpack.c.l.b16 %v1173
        %v1219 = vunpack.c.l.b16 %v1177
        %v1220 = vunpack.c.l.b16 %v1180
        %v1221 = vunpack.c.l.b16 %v1184
        %v1222 = vunpack.c.l.b16 %v1187
        %v1223 = vpack.c.b16 %v1192, %v1191
        %v1224 = vpack.c.b16 %v1194, %v1193
        %v1225 = vpack.c.b16 %v1196, %v1195
        %v1226 = vpack.c.b16 %v1198, %v1197
        %v1227 = vpack.c.b16 %v1200, %v1199
        %v1228 = vpack.c.b16 %v1202, %v1201
        %v1229 = vpack.c.b16 %v1204, %v1203
        %v1230 = vpack.c.b16 %v1206, %v1205
        %v1231 = vpack.c.b16 %v1208, %v1207
        %v1232 = vpack.c.b16 %v1210, %v1209
        %v1233 = vpack.c.b16 %v1212, %v1211
        %v1234 = vpack.c.b16 %v1214, %v1213
        %v1235 = vpack.c.b16 %v1216, %v1215
        %v1236 = vpack.c.b16 %v1218, %v1217
        %v1237 = vpack.c.b16 %v1220, %v1219
        %v1238 = vpack.c.b16 %v1222, %v1221
        %v1241 = vunpack.c.l.b16 %v1189
        %v1242 = vunpack.c.l.b16 %v1190
        %v1243 = vpack.c.b16 %v1242, %v1241
        %v1246 = vsel %vm664, %v1223, 0
        %v1249 = vsel %vm664, %v1224, 0
        %v1252 = vsel %vm664, %v1225, 0
        %v1255 = vsel %vm664, %v1226, 0
        %v1258 = vsel %vm664, %v1227, 0
        %v1261 = vsel %vm664, %v1228, 0
        %v1264 = vsel %vm664, %v1229, 0
        %v1267 = vsel %vm664, %v1230, 0
        %v1270 = vsel %vm664, %v1231, 0
        %v1273 = vsel %vm664, %v1232, 0
        %v1276 = vsel %vm664, %v1233, 0
        %v1279 = vsel %vm664, %v1234, 0
        %v1282 = vsel %vm664, %v1235, 0
        %v1285 = vsel %vm664, %v1236, 0
        %v1288 = vsel %vm664, %v1237, 0
        %v1291 = vsel %vm664, %v1238, 0
        %1293 = vmatpush.bf16.msra.mxu0 0
        %1294 = vmatpush.bf16.msra.mxu0 0
        %1295 = vmatpush.bf16.msra.mxu0 0
        %1296 = vmatpush.bf16.msra.mxu0 0
        %1297 = vmatpush.bf16.msra.mxu0 0
        %1298 = vmatpush.bf16.msra.mxu0 0
        %1299 = vmatpush.bf16.msra.mxu0 0
        %1300 = vmatpush.bf16.msra.mxu0 %v1243
        %1301 = vmatmul.bf16.gmra.mxu0 %v1246
        %v1302 = vpop.f32.mrf.mxu0
        %v1303 = vadd.f32 0.0, %v1302
        %v1304 = vpop.f32.mrf.mxu0
        %v1305 = vadd.f32 0.0, %v1304
        %1306 = vmatmul.bf16.gmra.mxu0 %v1249
        %v1307 = vpop.f32.mrf.mxu0
        %v1308 = vadd.f32 0.0, %v1307
        %v1309 = vpop.f32.mrf.mxu0
        %v1310 = vadd.f32 0.0, %v1309
        %1311 = vmatmul.bf16.gmra.mxu0 %v1252
        %v1312 = vpop.f32.mrf.mxu0
        %v1313 = vadd.f32 0.0, %v1312
        %v1314 = vpop.f32.mrf.mxu0
        %v1315 = vadd.f32 0.0, %v1314
        %1316 = vmatmul.bf16.gmra.mxu0 %v1255
        %v1317 = vpop.f32.mrf.mxu0
        %v1318 = vadd.f32 0.0, %v1317
        %v1319 = vpop.f32.mrf.mxu0
        %v1320 = vadd.f32 0.0, %v1319
        %1321 = vmatmul.bf16.gmra.mxu0 %v1258
        %v1322 = vpop.f32.mrf.mxu0
        %v1323 = vadd.f32 0.0, %v1322
        %v1324 = vpop.f32.mrf.mxu0
        %v1325 = vadd.f32 0.0, %v1324
        %1326 = vmatmul.bf16.gmra.mxu0 %v1261
        %v1327 = vpop.f32.mrf.mxu0
        %v1328 = vadd.f32 0.0, %v1327
        %v1329 = vpop.f32.mrf.mxu0
        %v1330 = vadd.f32 0.0, %v1329
        %1331 = vmatmul.bf16.gmra.mxu0 %v1264
        %v1332 = vpop.f32.mrf.mxu0
        %v1333 = vadd.f32 0.0, %v1332
        %v1334 = vpop.f32.mrf.mxu0
        %v1335 = vadd.f32 0.0, %v1334
        %1336 = vmatmul.bf16.gmra.mxu0 %v1267
        %v1337 = vpop.f32.mrf.mxu0
        %v1338 = vadd.f32 0.0, %v1337
        %v1339 = vpop.f32.mrf.mxu0
        %v1340 = vadd.f32 0.0, %v1339
        %1341 = vmatmul.bf16.gmra.mxu0 %v1270
        %v1342 = vpop.f32.mrf.mxu0
        %v1343 = vadd.f32 0.0, %v1342
        %v1344 = vpop.f32.mrf.mxu0
        %v1345 = vadd.f32 0.0, %v1344
        %1346 = vmatmul.bf16.gmra.mxu0 %v1273
        %v1347 = vpop.f32.mrf.mxu0
        %v1348 = vadd.f32 0.0, %v1347
        %v1349 = vpop.f32.mrf.mxu0
        %v1350 = vadd.f32 0.0, %v1349
        %1351 = vmatmul.bf16.gmra.mxu0 %v1276
        %v1352 = vpop.f32.mrf.mxu0
        %v1353 = vadd.f32 0.0, %v1352
        %v1354 = vpop.f32.mrf.mxu0
        %v1355 = vadd.f32 0.0, %v1354
        %1356 = vmatmul.bf16.gmra.mxu0 %v1279
        %v1357 = vpop.f32.mrf.mxu0
        %v1358 = vadd.f32 0.0, %v1357
        %v1359 = vpop.f32.mrf.mxu0
        %v1360 = vadd.f32 0.0, %v1359
        %1361 = vmatmul.bf16.gmra.mxu0 %v1282
        %v1362 = vpop.f32.mrf.mxu0
        %v1363 = vadd.f32 0.0, %v1362
        %v1364 = vpop.f32.mrf.mxu0
        %v1365 = vadd.f32 0.0, %v1364
        %1366 = vmatmul.bf16.gmra.mxu0 %v1285
        %v1367 = vpop.f32.mrf.mxu0
        %v1368 = vadd.f32 0.0, %v1367
        %v1369 = vpop.f32.mrf.mxu0
        %v1370 = vadd.f32 0.0, %v1369
        %1371 = vmatmul.bf16.gmra.mxu0 %v1288
        %v1372 = vpop.f32.mrf.mxu0
        %v1373 = vadd.f32 0.0, %v1372
        %v1374 = vpop.f32.mrf.mxu0
        %v1375 = vadd.f32 0.0, %v1374
        %1376 = vmatmul.bf16.gmra.mxu0 %v1291
        %v1377 = vpop.f32.mrf.mxu0
        %v1378 = vadd.f32 0.0, %v1377
        %v1379 = vpop.f32.mrf.mxu0
        %v1380 = vadd.f32 0.0, %v1379
        %1381 = vdwg.mxu0
        %v1382 = vadd.f32 %v946, %v1303
        %v1383 = vadd.f32 %v948, %v1305
        %v1384 = vadd.f32 %v951, %v1308
        %v1385 = vadd.f32 %v953, %v1310
        %v1386 = vadd.f32 %v956, %v1313
        %v1387 = vadd.f32 %v958, %v1315
        %v1388 = vadd.f32 %v961, %v1318
        %v1389 = vadd.f32 %v963, %v1320
        %v1390 = vadd.f32 %v966, %v1323
        %v1391 = vadd.f32 %v968, %v1325
        %v1392 = vadd.f32 %v971, %v1328
        %v1393 = vadd.f32 %v973, %v1330
        %v1394 = vadd.f32 %v976, %v1333
        %v1395 = vadd.f32 %v978, %v1335
        %v1396 = vadd.f32 %v981, %v1338
        %v1397 = vadd.f32 %v983, %v1340
        %v1398 = vadd.f32 %v986, %v1343
        %v1399 = vadd.f32 %v988, %v1345
        %v1400 = vadd.f32 %v991, %v1348
        %v1401 = vadd.f32 %v993, %v1350
        %v1402 = vadd.f32 %v996, %v1353
        %v1403 = vadd.f32 %v998, %v1355
        %v1404 = vadd.f32 %v1001, %v1358
        %v1405 = vadd.f32 %v1003, %v1360
        %v1406 = vadd.f32 %v1006, %v1363
        %v1407 = vadd.f32 %v1008, %v1365
        %v1408 = vadd.f32 %v1011, %v1368
        %v1409 = vadd.f32 %v1013, %v1370
        %v1410 = vadd.f32 %v1016, %v1373
        %v1411 = vadd.f32 %v1018, %v1375
        %v1412 = vadd.f32 %v1021, %v1378
        %v1413 = vadd.f32 %v1023, %v1380
        %s1414 = scalar_lea.vmem %s168, 12
        %v1415 = vld [vmem:[%s1414] sm:$0xf]
        %v1416 = vld [vmem:[%s1414 + $0x4] sm:$0xf]
        %v1417 = vld [vmem:[%s1414 + $0xc] sm:$0xf]
        %v1418 = vld [vmem:[%s1414 + $0x10] sm:$0xf]
        %v1419 = vld [vmem:[%s1414 + $0x18] sm:$0xf]
        %v1420 = vld [vmem:[%s1414 + $0x1c] sm:$0xf]
        %v1421 = vld [vmem:[%s1414 + $0x24] sm:$0xf]
        %v1422 = vld [vmem:[%s1414 + $0x28] sm:$0xf]
        %v1423 = vld [vmem:[%s1414 + $0x30] sm:$0xf]
        %v1424 = vld [vmem:[%s1414 + $0x34] sm:$0xf]
        %v1425 = vld [vmem:[%s1414 + $0x3c] sm:$0xf]
        %v1426 = vld [vmem:[%s1414 + $0x40] sm:$0xf]
        %v1427 = vld [vmem:[%s1414 + $0x48] sm:$0xf]
        %v1428 = vld [vmem:[%s1414 + $0x4c] sm:$0xf]
        %v1429 = vld [vmem:[%s1414 + $0x54] sm:$0xf]
        %v1430 = vld [vmem:[%s1414 + $0x58] sm:$0xf]
        %v1431 = vld [vmem:[%s1414 + $0x60] sm:$0xf]
        %v1432 = vld [vmem:[%s1414 + $0x64] sm:$0xf]
        %v1433 = vld [vmem:[%s1414 + $0x6c] sm:$0xf]
        %v1434 = vld [vmem:[%s1414 + $0x70] sm:$0xf]
        %v1435 = vld [vmem:[%s1414 + $0x78] sm:$0xf]
        %v1436 = vld [vmem:[%s1414 + $0x7c] sm:$0xf]
        %v1437 = vld [vmem:[%s1414 + $0x84] sm:$0xf]
        %v1438 = vld [vmem:[%s1414 + $0x88] sm:$0xf]
        %v1439 = vld [vmem:[%s1414 + $0x90] sm:$0xf]
        %v1440 = vld [vmem:[%s1414 + $0x94] sm:$0xf]
        %v1441 = vld [vmem:[%s1414 + $0x9c] sm:$0xf]
        %v1442 = vld [vmem:[%s1414 + $0xa0] sm:$0xf]
        %v1443 = vld [vmem:[%s1414 + $0xa8] sm:$0xf]
        %v1444 = vld [vmem:[%s1414 + $0xac] sm:$0xf]
        %v1445 = vld [vmem:[%s1414 + $0xb4] sm:$0xf]
        %v1446 = vld [vmem:[%s1414 + $0xb8] sm:$0xf]
        %s1447 = scalar_lea.vmem %s1, 24
        %v1448 = vld [vmem:[%s1447] sm:$0xf]
        %v1449 = vld [vmem:[%s1447 + $0x4] sm:$0xf]
        %v1482 = vunpack.c.l.b16 %v1415
        %v1483 = vunpack.c.l.b16 %v1416
        %v1484 = vunpack.c.l.b16 %v1417
        %v1485 = vunpack.c.l.b16 %v1418
        %v1486 = vunpack.c.l.b16 %v1419
        %v1487 = vunpack.c.l.b16 %v1420
        %v1488 = vunpack.c.l.b16 %v1421
        %v1489 = vunpack.c.l.b16 %v1422
        %v1490 = vunpack.c.l.b16 %v1423
        %v1491 = vunpack.c.l.b16 %v1424
        %v1492 = vunpack.c.l.b16 %v1425
        %v1493 = vunpack.c.l.b16 %v1426
        %v1494 = vunpack.c.l.b16 %v1427
        %v1495 = vunpack.c.l.b16 %v1428
        %v1496 = vunpack.c.l.b16 %v1429
        %v1497 = vunpack.c.l.b16 %v1430
        %v1498 = vunpack.c.l.b16 %v1431
        %v1499 = vunpack.c.l.b16 %v1432
        %v1500 = vunpack.c.l.b16 %v1433
        %v1501 = vunpack.c.l.b16 %v1434
        %v1502 = vunpack.c.l.b16 %v1435
        %v1503 = vunpack.c.l.b16 %v1436
        %v1504 = vunpack.c.l.b16 %v1437
        %v1505 = vunpack.c.l.b16 %v1438
        %v1506 = vunpack.c.l.b16 %v1439
        %v1507 = vunpack.c.l.b16 %v1440
        %v1508 = vunpack.c.l.b16 %v1441
        %v1509 = vunpack.c.l.b16 %v1442
        %v1510 = vunpack.c.l.b16 %v1443
        %v1511 = vunpack.c.l.b16 %v1444
        %v1512 = vunpack.c.l.b16 %v1445
        %v1513 = vunpack.c.l.b16 %v1446
        %v1514 = vpack.c.b16 %v1483, %v1482
        %v1515 = vpack.c.b16 %v1485, %v1484
        %v1516 = vpack.c.b16 %v1487, %v1486
        %v1517 = vpack.c.b16 %v1489, %v1488
        %v1518 = vpack.c.b16 %v1491, %v1490
        %v1519 = vpack.c.b16 %v1493, %v1492
        %v1520 = vpack.c.b16 %v1495, %v1494
        %v1521 = vpack.c.b16 %v1497, %v1496
        %v1522 = vpack.c.b16 %v1499, %v1498
        %v1523 = vpack.c.b16 %v1501, %v1500
        %v1524 = vpack.c.b16 %v1503, %v1502
        %v1525 = vpack.c.b16 %v1505, %v1504
        %v1526 = vpack.c.b16 %v1507, %v1506
        %v1527 = vpack.c.b16 %v1509, %v1508
        %v1528 = vpack.c.b16 %v1511, %v1510
        %v1529 = vpack.c.b16 %v1513, %v1512
        %v1532 = vunpack.c.l.b16 %v1448
        %v1533 = vunpack.c.l.b16 %v1449
        %v1534 = vpack.c.b16 %v1533, %v1532
        %v1537 = vsel %vm664, %v1514, 0
        %v1540 = vsel %vm664, %v1515, 0
        %v1543 = vsel %vm664, %v1516, 0
        %v1546 = vsel %vm664, %v1517, 0
        %v1549 = vsel %vm664, %v1518, 0
        %v1552 = vsel %vm664, %v1519, 0
        %v1555 = vsel %vm664, %v1520, 0
        %v1558 = vsel %vm664, %v1521, 0
        %v1561 = vsel %vm664, %v1522, 0
        %v1564 = vsel %vm664, %v1523, 0
        %v1567 = vsel %vm664, %v1524, 0
        %v1570 = vsel %vm664, %v1525, 0
        %v1573 = vsel %vm664, %v1526, 0
        %v1576 = vsel %vm664, %v1527, 0
        %v1579 = vsel %vm664, %v1528, 0
        %v1582 = vsel %vm664, %v1529, 0
        %1584 = vmatpush.bf16.msra.mxu0 0
        %1585 = vmatpush.bf16.msra.mxu0 0
        %1586 = vmatpush.bf16.msra.mxu0 0
        %1587 = vmatpush.bf16.msra.mxu0 0
        %1588 = vmatpush.bf16.msra.mxu0 0
        %1589 = vmatpush.bf16.msra.mxu0 0
        %1590 = vmatpush.bf16.msra.mxu0 0
        %1591 = vmatpush.bf16.msra.mxu0 %v1534
        %1592 = vmatmul.bf16.gmra.mxu0 %v1537
        %v1593 = vpop.f32.mrf.mxu0
        %v1594 = vadd.f32 0.0, %v1593
        %v1595 = vpop.f32.mrf.mxu0
        %v1596 = vadd.f32 0.0, %v1595
        %1597 = vmatmul.bf16.gmra.mxu0 %v1540
        %v1598 = vpop.f32.mrf.mxu0
        %v1599 = vadd.f32 0.0, %v1598
        %v1600 = vpop.f32.mrf.mxu0
        %v1601 = vadd.f32 0.0, %v1600
        %1602 = vmatmul.bf16.gmra.mxu0 %v1543
        %v1603 = vpop.f32.mrf.mxu0
        %v1604 = vadd.f32 0.0, %v1603
        %v1605 = vpop.f32.mrf.mxu0
        %v1606 = vadd.f32 0.0, %v1605
        %1607 = vmatmul.bf16.gmra.mxu0 %v1546
        %v1608 = vpop.f32.mrf.mxu0
        %v1609 = vadd.f32 0.0, %v1608
        %v1610 = vpop.f32.mrf.mxu0
        %v1611 = vadd.f32 0.0, %v1610
        %1612 = vmatmul.bf16.gmra.mxu0 %v1549
        %v1613 = vpop.f32.mrf.mxu0
        %v1614 = vadd.f32 0.0, %v1613
        %v1615 = vpop.f32.mrf.mxu0
        %v1616 = vadd.f32 0.0, %v1615
        %1617 = vmatmul.bf16.gmra.mxu0 %v1552
        %v1618 = vpop.f32.mrf.mxu0
        %v1619 = vadd.f32 0.0, %v1618
        %v1620 = vpop.f32.mrf.mxu0
        %v1621 = vadd.f32 0.0, %v1620
        %1622 = vmatmul.bf16.gmra.mxu0 %v1555
        %v1623 = vpop.f32.mrf.mxu0
        %v1624 = vadd.f32 0.0, %v1623
        %v1625 = vpop.f32.mrf.mxu0
        %v1626 = vadd.f32 0.0, %v1625
        %1627 = vmatmul.bf16.gmra.mxu0 %v1558
        %v1628 = vpop.f32.mrf.mxu0
        %v1629 = vadd.f32 0.0, %v1628
        %v1630 = vpop.f32.mrf.mxu0
        %v1631 = vadd.f32 0.0, %v1630
        %1632 = vmatmul.bf16.gmra.mxu0 %v1561
        %v1633 = vpop.f32.mrf.mxu0
        %v1634 = vadd.f32 0.0, %v1633
        %v1635 = vpop.f32.mrf.mxu0
        %v1636 = vadd.f32 0.0, %v1635
        %1637 = vmatmul.bf16.gmra.mxu0 %v1564
        %v1638 = vpop.f32.mrf.mxu0
        %v1639 = vadd.f32 0.0, %v1638
        %v1640 = vpop.f32.mrf.mxu0
        %v1641 = vadd.f32 0.0, %v1640
        %1642 = vmatmul.bf16.gmra.mxu0 %v1567
        %v1643 = vpop.f32.mrf.mxu0
        %v1644 = vadd.f32 0.0, %v1643
        %v1645 = vpop.f32.mrf.mxu0
        %v1646 = vadd.f32 0.0, %v1645
        %1647 = vmatmul.bf16.gmra.mxu0 %v1570
        %v1648 = vpop.f32.mrf.mxu0
        %v1649 = vadd.f32 0.0, %v1648
        %v1650 = vpop.f32.mrf.mxu0
        %v1651 = vadd.f32 0.0, %v1650
        %1652 = vmatmul.bf16.gmra.mxu0 %v1573
        %v1653 = vpop.f32.mrf.mxu0
        %v1654 = vadd.f32 0.0, %v1653
        %v1655 = vpop.f32.mrf.mxu0
        %v1656 = vadd.f32 0.0, %v1655
        %1657 = vmatmul.bf16.gmra.mxu0 %v1576
        %v1658 = vpop.f32.mrf.mxu0
        %v1659 = vadd.f32 0.0, %v1658
        %v1660 = vpop.f32.mrf.mxu0
        %v1661 = vadd.f32 0.0, %v1660
        %1662 = vmatmul.bf16.gmra.mxu0 %v1579
        %v1663 = vpop.f32.mrf.mxu0
        %v1664 = vadd.f32 0.0, %v1663
        %v1665 = vpop.f32.mrf.mxu0
        %v1666 = vadd.f32 0.0, %v1665
        %1667 = vmatmul.bf16.gmra.mxu0 %v1582
        %v1668 = vpop.f32.mrf.mxu0
        %v1669 = vadd.f32 0.0, %v1668
        %v1670 = vpop.f32.mrf.mxu0
        %v1671 = vadd.f32 0.0, %v1670
        %1672 = vdwg.mxu0
        %v1673 = vadd.f32 %v1382, %v1594
        %v1674 = vadd.f32 %v1383, %v1596
        %v1675 = vadd.f32 %v1384, %v1599
        %v1676 = vadd.f32 %v1385, %v1601
        %v1677 = vadd.f32 %v1386, %v1604
        %v1678 = vadd.f32 %v1387, %v1606
        %v1679 = vadd.f32 %v1388, %v1609
        %v1680 = vadd.f32 %v1389, %v1611
        %v1681 = vadd.f32 %v1390, %v1614
        %v1682 = vadd.f32 %v1391, %v1616
        %v1683 = vadd.f32 %v1392, %v1619
        %v1684 = vadd.f32 %v1393, %v1621
        %v1685 = vadd.f32 %v1394, %v1624
        %v1686 = vadd.f32 %v1395, %v1626
        %v1687 = vadd.f32 %v1396, %v1629
        %v1688 = vadd.f32 %v1397, %v1631
        %v1689 = vadd.f32 %v1398, %v1634
        %v1690 = vadd.f32 %v1399, %v1636
        %v1691 = vadd.f32 %v1400, %v1639
        %v1692 = vadd.f32 %v1401, %v1641
        %v1693 = vadd.f32 %v1402, %v1644
        %v1694 = vadd.f32 %v1403, %v1646
        %v1695 = vadd.f32 %v1404, %v1649
        %v1696 = vadd.f32 %v1405, %v1651
        %v1697 = vadd.f32 %v1406, %v1654
        %v1698 = vadd.f32 %v1407, %v1656
        %v1699 = vadd.f32 %v1408, %v1659
        %v1700 = vadd.f32 %v1409, %v1661
        %v1701 = vadd.f32 %v1410, %v1664
        %v1702 = vadd.f32 %v1411, %v1666
        %v1703 = vadd.f32 %v1412, %v1669
        %v1704 = vadd.f32 %v1413, %v1671
        %v1705 = vld [vmem:[%s1414] sm:$0xf]
        %v1706 = vld [vmem:[%s1414 + $0x4] sm:$0xf]
        %v1707 = vld [vmem:[%s1414 + $0x8] sm:$0x1]
        %v1708 = vld [vmem:[%s1414 + $0xc] sm:$0xf]
        %v1709 = vld [vmem:[%s1414 + $0x10] sm:$0xf]
        %v1710 = vld [vmem:[%s1414 + $0x14] sm:$0x1]
        %v1711 = vld [vmem:[%s1414 + $0x18] sm:$0xf]
        %v1712 = vld [vmem:[%s1414 + $0x1c] sm:$0xf]
        %v1713 = vld [vmem:[%s1414 + $0x20] sm:$0x1]
        %v1714 = vld [vmem:[%s1414 + $0x24] sm:$0xf]
        %v1715 = vld [vmem:[%s1414 + $0x28] sm:$0xf]
        %v1716 = vld [vmem:[%s1414 + $0x2c] sm:$0x1]
        %v1717 = vld [vmem:[%s1414 + $0x30] sm:$0xf]
        %v1718 = vld [vmem:[%s1414 + $0x34] sm:$0xf]
        %v1719 = vld [vmem:[%s1414 + $0x38] sm:$0x1]
        %v1720 = vld [vmem:[%s1414 + $0x3c] sm:$0xf]
        %v1721 = vld [vmem:[%s1414 + $0x40] sm:$0xf]
        %v1722 = vld [vmem:[%s1414 + $0x44] sm:$0x1]
        %v1723 = vld [vmem:[%s1414 + $0x48] sm:$0xf]
        %v1724 = vld [vmem:[%s1414 + $0x4c] sm:$0xf]
        %v1725 = vld [vmem:[%s1414 + $0x50] sm:$0x1]
        %v1726 = vld [vmem:[%s1414 + $0x54] sm:$0xf]
        %v1727 = vld [vmem:[%s1414 + $0x58] sm:$0xf]
        %v1728 = vld [vmem:[%s1414 + $0x5c] sm:$0x1]
        %v1729 = vld [vmem:[%s1414 + $0x60] sm:$0xf]
        %v1730 = vld [vmem:[%s1414 + $0x64] sm:$0xf]
        %v1731 = vld [vmem:[%s1414 + $0x68] sm:$0x1]
        %v1732 = vld [vmem:[%s1414 + $0x6c] sm:$0xf]
        %v1733 = vld [vmem:[%s1414 + $0x70] sm:$0xf]
        %v1734 = vld [vmem:[%s1414 + $0x74] sm:$0x1]
        %v1735 = vld [vmem:[%s1414 + $0x78] sm:$0xf]
        %v1736 = vld [vmem:[%s1414 + $0x7c] sm:$0xf]
        %v1737 = vld [vmem:[%s1414 + $0x80] sm:$0x1]
        %v1738 = vld [vmem:[%s1414 + $0x84] sm:$0xf]
        %v1739 = vld [vmem:[%s1414 + $0x88] sm:$0xf]
        %v1740 = vld [vmem:[%s1414 + $0x8c] sm:$0x1]
        %v1741 = vld [vmem:[%s1414 + $0x90] sm:$0xf]
        %v1742 = vld [vmem:[%s1414 + $0x94] sm:$0xf]
        %v1743 = vld [vmem:[%s1414 + $0x98] sm:$0x1]
        %v1744 = vld [vmem:[%s1414 + $0x9c] sm:$0xf]
        %v1745 = vld [vmem:[%s1414 + $0xa0] sm:$0xf]
        %v1746 = vld [vmem:[%s1414 + $0xa4] sm:$0x1]
        %v1747 = vld [vmem:[%s1414 + $0xa8] sm:$0xf]
        %v1748 = vld [vmem:[%s1414 + $0xac] sm:$0xf]
        %v1749 = vld [vmem:[%s1414 + $0xb0] sm:$0x1]
        %v1750 = vld [vmem:[%s1414 + $0xb4] sm:$0xf]
        %v1751 = vld [vmem:[%s1414 + $0xb8] sm:$0xf]
        %v1752 = vld [vmem:[%s1414 + $0xbc] sm:$0x1]
        %v1754 = vshrl.u32 %v1705, 16
        %v1756 = vrot.slane %v1754, 4
        %v1757 = vshll.u32 %v1705, 16
        %v1759 = vrot.slane %v1757, 5
        %v1760 = vor.u32 %v1756, %v1759
        %v1761 = vrot.slane %v1760, 4
        %v1763 = vshll.u32 %v1706, 16
        %v1765 = vrot.slane %v1763, 5
        %v1766 = vsel %vm222, %v1761, %v1765
        %v1767 = vshrl.u32 %v1706, 16
        %v1769 = vrot.slane %v1767, 4
        %v1770 = vor.u32 %v1769, %v1765
        %v1771 = vrot.slane %v1770, 4
        %v1773 = vshll.u32 %v1707, 16
        %v1775 = vrot.slane %v1773, 5
        %v1776 = vsel %vm222, %v1771, %v1775
        %v1778 = vshrl.u32 %v1708, 16
        %v1780 = vrot.slane %v1778, 4
        %v1781 = vshll.u32 %v1708, 16
        %v1783 = vrot.slane %v1781, 5
        %v1784 = vor.u32 %v1780, %v1783
        %v1785 = vrot.slane %v1784, 4
        %v1787 = vshll.u32 %v1709, 16
        %v1789 = vrot.slane %v1787, 5
        %v1790 = vsel %vm222, %v1785, %v1789
        %v1791 = vshrl.u32 %v1709, 16
        %v1793 = vrot.slane %v1791, 4
        %v1794 = vor.u32 %v1793, %v1789
        %v1795 = vrot.slane %v1794, 4
        %v1797 = vshll.u32 %v1710, 16
        %v1799 = vrot.slane %v1797, 5
        %v1800 = vsel %vm222, %v1795, %v1799
        %v1802 = vshrl.u32 %v1711, 16
        %v1804 = vrot.slane %v1802, 4
        %v1805 = vshll.u32 %v1711, 16
        %v1807 = vrot.slane %v1805, 5
        %v1808 = vor.u32 %v1804, %v1807
        %v1809 = vrot.slane %v1808, 4
        %v1811 = vshll.u32 %v1712, 16
        %v1813 = vrot.slane %v1811, 5
        %v1814 = vsel %vm222, %v1809, %v1813
        %v1815 = vshrl.u32 %v1712, 16
        %v1817 = vrot.slane %v1815, 4
        %v1818 = vor.u32 %v1817, %v1813
        %v1819 = vrot.slane %v1818, 4
        %v1821 = vshll.u32 %v1713, 16
        %v1823 = vrot.slane %v1821, 5
        %v1824 = vsel %vm222, %v1819, %v1823
        %v1826 = vshrl.u32 %v1714, 16
        %v1828 = vrot.slane %v1826, 4
        %v1829 = vshll.u32 %v1714, 16
        %v1831 = vrot.slane %v1829, 5
        %v1832 = vor.u32 %v1828, %v1831
        %v1833 = vrot.slane %v1832, 4
        %v1835 = vshll.u32 %v1715, 16
        %v1837 = vrot.slane %v1835, 5
        %v1838 = vsel %vm222, %v1833, %v1837
        %v1839 = vshrl.u32 %v1715, 16
        %v1841 = vrot.slane %v1839, 4
        %v1842 = vor.u32 %v1841, %v1837
        %v1843 = vrot.slane %v1842, 4
        %v1845 = vshll.u32 %v1716, 16
        %v1847 = vrot.slane %v1845, 5
        %v1848 = vsel %vm222, %v1843, %v1847
        %v1850 = vshrl.u32 %v1717, 16
        %v1852 = vrot.slane %v1850, 4
        %v1853 = vshll.u32 %v1717, 16
        %v1855 = vrot.slane %v1853, 5
        %v1856 = vor.u32 %v1852, %v1855
        %v1857 = vrot.slane %v1856, 4
        %v1859 = vshll.u32 %v1718, 16
        %v1861 = vrot.slane %v1859, 5
        %v1862 = vsel %vm222, %v1857, %v1861
        %v1863 = vshrl.u32 %v1718, 16
        %v1865 = vrot.slane %v1863, 4
        %v1866 = vor.u32 %v1865, %v1861
        %v1867 = vrot.slane %v1866, 4
        %v1869 = vshll.u32 %v1719, 16
        %v1871 = vrot.slane %v1869, 5
        %v1872 = vsel %vm222, %v1867, %v1871
        %v1874 = vshrl.u32 %v1720, 16
        %v1876 = vrot.slane %v1874, 4
        %v1877 = vshll.u32 %v1720, 16
        %v1879 = vrot.slane %v1877, 5
        %v1880 = vor.u32 %v1876, %v1879
        %v1881 = vrot.slane %v1880, 4
        %v1883 = vshll.u32 %v1721, 16
        %v1885 = vrot.slane %v1883, 5
        %v1886 = vsel %vm222, %v1881, %v1885
        %v1887 = vshrl.u32 %v1721, 16
        %v1889 = vrot.slane %v1887, 4
        %v1890 = vor.u32 %v1889, %v1885
        %v1891 = vrot.slane %v1890, 4
        %v1893 = vshll.u32 %v1722, 16
        %v1895 = vrot.slane %v1893, 5
        %v1896 = vsel %vm222, %v1891, %v1895
        %v1898 = vshrl.u32 %v1723, 16
        %v1900 = vrot.slane %v1898, 4
        %v1901 = vshll.u32 %v1723, 16
        %v1903 = vrot.slane %v1901, 5
        %v1904 = vor.u32 %v1900, %v1903
        %v1905 = vrot.slane %v1904, 4
        %v1907 = vshll.u32 %v1724, 16
        %v1909 = vrot.slane %v1907, 5
        %v1910 = vsel %vm222, %v1905, %v1909
        %v1911 = vshrl.u32 %v1724, 16
        %v1913 = vrot.slane %v1911, 4
        %v1914 = vor.u32 %v1913, %v1909
        %v1915 = vrot.slane %v1914, 4
        %v1917 = vshll.u32 %v1725, 16
        %v1919 = vrot.slane %v1917, 5
        %v1920 = vsel %vm222, %v1915, %v1919
        %v1922 = vshrl.u32 %v1726, 16
        %v1924 = vrot.slane %v1922, 4
        %v1925 = vshll.u32 %v1726, 16
        %v1927 = vrot.slane %v1925, 5
        %v1928 = vor.u32 %v1924, %v1927
        %v1929 = vrot.slane %v1928, 4
        %v1931 = vshll.u32 %v1727, 16
        %v1933 = vrot.slane %v1931, 5
        %v1934 = vsel %vm222, %v1929, %v1933
        %v1935 = vshrl.u32 %v1727, 16
        %v1937 = vrot.slane %v1935, 4
        %v1938 = vor.u32 %v1937, %v1933
        %v1939 = vrot.slane %v1938, 4
        %v1941 = vshll.u32 %v1728, 16
        %v1943 = vrot.slane %v1941, 5
        %v1944 = vsel %vm222, %v1939, %v1943
        %v1946 = vshrl.u32 %v1729, 16
        %v1948 = vrot.slane %v1946, 4
        %v1949 = vshll.u32 %v1729, 16
        %v1951 = vrot.slane %v1949, 5
        %v1952 = vor.u32 %v1948, %v1951
        %v1953 = vrot.slane %v1952, 4
        %v1955 = vshll.u32 %v1730, 16
        %v1957 = vrot.slane %v1955, 5
        %v1958 = vsel %vm222, %v1953, %v1957
        %v1959 = vshrl.u32 %v1730, 16
        %v1961 = vrot.slane %v1959, 4
        %v1962 = vor.u32 %v1961, %v1957
        %v1963 = vrot.slane %v1962, 4
        %v1965 = vshll.u32 %v1731, 16
        %v1967 = vrot.slane %v1965, 5
        %v1968 = vsel %vm222, %v1963, %v1967
        %v1970 = vshrl.u32 %v1732, 16
        %v1972 = vrot.slane %v1970, 4
        %v1973 = vshll.u32 %v1732, 16
        %v1975 = vrot.slane %v1973, 5
        %v1976 = vor.u32 %v1972, %v1975
        %v1977 = vrot.slane %v1976, 4
        %v1979 = vshll.u32 %v1733, 16
        %v1981 = vrot.slane %v1979, 5
        %v1982 = vsel %vm222, %v1977, %v1981
        %v1983 = vshrl.u32 %v1733, 16
        %v1985 = vrot.slane %v1983, 4
        %v1986 = vor.u32 %v1985, %v1981
        %v1987 = vrot.slane %v1986, 4
        %v1989 = vshll.u32 %v1734, 16
        %v1991 = vrot.slane %v1989, 5
        %v1992 = vsel %vm222, %v1987, %v1991
        %v1994 = vshrl.u32 %v1735, 16
        %v1996 = vrot.slane %v1994, 4
        %v1997 = vshll.u32 %v1735, 16
        %v1999 = vrot.slane %v1997, 5
        %v2000 = vor.u32 %v1996, %v1999
        %v2001 = vrot.slane %v2000, 4
        %v2003 = vshll.u32 %v1736, 16
        %v2005 = vrot.slane %v2003, 5
        %v2006 = vsel %vm222, %v2001, %v2005
        %v2007 = vshrl.u32 %v1736, 16
        %v2009 = vrot.slane %v2007, 4
        %v2010 = vor.u32 %v2009, %v2005
        %v2011 = vrot.slane %v2010, 4
        %v2013 = vshll.u32 %v1737, 16
        %v2015 = vrot.slane %v2013, 5
        %v2016 = vsel %vm222, %v2011, %v2015
        %v2018 = vshrl.u32 %v1738, 16
        %v2020 = vrot.slane %v2018, 4
        %v2021 = vshll.u32 %v1738, 16
        %v2023 = vrot.slane %v2021, 5
        %v2024 = vor.u32 %v2020, %v2023
        %v2025 = vrot.slane %v2024, 4
        %v2027 = vshll.u32 %v1739, 16
        %v2029 = vrot.slane %v2027, 5
        %v2030 = vsel %vm222, %v2025, %v2029
        %v2031 = vshrl.u32 %v1739, 16
        %v2033 = vrot.slane %v2031, 4
        %v2034 = vor.u32 %v2033, %v2029
        %v2035 = vrot.slane %v2034, 4
        %v2037 = vshll.u32 %v1740, 16
        %v2039 = vrot.slane %v2037, 5
        %v2040 = vsel %vm222, %v2035, %v2039
        %v2042 = vshrl.u32 %v1741, 16
        %v2044 = vrot.slane %v2042, 4
        %v2045 = vshll.u32 %v1741, 16
        %v2047 = vrot.slane %v2045, 5
        %v2048 = vor.u32 %v2044, %v2047
        %v2049 = vrot.slane %v2048, 4
        %v2051 = vshll.u32 %v1742, 16
        %v2053 = vrot.slane %v2051, 5
        %v2054 = vsel %vm222, %v2049, %v2053
        %v2055 = vshrl.u32 %v1742, 16
        %v2057 = vrot.slane %v2055, 4
        %v2058 = vor.u32 %v2057, %v2053
        %v2059 = vrot.slane %v2058, 4
        %v2061 = vshll.u32 %v1743, 16
        %v2063 = vrot.slane %v2061, 5
        %v2064 = vsel %vm222, %v2059, %v2063
        %v2066 = vshrl.u32 %v1744, 16
        %v2068 = vrot.slane %v2066, 4
        %v2069 = vshll.u32 %v1744, 16
        %v2071 = vrot.slane %v2069, 5
        %v2072 = vor.u32 %v2068, %v2071
        %v2073 = vrot.slane %v2072, 4
        %v2075 = vshll.u32 %v1745, 16
        %v2077 = vrot.slane %v2075, 5
        %v2078 = vsel %vm222, %v2073, %v2077
        %v2079 = vshrl.u32 %v1745, 16
        %v2081 = vrot.slane %v2079, 4
        %v2082 = vor.u32 %v2081, %v2077
        %v2083 = vrot.slane %v2082, 4
        %v2085 = vshll.u32 %v1746, 16
        %v2087 = vrot.slane %v2085, 5
        %v2088 = vsel %vm222, %v2083, %v2087
        %v2090 = vshrl.u32 %v1747, 16
        %v2092 = vrot.slane %v2090, 4
        %v2093 = vshll.u32 %v1747, 16
        %v2095 = vrot.slane %v2093, 5
        %v2096 = vor.u32 %v2092, %v2095
        %v2097 = vrot.slane %v2096, 4
        %v2099 = vshll.u32 %v1748, 16
        %v2101 = vrot.slane %v2099, 5
        %v2102 = vsel %vm222, %v2097, %v2101
        %v2103 = vshrl.u32 %v1748, 16
        %v2105 = vrot.slane %v2103, 4
        %v2106 = vor.u32 %v2105, %v2101
        %v2107 = vrot.slane %v2106, 4
        %v2109 = vshll.u32 %v1749, 16
        %v2111 = vrot.slane %v2109, 5
        %v2112 = vsel %vm222, %v2107, %v2111
        %v2114 = vshrl.u32 %v1750, 16
        %v2116 = vrot.slane %v2114, 4
        %v2117 = vshll.u32 %v1750, 16
        %v2119 = vrot.slane %v2117, 5
        %v2120 = vor.u32 %v2116, %v2119
        %v2121 = vrot.slane %v2120, 4
        %v2123 = vshll.u32 %v1751, 16
        %v2125 = vrot.slane %v2123, 5
        %v2126 = vsel %vm222, %v2121, %v2125
        %v2127 = vshrl.u32 %v1751, 16
        %v2129 = vrot.slane %v2127, 4
        %v2130 = vor.u32 %v2129, %v2125
        %v2131 = vrot.slane %v2130, 4
        %v2133 = vshll.u32 %v1752, 16
        %v2135 = vrot.slane %v2133, 5
        %v2136 = vsel %vm222, %v2131, %v2135
        %s2137 = scalar_lea.vmem %s1, 32
        %v2138 = vld [vmem:[%s2137] sm:$0xf]
        %v2139 = vld [vmem:[%s2137 + $0x4] sm:$0xf]
        %v2140 = vunpack.c.l.b16 %v1766
        %v2141 = vunpack.c.l.b16 %v1776
        %v2142 = vunpack.c.l.b16 %v1790
        %v2143 = vunpack.c.l.b16 %v1800
        %v2144 = vunpack.c.l.b16 %v1814
        %v2145 = vunpack.c.l.b16 %v1824
        %v2146 = vunpack.c.l.b16 %v1838
        %v2147 = vunpack.c.l.b16 %v1848
        %v2148 = vunpack.c.l.b16 %v1862
        %v2149 = vunpack.c.l.b16 %v1872
        %v2150 = vunpack.c.l.b16 %v1886
        %v2151 = vunpack.c.l.b16 %v1896
        %v2152 = vunpack.c.l.b16 %v1910
        %v2153 = vunpack.c.l.b16 %v1920
        %v2154 = vunpack.c.l.b16 %v1934
        %v2155 = vunpack.c.l.b16 %v1944
        %v2156 = vunpack.c.l.b16 %v1958
        %v2157 = vunpack.c.l.b16 %v1968
        %v2158 = vunpack.c.l.b16 %v1982
        %v2159 = vunpack.c.l.b16 %v1992
        %v2160 = vunpack.c.l.b16 %v2006
        %v2161 = vunpack.c.l.b16 %v2016
        %v2162 = vunpack.c.l.b16 %v2030
        %v2163 = vunpack.c.l.b16 %v2040
        %v2164 = vunpack.c.l.b16 %v2054
        %v2165 = vunpack.c.l.b16 %v2064
        %v2166 = vunpack.c.l.b16 %v2078
        %v2167 = vunpack.c.l.b16 %v2088
        %v2168 = vunpack.c.l.b16 %v2102
        %v2169 = vunpack.c.l.b16 %v2112
        %v2170 = vunpack.c.l.b16 %v2126
        %v2171 = vunpack.c.l.b16 %v2136
        %v2172 = vpack.c.b16 %v2141, %v2140
        %v2173 = vpack.c.b16 %v2143, %v2142
        %v2174 = vpack.c.b16 %v2145, %v2144
        %v2175 = vpack.c.b16 %v2147, %v2146
        %v2176 = vpack.c.b16 %v2149, %v2148
        %v2177 = vpack.c.b16 %v2151, %v2150
        %v2178 = vpack.c.b16 %v2153, %v2152
        %v2179 = vpack.c.b16 %v2155, %v2154
        %v2180 = vpack.c.b16 %v2157, %v2156
        %v2181 = vpack.c.b16 %v2159, %v2158
        %v2182 = vpack.c.b16 %v2161, %v2160
        %v2183 = vpack.c.b16 %v2163, %v2162
        %v2184 = vpack.c.b16 %v2165, %v2164
        %v2185 = vpack.c.b16 %v2167, %v2166
        %v2186 = vpack.c.b16 %v2169, %v2168
        %v2187 = vpack.c.b16 %v2171, %v2170
        %v2190 = vunpack.c.l.b16 %v2138
        %v2191 = vunpack.c.l.b16 %v2139
        %v2192 = vpack.c.b16 %v2191, %v2190
        %v2195 = vsel %vm664, %v2172, 0
        %v2198 = vsel %vm664, %v2173, 0
        %v2201 = vsel %vm664, %v2174, 0
        %v2204 = vsel %vm664, %v2175, 0
        %v2207 = vsel %vm664, %v2176, 0
        %v2210 = vsel %vm664, %v2177, 0
        %v2213 = vsel %vm664, %v2178, 0
        %v2216 = vsel %vm664, %v2179, 0
        %v2219 = vsel %vm664, %v2180, 0
        %v2222 = vsel %vm664, %v2181, 0
        %v2225 = vsel %vm664, %v2182, 0
        %v2228 = vsel %vm664, %v2183, 0
        %v2231 = vsel %vm664, %v2184, 0
        %v2234 = vsel %vm664, %v2185, 0
        %v2237 = vsel %vm664, %v2186, 0
        %v2240 = vsel %vm664, %v2187, 0
        %2242 = vmatpush.bf16.msra.mxu0 0
        %2243 = vmatpush.bf16.msra.mxu0 0
        %2244 = vmatpush.bf16.msra.mxu0 0
        %2245 = vmatpush.bf16.msra.mxu0 0
        %2246 = vmatpush.bf16.msra.mxu0 0
        %2247 = vmatpush.bf16.msra.mxu0 0
        %2248 = vmatpush.bf16.msra.mxu0 0
        %2249 = vmatpush.bf16.msra.mxu0 %v2192
        %2250 = vmatmul.bf16.gmra.mxu0 %v2195
        %v2251 = vpop.f32.mrf.mxu0
        %v2252 = vadd.f32 0.0, %v2251
        %v2253 = vpop.f32.mrf.mxu0
        %v2254 = vadd.f32 0.0, %v2253
        %2255 = vmatmul.bf16.gmra.mxu0 %v2198
        %v2256 = vpop.f32.mrf.mxu0
        %v2257 = vadd.f32 0.0, %v2256
        %v2258 = vpop.f32.mrf.mxu0
        %v2259 = vadd.f32 0.0, %v2258
        %2260 = vmatmul.bf16.gmra.mxu0 %v2201
        %v2261 = vpop.f32.mrf.mxu0
        %v2262 = vadd.f32 0.0, %v2261
        %v2263 = vpop.f32.mrf.mxu0
        %v2264 = vadd.f32 0.0, %v2263
        %2265 = vmatmul.bf16.gmra.mxu0 %v2204
        %v2266 = vpop.f32.mrf.mxu0
        %v2267 = vadd.f32 0.0, %v2266
        %v2268 = vpop.f32.mrf.mxu0
        %v2269 = vadd.f32 0.0, %v2268
        %2270 = vmatmul.bf16.gmra.mxu0 %v2207
        %v2271 = vpop.f32.mrf.mxu0
        %v2272 = vadd.f32 0.0, %v2271
        %v2273 = vpop.f32.mrf.mxu0
        %v2274 = vadd.f32 0.0, %v2273
        %2275 = vmatmul.bf16.gmra.mxu0 %v2210
        %v2276 = vpop.f32.mrf.mxu0
        %v2277 = vadd.f32 0.0, %v2276
        %v2278 = vpop.f32.mrf.mxu0
        %v2279 = vadd.f32 0.0, %v2278
        %2280 = vmatmul.bf16.gmra.mxu0 %v2213
        %v2281 = vpop.f32.mrf.mxu0
        %v2282 = vadd.f32 0.0, %v2281
        %v2283 = vpop.f32.mrf.mxu0
        %v2284 = vadd.f32 0.0, %v2283
        %2285 = vmatmul.bf16.gmra.mxu0 %v2216
        %v2286 = vpop.f32.mrf.mxu0
        %v2287 = vadd.f32 0.0, %v2286
        %v2288 = vpop.f32.mrf.mxu0
        %v2289 = vadd.f32 0.0, %v2288
        %2290 = vmatmul.bf16.gmra.mxu0 %v2219
        %v2291 = vpop.f32.mrf.mxu0
        %v2292 = vadd.f32 0.0, %v2291
        %v2293 = vpop.f32.mrf.mxu0
        %v2294 = vadd.f32 0.0, %v2293
        %2295 = vmatmul.bf16.gmra.mxu0 %v2222
        %v2296 = vpop.f32.mrf.mxu0
        %v2297 = vadd.f32 0.0, %v2296
        %v2298 = vpop.f32.mrf.mxu0
        %v2299 = vadd.f32 0.0, %v2298
        %2300 = vmatmul.bf16.gmra.mxu0 %v2225
        %v2301 = vpop.f32.mrf.mxu0
        %v2302 = vadd.f32 0.0, %v2301
        %v2303 = vpop.f32.mrf.mxu0
        %v2304 = vadd.f32 0.0, %v2303
        %2305 = vmatmul.bf16.gmra.mxu0 %v2228
        %v2306 = vpop.f32.mrf.mxu0
        %v2307 = vadd.f32 0.0, %v2306
        %v2308 = vpop.f32.mrf.mxu0
        %v2309 = vadd.f32 0.0, %v2308
        %2310 = vmatmul.bf16.gmra.mxu0 %v2231
        %v2311 = vpop.f32.mrf.mxu0
        %v2312 = vadd.f32 0.0, %v2311
        %v2313 = vpop.f32.mrf.mxu0
        %v2314 = vadd.f32 0.0, %v2313
        %2315 = vmatmul.bf16.gmra.mxu0 %v2234
        %v2316 = vpop.f32.mrf.mxu0
        %v2317 = vadd.f32 0.0, %v2316
        %v2318 = vpop.f32.mrf.mxu0
        %v2319 = vadd.f32 0.0, %v2318
        %2320 = vmatmul.bf16.gmra.mxu0 %v2237
        %v2321 = vpop.f32.mrf.mxu0
        %v2322 = vadd.f32 0.0, %v2321
        %v2323 = vpop.f32.mrf.mxu0
        %v2324 = vadd.f32 0.0, %v2323
        %2325 = vmatmul.bf16.gmra.mxu0 %v2240
        %v2326 = vpop.f32.mrf.mxu0
        %v2327 = vadd.f32 0.0, %v2326
        %v2328 = vpop.f32.mrf.mxu0
        %v2329 = vadd.f32 0.0, %v2328
        %2330 = vdwg.mxu0
        %v2331 = vadd.f32 %v1673, %v2252
        %v2332 = vadd.f32 %v1674, %v2254
        %v2333 = vadd.f32 %v1675, %v2257
        %v2334 = vadd.f32 %v1676, %v2259
        %v2335 = vadd.f32 %v1677, %v2262
        %v2336 = vadd.f32 %v1678, %v2264
        %v2337 = vadd.f32 %v1679, %v2267
        %v2338 = vadd.f32 %v1680, %v2269
        %v2339 = vadd.f32 %v1681, %v2272
        %v2340 = vadd.f32 %v1682, %v2274
        %v2341 = vadd.f32 %v1683, %v2277
        %v2342 = vadd.f32 %v1684, %v2279
        %v2343 = vadd.f32 %v1685, %v2282
        %v2344 = vadd.f32 %v1686, %v2284
        %v2345 = vadd.f32 %v1687, %v2287
        %v2346 = vadd.f32 %v1688, %v2289
        %v2347 = vadd.f32 %v1689, %v2292
        %v2348 = vadd.f32 %v1690, %v2294
        %v2349 = vadd.f32 %v1691, %v2297
        %v2350 = vadd.f32 %v1692, %v2299
        %v2351 = vadd.f32 %v1693, %v2302
        %v2352 = vadd.f32 %v1694, %v2304
        %v2353 = vadd.f32 %v1695, %v2307
        %v2354 = vadd.f32 %v1696, %v2309
        %v2355 = vadd.f32 %v1697, %v2312
        %v2356 = vadd.f32 %v1698, %v2314
        %v2357 = vadd.f32 %v1699, %v2317
        %v2358 = vadd.f32 %v1700, %v2319
        %v2359 = vadd.f32 %v1701, %v2322
        %v2360 = vadd.f32 %v1702, %v2324
        %v2361 = vadd.f32 %v1703, %v2327
        %v2362 = vadd.f32 %v1704, %v2329
        %v2363 = vld [vmem:[%s1414] sm:$0xe]
        %v2364 = vld [vmem:[%s1414 + $0xc] sm:$0xe]
        %v2365 = vld [vmem:[%s1414 + $0x18] sm:$0xe]
        %v2366 = vld [vmem:[%s1414 + $0x24] sm:$0xe]
        %v2367 = vld [vmem:[%s1414 + $0x30] sm:$0xe]
        %v2368 = vld [vmem:[%s1414 + $0x3c] sm:$0xe]
        %v2369 = vld [vmem:[%s1414 + $0x48] sm:$0xe]
        %v2370 = vld [vmem:[%s1414 + $0x54] sm:$0xe]
        %v2371 = vld [vmem:[%s1414 + $0x60] sm:$0xe]
        %v2372 = vld [vmem:[%s1414 + $0x6c] sm:$0xe]
        %v2373 = vld [vmem:[%s1414 + $0x78] sm:$0xe]
        %v2374 = vld [vmem:[%s1414 + $0x84] sm:$0xe]
        %v2375 = vld [vmem:[%s1414 + $0x90] sm:$0xe]
        %v2376 = vld [vmem:[%s1414 + $0x9c] sm:$0xe]
        %v2377 = vld [vmem:[%s1414 + $0xa8] sm:$0xe]
        %v2378 = vld [vmem:[%s1414 + $0xb4] sm:$0xe]
        %v2427 = vrot.slane %v2363, 5
        %v2428 = vrot.slane %v2427, 4
        %v2429 = vrot.slane %v1706, 5
        %v2430 = vsel %vm1075, %v2428, %v2429
        %v2431 = vrot.slane %v2429, 4
        %v2432 = vrot.slane %v1707, 5
        %v2433 = vsel %vm1075, %v2431, %v2432
        %v2434 = vrot.slane %v2364, 5
        %v2435 = vrot.slane %v2434, 4
        %v2436 = vrot.slane %v1709, 5
        %v2437 = vsel %vm1075, %v2435, %v2436
        %v2438 = vrot.slane %v2436, 4
        %v2439 = vrot.slane %v1710, 5
        %v2440 = vsel %vm1075, %v2438, %v2439
        %v2441 = vrot.slane %v2365, 5
        %v2442 = vrot.slane %v2441, 4
        %v2443 = vrot.slane %v1712, 5
        %v2444 = vsel %vm1075, %v2442, %v2443
        %v2445 = vrot.slane %v2443, 4
        %v2446 = vrot.slane %v1713, 5
        %v2447 = vsel %vm1075, %v2445, %v2446
        %v2448 = vrot.slane %v2366, 5
        %v2449 = vrot.slane %v2448, 4
        %v2450 = vrot.slane %v1715, 5
        %v2451 = vsel %vm1075, %v2449, %v2450
        %v2452 = vrot.slane %v2450, 4
        %v2453 = vrot.slane %v1716, 5
        %v2454 = vsel %vm1075, %v2452, %v2453
        %v2455 = vrot.slane %v2367, 5
        %v2456 = vrot.slane %v2455, 4
        %v2457 = vrot.slane %v1718, 5
        %v2458 = vsel %vm1075, %v2456, %v2457
        %v2459 = vrot.slane %v2457, 4
        %v2460 = vrot.slane %v1719, 5
        %v2461 = vsel %vm1075, %v2459, %v2460
        %v2462 = vrot.slane %v2368, 5
        %v2463 = vrot.slane %v2462, 4
        %v2464 = vrot.slane %v1721, 5
        %v2465 = vsel %vm1075, %v2463, %v2464
        %v2466 = vrot.slane %v2464, 4
        %v2467 = vrot.slane %v1722, 5
        %v2468 = vsel %vm1075, %v2466, %v2467
        %v2469 = vrot.slane %v2369, 5
        %v2470 = vrot.slane %v2469, 4
        %v2471 = vrot.slane %v1724, 5
        %v2472 = vsel %vm1075, %v2470, %v2471
        %v2473 = vrot.slane %v2471, 4
        %v2474 = vrot.slane %v1725, 5
        %v2475 = vsel %vm1075, %v2473, %v2474
        %v2476 = vrot.slane %v2370, 5
        %v2477 = vrot.slane %v2476, 4
        %v2478 = vrot.slane %v1727, 5
        %v2479 = vsel %vm1075, %v2477, %v2478
        %v2480 = vrot.slane %v2478, 4
        %v2481 = vrot.slane %v1728, 5
        %v2482 = vsel %vm1075, %v2480, %v2481
        %v2483 = vrot.slane %v2371, 5
        %v2484 = vrot.slane %v2483, 4
        %v2485 = vrot.slane %v1730, 5
        %v2486 = vsel %vm1075, %v2484, %v2485
        %v2487 = vrot.slane %v2485, 4
        %v2488 = vrot.slane %v1731, 5
        %v2489 = vsel %vm1075, %v2487, %v2488
        %v2490 = vrot.slane %v2372, 5
        %v2491 = vrot.slane %v2490, 4
        %v2492 = vrot.slane %v1733, 5
        %v2493 = vsel %vm1075, %v2491, %v2492
        %v2494 = vrot.slane %v2492, 4
        %v2495 = vrot.slane %v1734, 5
        %v2496 = vsel %vm1075, %v2494, %v2495
        %v2497 = vrot.slane %v2373, 5
        %v2498 = vrot.slane %v2497, 4
        %v2499 = vrot.slane %v1736, 5
        %v2500 = vsel %vm1075, %v2498, %v2499
        %v2501 = vrot.slane %v2499, 4
        %v2502 = vrot.slane %v1737, 5
        %v2503 = vsel %vm1075, %v2501, %v2502
        %v2504 = vrot.slane %v2374, 5
        %v2505 = vrot.slane %v2504, 4
        %v2506 = vrot.slane %v1739, 5
        %v2507 = vsel %vm1075, %v2505, %v2506
        %v2508 = vrot.slane %v2506, 4
        %v2509 = vrot.slane %v1740, 5
        %v2510 = vsel %vm1075, %v2508, %v2509
        %v2511 = vrot.slane %v2375, 5
        %v2512 = vrot.slane %v2511, 4
        %v2513 = vrot.slane %v1742, 5
        %v2514 = vsel %vm1075, %v2512, %v2513
        %v2515 = vrot.slane %v2513, 4
        %v2516 = vrot.slane %v1743, 5
        %v2517 = vsel %vm1075, %v2515, %v2516
        %v2518 = vrot.slane %v2376, 5
        %v2519 = vrot.slane %v2518, 4
        %v2520 = vrot.slane %v1745, 5
        %v2521 = vsel %vm1075, %v2519, %v2520
        %v2522 = vrot.slane %v2520, 4
        %v2523 = vrot.slane %v1746, 5
        %v2524 = vsel %vm1075, %v2522, %v2523
        %v2525 = vrot.slane %v2377, 5
        %v2526 = vrot.slane %v2525, 4
        %v2527 = vrot.slane %v1748, 5
        %v2528 = vsel %vm1075, %v2526, %v2527
        %v2529 = vrot.slane %v2527, 4
        %v2530 = vrot.slane %v1749, 5
        %v2531 = vsel %vm1075, %v2529, %v2530
        %v2532 = vrot.slane %v2378, 5
        %v2533 = vrot.slane %v2532, 4
        %v2534 = vrot.slane %v1751, 5
        %v2535 = vsel %vm1075, %v2533, %v2534
        %v2536 = vrot.slane %v2534, 4
        %v2537 = vrot.slane %v1752, 5
        %v2538 = vsel %vm1075, %v2536, %v2537
        %s2539 = scalar_lea.vmem %s1, 40
        %v2540 = vld [vmem:[%s2539] sm:$0xf]
        %v2541 = vld [vmem:[%s2539 + $0x4] sm:$0xf]
        %v2542 = vunpack.c.l.b16 %v2430
        %v2543 = vunpack.c.l.b16 %v2433
        %v2544 = vunpack.c.l.b16 %v2437
        %v2545 = vunpack.c.l.b16 %v2440
        %v2546 = vunpack.c.l.b16 %v2444
        %v2547 = vunpack.c.l.b16 %v2447
        %v2548 = vunpack.c.l.b16 %v2451
        %v2549 = vunpack.c.l.b16 %v2454
        %v2550 = vunpack.c.l.b16 %v2458
        %v2551 = vunpack.c.l.b16 %v2461
        %v2552 = vunpack.c.l.b16 %v2465
        %v2553 = vunpack.c.l.b16 %v2468
        %v2554 = vunpack.c.l.b16 %v2472
        %v2555 = vunpack.c.l.b16 %v2475
        %v2556 = vunpack.c.l.b16 %v2479
        %v2557 = vunpack.c.l.b16 %v2482
        %v2558 = vunpack.c.l.b16 %v2486
        %v2559 = vunpack.c.l.b16 %v2489
        %v2560 = vunpack.c.l.b16 %v2493
        %v2561 = vunpack.c.l.b16 %v2496
        %v2562 = vunpack.c.l.b16 %v2500
        %v2563 = vunpack.c.l.b16 %v2503
        %v2564 = vunpack.c.l.b16 %v2507
        %v2565 = vunpack.c.l.b16 %v2510
        %v2566 = vunpack.c.l.b16 %v2514
        %v2567 = vunpack.c.l.b16 %v2517
        %v2568 = vunpack.c.l.b16 %v2521
        %v2569 = vunpack.c.l.b16 %v2524
        %v2570 = vunpack.c.l.b16 %v2528
        %v2571 = vunpack.c.l.b16 %v2531
        %v2572 = vunpack.c.l.b16 %v2535
        %v2573 = vunpack.c.l.b16 %v2538
        %v2574 = vpack.c.b16 %v2543, %v2542
        %v2575 = vpack.c.b16 %v2545, %v2544
        %v2576 = vpack.c.b16 %v2547, %v2546
        %v2577 = vpack.c.b16 %v2549, %v2548
        %v2578 = vpack.c.b16 %v2551, %v2550
        %v2579 = vpack.c.b16 %v2553, %v2552
        %v2580 = vpack.c.b16 %v2555, %v2554
        %v2581 = vpack.c.b16 %v2557, %v2556
        %v2582 = vpack.c.b16 %v2559, %v2558
        %v2583 = vpack.c.b16 %v2561, %v2560
        %v2584 = vpack.c.b16 %v2563, %v2562
        %v2585 = vpack.c.b16 %v2565, %v2564
        %v2586 = vpack.c.b16 %v2567, %v2566
        %v2587 = vpack.c.b16 %v2569, %v2568
        %v2588 = vpack.c.b16 %v2571, %v2570
        %v2589 = vpack.c.b16 %v2573, %v2572
        %v2592 = vunpack.c.l.b16 %v2540
        %v2593 = vunpack.c.l.b16 %v2541
        %v2594 = vpack.c.b16 %v2593, %v2592
        %v2597 = vsel %vm664, %v2574, 0
        %v2600 = vsel %vm664, %v2575, 0
        %v2603 = vsel %vm664, %v2576, 0
        %v2606 = vsel %vm664, %v2577, 0
        %v2609 = vsel %vm664, %v2578, 0
        %v2612 = vsel %vm664, %v2579, 0
        %v2615 = vsel %vm664, %v2580, 0
        %v2618 = vsel %vm664, %v2581, 0
        %v2621 = vsel %vm664, %v2582, 0
        %v2624 = vsel %vm664, %v2583, 0
        %v2627 = vsel %vm664, %v2584, 0
        %v2630 = vsel %vm664, %v2585, 0
        %v2633 = vsel %vm664, %v2586, 0
        %v2636 = vsel %vm664, %v2587, 0
        %v2639 = vsel %vm664, %v2588, 0
        %v2642 = vsel %vm664, %v2589, 0
        %2644 = vmatpush.bf16.msra.mxu0 0
        %2645 = vmatpush.bf16.msra.mxu0 0
        %2646 = vmatpush.bf16.msra.mxu0 0
        %2647 = vmatpush.bf16.msra.mxu0 0
        %2648 = vmatpush.bf16.msra.mxu0 0
        %2649 = vmatpush.bf16.msra.mxu0 0
        %2650 = vmatpush.bf16.msra.mxu0 0
        %2651 = vmatpush.bf16.msra.mxu0 %v2594
        %2652 = vmatmul.bf16.gmra.mxu0 %v2597
        %v2653 = vpop.f32.mrf.mxu0
        %v2654 = vadd.f32 0.0, %v2653
        %v2655 = vpop.f32.mrf.mxu0
        %v2656 = vadd.f32 0.0, %v2655
        %2657 = vmatmul.bf16.gmra.mxu0 %v2600
        %v2658 = vpop.f32.mrf.mxu0
        %v2659 = vadd.f32 0.0, %v2658
        %v2660 = vpop.f32.mrf.mxu0
        %v2661 = vadd.f32 0.0, %v2660
        %2662 = vmatmul.bf16.gmra.mxu0 %v2603
        %v2663 = vpop.f32.mrf.mxu0
        %v2664 = vadd.f32 0.0, %v2663
        %v2665 = vpop.f32.mrf.mxu0
        %v2666 = vadd.f32 0.0, %v2665
        %2667 = vmatmul.bf16.gmra.mxu0 %v2606
        %v2668 = vpop.f32.mrf.mxu0
        %v2669 = vadd.f32 0.0, %v2668
        %v2670 = vpop.f32.mrf.mxu0
        %v2671 = vadd.f32 0.0, %v2670
        %2672 = vmatmul.bf16.gmra.mxu0 %v2609
        %v2673 = vpop.f32.mrf.mxu0
        %v2674 = vadd.f32 0.0, %v2673
        %v2675 = vpop.f32.mrf.mxu0
        %v2676 = vadd.f32 0.0, %v2675
        %2677 = vmatmul.bf16.gmra.mxu0 %v2612
        %v2678 = vpop.f32.mrf.mxu0
        %v2679 = vadd.f32 0.0, %v2678
        %v2680 = vpop.f32.mrf.mxu0
        %v2681 = vadd.f32 0.0, %v2680
        %2682 = vmatmul.bf16.gmra.mxu0 %v2615
        %v2683 = vpop.f32.mrf.mxu0
        %v2684 = vadd.f32 0.0, %v2683
        %v2685 = vpop.f32.mrf.mxu0
        %v2686 = vadd.f32 0.0, %v2685
        %2687 = vmatmul.bf16.gmra.mxu0 %v2618
        %v2688 = vpop.f32.mrf.mxu0
        %v2689 = vadd.f32 0.0, %v2688
        %v2690 = vpop.f32.mrf.mxu0
        %v2691 = vadd.f32 0.0, %v2690
        %2692 = vmatmul.bf16.gmra.mxu0 %v2621
        %v2693 = vpop.f32.mrf.mxu0
        %v2694 = vadd.f32 0.0, %v2693
        %v2695 = vpop.f32.mrf.mxu0
        %v2696 = vadd.f32 0.0, %v2695
        %2697 = vmatmul.bf16.gmra.mxu0 %v2624
        %v2698 = vpop.f32.mrf.mxu0
        %v2699 = vadd.f32 0.0, %v2698
        %v2700 = vpop.f32.mrf.mxu0
        %v2701 = vadd.f32 0.0, %v2700
        %2702 = vmatmul.bf16.gmra.mxu0 %v2627
        %v2703 = vpop.f32.mrf.mxu0
        %v2704 = vadd.f32 0.0, %v2703
        %v2705 = vpop.f32.mrf.mxu0
        %v2706 = vadd.f32 0.0, %v2705
        %2707 = vmatmul.bf16.gmra.mxu0 %v2630
        %v2708 = vpop.f32.mrf.mxu0
        %v2709 = vadd.f32 0.0, %v2708
        %v2710 = vpop.f32.mrf.mxu0
        %v2711 = vadd.f32 0.0, %v2710
        %2712 = vmatmul.bf16.gmra.mxu0 %v2633
        %v2713 = vpop.f32.mrf.mxu0
        %v2714 = vadd.f32 0.0, %v2713
        %v2715 = vpop.f32.mrf.mxu0
        %v2716 = vadd.f32 0.0, %v2715
        %2717 = vmatmul.bf16.gmra.mxu0 %v2636
        %v2718 = vpop.f32.mrf.mxu0
        %v2719 = vadd.f32 0.0, %v2718
        %v2720 = vpop.f32.mrf.mxu0
        %v2721 = vadd.f32 0.0, %v2720
        %2722 = vmatmul.bf16.gmra.mxu0 %v2639
        %v2723 = vpop.f32.mrf.mxu0
        %v2724 = vadd.f32 0.0, %v2723
        %v2725 = vpop.f32.mrf.mxu0
        %v2726 = vadd.f32 0.0, %v2725
        %2727 = vmatmul.bf16.gmra.mxu0 %v2642
        %v2728 = vpop.f32.mrf.mxu0
        %v2729 = vadd.f32 0.0, %v2728
        %v2730 = vpop.f32.mrf.mxu0
        %v2731 = vadd.f32 0.0, %v2730
        %2732 = vdwg.mxu0
        %v2733 = vadd.f32 %v2331, %v2654
        %v2734 = vadd.f32 %v2332, %v2656
        %v2735 = vadd.f32 %v2333, %v2659
        %v2736 = vadd.f32 %v2334, %v2661
        %v2737 = vadd.f32 %v2335, %v2664
        %v2738 = vadd.f32 %v2336, %v2666
        %v2739 = vadd.f32 %v2337, %v2669
        %v2740 = vadd.f32 %v2338, %v2671
        %v2741 = vadd.f32 %v2339, %v2674
        %v2742 = vadd.f32 %v2340, %v2676
        %v2743 = vadd.f32 %v2341, %v2679
        %v2744 = vadd.f32 %v2342, %v2681
        %v2745 = vadd.f32 %v2343, %v2684
        %v2746 = vadd.f32 %v2344, %v2686
        %v2747 = vadd.f32 %v2345, %v2689
        %v2748 = vadd.f32 %v2346, %v2691
        %v2749 = vadd.f32 %v2347, %v2694
        %v2750 = vadd.f32 %v2348, %v2696
        %v2751 = vadd.f32 %v2349, %v2699
        %v2752 = vadd.f32 %v2350, %v2701
        %v2753 = vadd.f32 %v2351, %v2704
        %v2754 = vadd.f32 %v2352, %v2706
        %v2755 = vadd.f32 %v2353, %v2709
        %v2756 = vadd.f32 %v2354, %v2711
        %v2757 = vadd.f32 %v2355, %v2714
        %v2758 = vadd.f32 %v2356, %v2716
        %v2759 = vadd.f32 %v2357, %v2719
        %v2760 = vadd.f32 %v2358, %v2721
        %v2761 = vadd.f32 %v2359, %v2724
        %v2762 = vadd.f32 %v2360, %v2726
        %v2763 = vadd.f32 %v2361, %v2729
        %v2764 = vadd.f32 %v2362, %v2731
        %s2765 = scalar_lea.vmem %s168, 24
        %v2766 = vld [vmem:[%s2765] sm:$0xf]
        %v2767 = vld [vmem:[%s2765 + $0x4] sm:$0xf]
        %v2768 = vld [vmem:[%s2765 + $0xc] sm:$0xf]
        %v2769 = vld [vmem:[%s2765 + $0x10] sm:$0xf]
        %v2770 = vld [vmem:[%s2765 + $0x18] sm:$0xf]
        %v2771 = vld [vmem:[%s2765 + $0x1c] sm:$0xf]
        %v2772 = vld [vmem:[%s2765 + $0x24] sm:$0xf]
        %v2773 = vld [vmem:[%s2765 + $0x28] sm:$0xf]
        %v2774 = vld [vmem:[%s2765 + $0x30] sm:$0xf]
        %v2775 = vld [vmem:[%s2765 + $0x34] sm:$0xf]
        %v2776 = vld [vmem:[%s2765 + $0x3c] sm:$0xf]
        %v2777 = vld [vmem:[%s2765 + $0x40] sm:$0xf]
        %v2778 = vld [vmem:[%s2765 + $0x48] sm:$0xf]
        %v2779 = vld [vmem:[%s2765 + $0x4c] sm:$0xf]
        %v2780 = vld [vmem:[%s2765 + $0x54] sm:$0xf]
        %v2781 = vld [vmem:[%s2765 + $0x58] sm:$0xf]
        %v2782 = vld [vmem:[%s2765 + $0x60] sm:$0xf]
        %v2783 = vld [vmem:[%s2765 + $0x64] sm:$0xf]
        %v2784 = vld [vmem:[%s2765 + $0x6c] sm:$0xf]
        %v2785 = vld [vmem:[%s2765 + $0x70] sm:$0xf]
        %v2786 = vld [vmem:[%s2765 + $0x78] sm:$0xf]
        %v2787 = vld [vmem:[%s2765 + $0x7c] sm:$0xf]
        %v2788 = vld [vmem:[%s2765 + $0x84] sm:$0xf]
        %v2789 = vld [vmem:[%s2765 + $0x88] sm:$0xf]
        %v2790 = vld [vmem:[%s2765 + $0x90] sm:$0xf]
        %v2791 = vld [vmem:[%s2765 + $0x94] sm:$0xf]
        %v2792 = vld [vmem:[%s2765 + $0x9c] sm:$0xf]
        %v2793 = vld [vmem:[%s2765 + $0xa0] sm:$0xf]
        %v2794 = vld [vmem:[%s2765 + $0xa8] sm:$0xf]
        %v2795 = vld [vmem:[%s2765 + $0xac] sm:$0xf]
        %v2796 = vld [vmem:[%s2765 + $0xb4] sm:$0xf]
        %v2797 = vld [vmem:[%s2765 + $0xb8] sm:$0xf]
        %s2798 = scalar_lea.vmem %s1, 48
        %v2799 = vld [vmem:[%s2798] sm:$0xf]
        %v2800 = vld [vmem:[%s2798 + $0x4] sm:$0xf]
        %v2833 = vunpack.c.l.b16 %v2766
        %v2834 = vunpack.c.l.b16 %v2767
        %v2835 = vunpack.c.l.b16 %v2768
        %v2836 = vunpack.c.l.b16 %v2769
        %v2837 = vunpack.c.l.b16 %v2770
        %v2838 = vunpack.c.l.b16 %v2771
        %v2839 = vunpack.c.l.b16 %v2772
        %v2840 = vunpack.c.l.b16 %v2773
        %v2841 = vunpack.c.l.b16 %v2774
        %v2842 = vunpack.c.l.b16 %v2775
        %v2843 = vunpack.c.l.b16 %v2776
        %v2844 = vunpack.c.l.b16 %v2777
        %v2845 = vunpack.c.l.b16 %v2778
        %v2846 = vunpack.c.l.b16 %v2779
        %v2847 = vunpack.c.l.b16 %v2780
        %v2848 = vunpack.c.l.b16 %v2781
        %v2849 = vunpack.c.l.b16 %v2782
        %v2850 = vunpack.c.l.b16 %v2783
        %v2851 = vunpack.c.l.b16 %v2784
        %v2852 = vunpack.c.l.b16 %v2785
        %v2853 = vunpack.c.l.b16 %v2786
        %v2854 = vunpack.c.l.b16 %v2787
        %v2855 = vunpack.c.l.b16 %v2788
        %v2856 = vunpack.c.l.b16 %v2789
        %v2857 = vunpack.c.l.b16 %v2790
        %v2858 = vunpack.c.l.b16 %v2791
        %v2859 = vunpack.c.l.b16 %v2792
        %v2860 = vunpack.c.l.b16 %v2793
        %v2861 = vunpack.c.l.b16 %v2794
        %v2862 = vunpack.c.l.b16 %v2795
        %v2863 = vunpack.c.l.b16 %v2796
        %v2864 = vunpack.c.l.b16 %v2797
        %v2865 = vpack.c.b16 %v2834, %v2833
        %v2866 = vpack.c.b16 %v2836, %v2835
        %v2867 = vpack.c.b16 %v2838, %v2837
        %v2868 = vpack.c.b16 %v2840, %v2839
        %v2869 = vpack.c.b16 %v2842, %v2841
        %v2870 = vpack.c.b16 %v2844, %v2843
        %v2871 = vpack.c.b16 %v2846, %v2845
        %v2872 = vpack.c.b16 %v2848, %v2847
        %v2873 = vpack.c.b16 %v2850, %v2849
        %v2874 = vpack.c.b16 %v2852, %v2851
        %v2875 = vpack.c.b16 %v2854, %v2853
        %v2876 = vpack.c.b16 %v2856, %v2855
        %v2877 = vpack.c.b16 %v2858, %v2857
        %v2878 = vpack.c.b16 %v2860, %v2859
        %v2879 = vpack.c.b16 %v2862, %v2861
        %v2880 = vpack.c.b16 %v2864, %v2863
        %v2883 = vunpack.c.l.b16 %v2799
        %v2884 = vunpack.c.l.b16 %v2800
        %v2885 = vpack.c.b16 %v2884, %v2883
        %v2888 = vsel %vm664, %v2865, 0
        %v2891 = vsel %vm664, %v2866, 0
        %v2894 = vsel %vm664, %v2867, 0
        %v2897 = vsel %vm664, %v2868, 0
        %v2900 = vsel %vm664, %v2869, 0
        %v2903 = vsel %vm664, %v2870, 0
        %v2906 = vsel %vm664, %v2871, 0
        %v2909 = vsel %vm664, %v2872, 0
        %v2912 = vsel %vm664, %v2873, 0
        %v2915 = vsel %vm664, %v2874, 0
        %v2918 = vsel %vm664, %v2875, 0
        %v2921 = vsel %vm664, %v2876, 0
        %v2924 = vsel %vm664, %v2877, 0
        %v2927 = vsel %vm664, %v2878, 0
        %v2930 = vsel %vm664, %v2879, 0
        %v2933 = vsel %vm664, %v2880, 0
        %2935 = vmatpush.bf16.msra.mxu0 0
        %2936 = vmatpush.bf16.msra.mxu0 0
        %2937 = vmatpush.bf16.msra.mxu0 0
        %2938 = vmatpush.bf16.msra.mxu0 0
        %2939 = vmatpush.bf16.msra.mxu0 0
        %2940 = vmatpush.bf16.msra.mxu0 0
        %2941 = vmatpush.bf16.msra.mxu0 0
        %2942 = vmatpush.bf16.msra.mxu0 %v2885
        %2943 = vmatmul.bf16.gmra.mxu0 %v2888
        %v2944 = vpop.f32.mrf.mxu0
        %v2945 = vadd.f32 0.0, %v2944
        %v2946 = vpop.f32.mrf.mxu0
        %v2947 = vadd.f32 0.0, %v2946
        %2948 = vmatmul.bf16.gmra.mxu0 %v2891
        %v2949 = vpop.f32.mrf.mxu0
        %v2950 = vadd.f32 0.0, %v2949
        %v2951 = vpop.f32.mrf.mxu0
        %v2952 = vadd.f32 0.0, %v2951
        %2953 = vmatmul.bf16.gmra.mxu0 %v2894
        %v2954 = vpop.f32.mrf.mxu0
        %v2955 = vadd.f32 0.0, %v2954
        %v2956 = vpop.f32.mrf.mxu0
        %v2957 = vadd.f32 0.0, %v2956
        %2958 = vmatmul.bf16.gmra.mxu0 %v2897
        %v2959 = vpop.f32.mrf.mxu0
        %v2960 = vadd.f32 0.0, %v2959
        %v2961 = vpop.f32.mrf.mxu0
        %v2962 = vadd.f32 0.0, %v2961
        %2963 = vmatmul.bf16.gmra.mxu0 %v2900
        %v2964 = vpop.f32.mrf.mxu0
        %v2965 = vadd.f32 0.0, %v2964
        %v2966 = vpop.f32.mrf.mxu0
        %v2967 = vadd.f32 0.0, %v2966
        %2968 = vmatmul.bf16.gmra.mxu0 %v2903
        %v2969 = vpop.f32.mrf.mxu0
        %v2970 = vadd.f32 0.0, %v2969
        %v2971 = vpop.f32.mrf.mxu0
        %v2972 = vadd.f32 0.0, %v2971
        %2973 = vmatmul.bf16.gmra.mxu0 %v2906
        %v2974 = vpop.f32.mrf.mxu0
        %v2975 = vadd.f32 0.0, %v2974
        %v2976 = vpop.f32.mrf.mxu0
        %v2977 = vadd.f32 0.0, %v2976
        %2978 = vmatmul.bf16.gmra.mxu0 %v2909
        %v2979 = vpop.f32.mrf.mxu0
        %v2980 = vadd.f32 0.0, %v2979
        %v2981 = vpop.f32.mrf.mxu0
        %v2982 = vadd.f32 0.0, %v2981
        %2983 = vmatmul.bf16.gmra.mxu0 %v2912
        %v2984 = vpop.f32.mrf.mxu0
        %v2985 = vadd.f32 0.0, %v2984
        %v2986 = vpop.f32.mrf.mxu0
        %v2987 = vadd.f32 0.0, %v2986
        %2988 = vmatmul.bf16.gmra.mxu0 %v2915
        %v2989 = vpop.f32.mrf.mxu0
        %v2990 = vadd.f32 0.0, %v2989
        %v2991 = vpop.f32.mrf.mxu0
        %v2992 = vadd.f32 0.0, %v2991
        %2993 = vmatmul.bf16.gmra.mxu0 %v2918
        %v2994 = vpop.f32.mrf.mxu0
        %v2995 = vadd.f32 0.0, %v2994
        %v2996 = vpop.f32.mrf.mxu0
        %v2997 = vadd.f32 0.0, %v2996
        %2998 = vmatmul.bf16.gmra.mxu0 %v2921
        %v2999 = vpop.f32.mrf.mxu0
        %v3000 = vadd.f32 0.0, %v2999
        %v3001 = vpop.f32.mrf.mxu0
        %v3002 = vadd.f32 0.0, %v3001
        %3003 = vmatmul.bf16.gmra.mxu0 %v2924
        %v3004 = vpop.f32.mrf.mxu0
        %v3005 = vadd.f32 0.0, %v3004
        %v3006 = vpop.f32.mrf.mxu0
        %v3007 = vadd.f32 0.0, %v3006
        %3008 = vmatmul.bf16.gmra.mxu0 %v2927
        %v3009 = vpop.f32.mrf.mxu0
        %v3010 = vadd.f32 0.0, %v3009
        %v3011 = vpop.f32.mrf.mxu0
        %v3012 = vadd.f32 0.0, %v3011
        %3013 = vmatmul.bf16.gmra.mxu0 %v2930
        %v3014 = vpop.f32.mrf.mxu0
        %v3015 = vadd.f32 0.0, %v3014
        %v3016 = vpop.f32.mrf.mxu0
        %v3017 = vadd.f32 0.0, %v3016
        %3018 = vmatmul.bf16.gmra.mxu0 %v2933
        %v3019 = vpop.f32.mrf.mxu0
        %v3020 = vadd.f32 0.0, %v3019
        %v3021 = vpop.f32.mrf.mxu0
        %v3022 = vadd.f32 0.0, %v3021
        %3023 = vdwg.mxu0
        %v3024 = vadd.f32 %v2733, %v2945
        %v3025 = vadd.f32 %v2734, %v2947
        %v3026 = vadd.f32 %v2735, %v2950
        %v3027 = vadd.f32 %v2736, %v2952
        %v3028 = vadd.f32 %v2737, %v2955
        %v3029 = vadd.f32 %v2738, %v2957
        %v3030 = vadd.f32 %v2739, %v2960
        %v3031 = vadd.f32 %v2740, %v2962
        %v3032 = vadd.f32 %v2741, %v2965
        %v3033 = vadd.f32 %v2742, %v2967
        %v3034 = vadd.f32 %v2743, %v2970
        %v3035 = vadd.f32 %v2744, %v2972
        %v3036 = vadd.f32 %v2745, %v2975
        %v3037 = vadd.f32 %v2746, %v2977
        %v3038 = vadd.f32 %v2747, %v2980
        %v3039 = vadd.f32 %v2748, %v2982
        %v3040 = vadd.f32 %v2749, %v2985
        %v3041 = vadd.f32 %v2750, %v2987
        %v3042 = vadd.f32 %v2751, %v2990
        %v3043 = vadd.f32 %v2752, %v2992
        %v3044 = vadd.f32 %v2753, %v2995
        %v3045 = vadd.f32 %v2754, %v2997
        %v3046 = vadd.f32 %v2755, %v3000
        %v3047 = vadd.f32 %v2756, %v3002
        %v3048 = vadd.f32 %v2757, %v3005
        %v3049 = vadd.f32 %v2758, %v3007
        %v3050 = vadd.f32 %v2759, %v3010
        %v3051 = vadd.f32 %v2760, %v3012
        %v3052 = vadd.f32 %v2761, %v3015
        %v3053 = vadd.f32 %v2762, %v3017
        %v3054 = vadd.f32 %v2763, %v3020
        %v3055 = vadd.f32 %v2764, %v3022
        %v3056 = vld [vmem:[%s2765] sm:$0xf]
        %v3057 = vld [vmem:[%s2765 + $0x4] sm:$0xf]
        %v3058 = vld [vmem:[%s2765 + $0x8] sm:$0x1]
        %v3059 = vld [vmem:[%s2765 + $0xc] sm:$0xf]
        %v3060 = vld [vmem:[%s2765 + $0x10] sm:$0xf]
        %v3061 = vld [vmem:[%s2765 + $0x14] sm:$0x1]
        %v3062 = vld [vmem:[%s2765 + $0x18] sm:$0xf]
        %v3063 = vld [vmem:[%s2765 + $0x1c] sm:$0xf]
        %v3064 = vld [vmem:[%s2765 + $0x20] sm:$0x1]
        %v3065 = vld [vmem:[%s2765 + $0x24] sm:$0xf]
        %v3066 = vld [vmem:[%s2765 + $0x28] sm:$0xf]
        %v3067 = vld [vmem:[%s2765 + $0x2c] sm:$0x1]
        %v3068 = vld [vmem:[%s2765 + $0x30] sm:$0xf]
        %v3069 = vld [vmem:[%s2765 + $0x34] sm:$0xf]
        %v3070 = vld [vmem:[%s2765 + $0x38] sm:$0x1]
        %v3071 = vld [vmem:[%s2765 + $0x3c] sm:$0xf]
        %v3072 = vld [vmem:[%s2765 + $0x40] sm:$0xf]
        %v3073 = vld [vmem:[%s2765 + $0x44] sm:$0x1]
        %v3074 = vld [vmem:[%s2765 + $0x48] sm:$0xf]
        %v3075 = vld [vmem:[%s2765 + $0x4c] sm:$0xf]
        %v3076 = vld [vmem:[%s2765 + $0x50] sm:$0x1]
        %v3077 = vld [vmem:[%s2765 + $0x54] sm:$0xf]
        %v3078 = vld [vmem:[%s2765 + $0x58] sm:$0xf]
        %v3079 = vld [vmem:[%s2765 + $0x5c] sm:$0x1]
        %v3080 = vld [vmem:[%s2765 + $0x60] sm:$0xf]
        %v3081 = vld [vmem:[%s2765 + $0x64] sm:$0xf]
        %v3082 = vld [vmem:[%s2765 + $0x68] sm:$0x1]
        %v3083 = vld [vmem:[%s2765 + $0x6c] sm:$0xf]
        %v3084 = vld [vmem:[%s2765 + $0x70] sm:$0xf]
        %v3085 = vld [vmem:[%s2765 + $0x74] sm:$0x1]
        %v3086 = vld [vmem:[%s2765 + $0x78] sm:$0xf]
        %v3087 = vld [vmem:[%s2765 + $0x7c] sm:$0xf]
        %v3088 = vld [vmem:[%s2765 + $0x80] sm:$0x1]
        %v3089 = vld [vmem:[%s2765 + $0x84] sm:$0xf]
        %v3090 = vld [vmem:[%s2765 + $0x88] sm:$0xf]
        %v3091 = vld [vmem:[%s2765 + $0x8c] sm:$0x1]
        %v3092 = vld [vmem:[%s2765 + $0x90] sm:$0xf]
        %v3093 = vld [vmem:[%s2765 + $0x94] sm:$0xf]
        %v3094 = vld [vmem:[%s2765 + $0x98] sm:$0x1]
        %v3095 = vld [vmem:[%s2765 + $0x9c] sm:$0xf]
        %v3096 = vld [vmem:[%s2765 + $0xa0] sm:$0xf]
        %v3097 = vld [vmem:[%s2765 + $0xa4] sm:$0x1]
        %v3098 = vld [vmem:[%s2765 + $0xa8] sm:$0xf]
        %v3099 = vld [vmem:[%s2765 + $0xac] sm:$0xf]
        %v3100 = vld [vmem:[%s2765 + $0xb0] sm:$0x1]
        %v3101 = vld [vmem:[%s2765 + $0xb4] sm:$0xf]
        %v3102 = vld [vmem:[%s2765 + $0xb8] sm:$0xf]
        %v3103 = vld [vmem:[%s2765 + $0xbc] sm:$0x1]
        %v3105 = vshrl.u32 %v3056, 16
        %v3107 = vrot.slane %v3105, 4
        %v3108 = vshll.u32 %v3056, 16
        %v3110 = vrot.slane %v3108, 5
        %v3111 = vor.u32 %v3107, %v3110
        %v3112 = vrot.slane %v3111, 4
        %v3114 = vshll.u32 %v3057, 16
        %v3116 = vrot.slane %v3114, 5
        %v3117 = vsel %vm222, %v3112, %v3116
        %v3118 = vshrl.u32 %v3057, 16
        %v3120 = vrot.slane %v3118, 4
        %v3121 = vor.u32 %v3120, %v3116
        %v3122 = vrot.slane %v3121, 4
        %v3124 = vshll.u32 %v3058, 16
        %v3126 = vrot.slane %v3124, 5
        %v3127 = vsel %vm222, %v3122, %v3126
        %v3129 = vshrl.u32 %v3059, 16
        %v3131 = vrot.slane %v3129, 4
        %v3132 = vshll.u32 %v3059, 16
        %v3134 = vrot.slane %v3132, 5
        %v3135 = vor.u32 %v3131, %v3134
        %v3136 = vrot.slane %v3135, 4
        %v3138 = vshll.u32 %v3060, 16
        %v3140 = vrot.slane %v3138, 5
        %v3141 = vsel %vm222, %v3136, %v3140
        %v3142 = vshrl.u32 %v3060, 16
        %v3144 = vrot.slane %v3142, 4
        %v3145 = vor.u32 %v3144, %v3140
        %v3146 = vrot.slane %v3145, 4
        %v3148 = vshll.u32 %v3061, 16
        %v3150 = vrot.slane %v3148, 5
        %v3151 = vsel %vm222, %v3146, %v3150
        %v3153 = vshrl.u32 %v3062, 16
        %v3155 = vrot.slane %v3153, 4
        %v3156 = vshll.u32 %v3062, 16
        %v3158 = vrot.slane %v3156, 5
        %v3159 = vor.u32 %v3155, %v3158
        %v3160 = vrot.slane %v3159, 4
        %v3162 = vshll.u32 %v3063, 16
        %v3164 = vrot.slane %v3162, 5
        %v3165 = vsel %vm222, %v3160, %v3164
        %v3166 = vshrl.u32 %v3063, 16
        %v3168 = vrot.slane %v3166, 4
        %v3169 = vor.u32 %v3168, %v3164
        %v3170 = vrot.slane %v3169, 4
        %v3172 = vshll.u32 %v3064, 16
        %v3174 = vrot.slane %v3172, 5
        %v3175 = vsel %vm222, %v3170, %v3174
        %v3177 = vshrl.u32 %v3065, 16
        %v3179 = vrot.slane %v3177, 4
        %v3180 = vshll.u32 %v3065, 16
        %v3182 = vrot.slane %v3180, 5
        %v3183 = vor.u32 %v3179, %v3182
        %v3184 = vrot.slane %v3183, 4
        %v3186 = vshll.u32 %v3066, 16
        %v3188 = vrot.slane %v3186, 5
        %v3189 = vsel %vm222, %v3184, %v3188
        %v3190 = vshrl.u32 %v3066, 16
        %v3192 = vrot.slane %v3190, 4
        %v3193 = vor.u32 %v3192, %v3188
        %v3194 = vrot.slane %v3193, 4
        %v3196 = vshll.u32 %v3067, 16
        %v3198 = vrot.slane %v3196, 5
        %v3199 = vsel %vm222, %v3194, %v3198
        %v3201 = vshrl.u32 %v3068, 16
        %v3203 = vrot.slane %v3201, 4
        %v3204 = vshll.u32 %v3068, 16
        %v3206 = vrot.slane %v3204, 5
        %v3207 = vor.u32 %v3203, %v3206
        %v3208 = vrot.slane %v3207, 4
        %v3210 = vshll.u32 %v3069, 16
        %v3212 = vrot.slane %v3210, 5
        %v3213 = vsel %vm222, %v3208, %v3212
        %v3214 = vshrl.u32 %v3069, 16
        %v3216 = vrot.slane %v3214, 4
        %v3217 = vor.u32 %v3216, %v3212
        %v3218 = vrot.slane %v3217, 4
        %v3220 = vshll.u32 %v3070, 16
        %v3222 = vrot.slane %v3220, 5
        %v3223 = vsel %vm222, %v3218, %v3222
        %v3225 = vshrl.u32 %v3071, 16
        %v3227 = vrot.slane %v3225, 4
        %v3228 = vshll.u32 %v3071, 16
        %v3230 = vrot.slane %v3228, 5
        %v3231 = vor.u32 %v3227, %v3230
        %v3232 = vrot.slane %v3231, 4
        %v3234 = vshll.u32 %v3072, 16
        %v3236 = vrot.slane %v3234, 5
        %v3237 = vsel %vm222, %v3232, %v3236
        %v3238 = vshrl.u32 %v3072, 16
        %v3240 = vrot.slane %v3238, 4
        %v3241 = vor.u32 %v3240, %v3236
        %v3242 = vrot.slane %v3241, 4
        %v3244 = vshll.u32 %v3073, 16
        %v3246 = vrot.slane %v3244, 5
        %v3247 = vsel %vm222, %v3242, %v3246
        %v3249 = vshrl.u32 %v3074, 16
        %v3251 = vrot.slane %v3249, 4
        %v3252 = vshll.u32 %v3074, 16
        %v3254 = vrot.slane %v3252, 5
        %v3255 = vor.u32 %v3251, %v3254
        %v3256 = vrot.slane %v3255, 4
        %v3258 = vshll.u32 %v3075, 16
        %v3260 = vrot.slane %v3258, 5
        %v3261 = vsel %vm222, %v3256, %v3260
        %v3262 = vshrl.u32 %v3075, 16
        %v3264 = vrot.slane %v3262, 4
        %v3265 = vor.u32 %v3264, %v3260
        %v3266 = vrot.slane %v3265, 4
        %v3268 = vshll.u32 %v3076, 16
        %v3270 = vrot.slane %v3268, 5
        %v3271 = vsel %vm222, %v3266, %v3270
        %v3273 = vshrl.u32 %v3077, 16
        %v3275 = vrot.slane %v3273, 4
        %v3276 = vshll.u32 %v3077, 16
        %v3278 = vrot.slane %v3276, 5
        %v3279 = vor.u32 %v3275, %v3278
        %v3280 = vrot.slane %v3279, 4
        %v3282 = vshll.u32 %v3078, 16
        %v3284 = vrot.slane %v3282, 5
        %v3285 = vsel %vm222, %v3280, %v3284
        %v3286 = vshrl.u32 %v3078, 16
        %v3288 = vrot.slane %v3286, 4
        %v3289 = vor.u32 %v3288, %v3284
        %v3290 = vrot.slane %v3289, 4
        %v3292 = vshll.u32 %v3079, 16
        %v3294 = vrot.slane %v3292, 5
        %v3295 = vsel %vm222, %v3290, %v3294
        %v3297 = vshrl.u32 %v3080, 16
        %v3299 = vrot.slane %v3297, 4
        %v3300 = vshll.u32 %v3080, 16
        %v3302 = vrot.slane %v3300, 5
        %v3303 = vor.u32 %v3299, %v3302
        %v3304 = vrot.slane %v3303, 4
        %v3306 = vshll.u32 %v3081, 16
        %v3308 = vrot.slane %v3306, 5
        %v3309 = vsel %vm222, %v3304, %v3308
        %v3310 = vshrl.u32 %v3081, 16
        %v3312 = vrot.slane %v3310, 4
        %v3313 = vor.u32 %v3312, %v3308
        %v3314 = vrot.slane %v3313, 4
        %v3316 = vshll.u32 %v3082, 16
        %v3318 = vrot.slane %v3316, 5
        %v3319 = vsel %vm222, %v3314, %v3318
        %v3321 = vshrl.u32 %v3083, 16
        %v3323 = vrot.slane %v3321, 4
        %v3324 = vshll.u32 %v3083, 16
        %v3326 = vrot.slane %v3324, 5
        %v3327 = vor.u32 %v3323, %v3326
        %v3328 = vrot.slane %v3327, 4
        %v3330 = vshll.u32 %v3084, 16
        %v3332 = vrot.slane %v3330, 5
        %v3333 = vsel %vm222, %v3328, %v3332
        %v3334 = vshrl.u32 %v3084, 16
        %v3336 = vrot.slane %v3334, 4
        %v3337 = vor.u32 %v3336, %v3332
        %v3338 = vrot.slane %v3337, 4
        %v3340 = vshll.u32 %v3085, 16
        %v3342 = vrot.slane %v3340, 5
        %v3343 = vsel %vm222, %v3338, %v3342
        %v3345 = vshrl.u32 %v3086, 16
        %v3347 = vrot.slane %v3345, 4
        %v3348 = vshll.u32 %v3086, 16
        %v3350 = vrot.slane %v3348, 5
        %v3351 = vor.u32 %v3347, %v3350
        %v3352 = vrot.slane %v3351, 4
        %v3354 = vshll.u32 %v3087, 16
        %v3356 = vrot.slane %v3354, 5
        %v3357 = vsel %vm222, %v3352, %v3356
        %v3358 = vshrl.u32 %v3087, 16
        %v3360 = vrot.slane %v3358, 4
        %v3361 = vor.u32 %v3360, %v3356
        %v3362 = vrot.slane %v3361, 4
        %v3364 = vshll.u32 %v3088, 16
        %v3366 = vrot.slane %v3364, 5
        %v3367 = vsel %vm222, %v3362, %v3366
        %v3369 = vshrl.u32 %v3089, 16
        %v3371 = vrot.slane %v3369, 4
        %v3372 = vshll.u32 %v3089, 16
        %v3374 = vrot.slane %v3372, 5
        %v3375 = vor.u32 %v3371, %v3374
        %v3376 = vrot.slane %v3375, 4
        %v3378 = vshll.u32 %v3090, 16
        %v3380 = vrot.slane %v3378, 5
        %v3381 = vsel %vm222, %v3376, %v3380
        %v3382 = vshrl.u32 %v3090, 16
        %v3384 = vrot.slane %v3382, 4
        %v3385 = vor.u32 %v3384, %v3380
        %v3386 = vrot.slane %v3385, 4
        %v3388 = vshll.u32 %v3091, 16
        %v3390 = vrot.slane %v3388, 5
        %v3391 = vsel %vm222, %v3386, %v3390
        %v3393 = vshrl.u32 %v3092, 16
        %v3395 = vrot.slane %v3393, 4
        %v3396 = vshll.u32 %v3092, 16
        %v3398 = vrot.slane %v3396, 5
        %v3399 = vor.u32 %v3395, %v3398
        %v3400 = vrot.slane %v3399, 4
        %v3402 = vshll.u32 %v3093, 16
        %v3404 = vrot.slane %v3402, 5
        %v3405 = vsel %vm222, %v3400, %v3404
        %v3406 = vshrl.u32 %v3093, 16
        %v3408 = vrot.slane %v3406, 4
        %v3409 = vor.u32 %v3408, %v3404
        %v3410 = vrot.slane %v3409, 4
        %v3412 = vshll.u32 %v3094, 16
        %v3414 = vrot.slane %v3412, 5
        %v3415 = vsel %vm222, %v3410, %v3414
        %v3417 = vshrl.u32 %v3095, 16
        %v3419 = vrot.slane %v3417, 4
        %v3420 = vshll.u32 %v3095, 16
        %v3422 = vrot.slane %v3420, 5
        %v3423 = vor.u32 %v3419, %v3422
        %v3424 = vrot.slane %v3423, 4
        %v3426 = vshll.u32 %v3096, 16
        %v3428 = vrot.slane %v3426, 5
        %v3429 = vsel %vm222, %v3424, %v3428
        %v3430 = vshrl.u32 %v3096, 16
        %v3432 = vrot.slane %v3430, 4
        %v3433 = vor.u32 %v3432, %v3428
        %v3434 = vrot.slane %v3433, 4
        %v3436 = vshll.u32 %v3097, 16
        %v3438 = vrot.slane %v3436, 5
        %v3439 = vsel %vm222, %v3434, %v3438
        %v3441 = vshrl.u32 %v3098, 16
        %v3443 = vrot.slane %v3441, 4
        %v3444 = vshll.u32 %v3098, 16
        %v3446 = vrot.slane %v3444, 5
        %v3447 = vor.u32 %v3443, %v3446
        %v3448 = vrot.slane %v3447, 4
        %v3450 = vshll.u32 %v3099, 16
        %v3452 = vrot.slane %v3450, 5
        %v3453 = vsel %vm222, %v3448, %v3452
        %v3454 = vshrl.u32 %v3099, 16
        %v3456 = vrot.slane %v3454, 4
        %v3457 = vor.u32 %v3456, %v3452
        %v3458 = vrot.slane %v3457, 4
        %v3460 = vshll.u32 %v3100, 16
        %v3462 = vrot.slane %v3460, 5
        %v3463 = vsel %vm222, %v3458, %v3462
        %v3465 = vshrl.u32 %v3101, 16
        %v3467 = vrot.slane %v3465, 4
        %v3468 = vshll.u32 %v3101, 16
        %v3470 = vrot.slane %v3468, 5
        %v3471 = vor.u32 %v3467, %v3470
        %v3472 = vrot.slane %v3471, 4
        %v3474 = vshll.u32 %v3102, 16
        %v3476 = vrot.slane %v3474, 5
        %v3477 = vsel %vm222, %v3472, %v3476
        %v3478 = vshrl.u32 %v3102, 16
        %v3480 = vrot.slane %v3478, 4
        %v3481 = vor.u32 %v3480, %v3476
        %v3482 = vrot.slane %v3481, 4
        %v3484 = vshll.u32 %v3103, 16
        %v3486 = vrot.slane %v3484, 5
        %v3487 = vsel %vm222, %v3482, %v3486
        %s3488 = scalar_lea.vmem %s1, 56
        %v3489 = vld [vmem:[%s3488] sm:$0xf]
        %v3490 = vld [vmem:[%s3488 + $0x4] sm:$0xf]
        %v3491 = vunpack.c.l.b16 %v3117
        %v3492 = vunpack.c.l.b16 %v3127
        %v3493 = vunpack.c.l.b16 %v3141
        %v3494 = vunpack.c.l.b16 %v3151
        %v3495 = vunpack.c.l.b16 %v3165
        %v3496 = vunpack.c.l.b16 %v3175
        %v3497 = vunpack.c.l.b16 %v3189
        %v3498 = vunpack.c.l.b16 %v3199
        %v3499 = vunpack.c.l.b16 %v3213
        %v3500 = vunpack.c.l.b16 %v3223
        %v3501 = vunpack.c.l.b16 %v3237
        %v3502 = vunpack.c.l.b16 %v3247
        %v3503 = vunpack.c.l.b16 %v3261
        %v3504 = vunpack.c.l.b16 %v3271
        %v3505 = vunpack.c.l.b16 %v3285
        %v3506 = vunpack.c.l.b16 %v3295
        %v3507 = vunpack.c.l.b16 %v3309
        %v3508 = vunpack.c.l.b16 %v3319
        %v3509 = vunpack.c.l.b16 %v3333
        %v3510 = vunpack.c.l.b16 %v3343
        %v3511 = vunpack.c.l.b16 %v3357
        %v3512 = vunpack.c.l.b16 %v3367
        %v3513 = vunpack.c.l.b16 %v3381
        %v3514 = vunpack.c.l.b16 %v3391
        %v3515 = vunpack.c.l.b16 %v3405
        %v3516 = vunpack.c.l.b16 %v3415
        %v3517 = vunpack.c.l.b16 %v3429
        %v3518 = vunpack.c.l.b16 %v3439
        %v3519 = vunpack.c.l.b16 %v3453
        %v3520 = vunpack.c.l.b16 %v3463
        %v3521 = vunpack.c.l.b16 %v3477
        %v3522 = vunpack.c.l.b16 %v3487
        %v3523 = vpack.c.b16 %v3492, %v3491
        %v3524 = vpack.c.b16 %v3494, %v3493
        %v3525 = vpack.c.b16 %v3496, %v3495
        %v3526 = vpack.c.b16 %v3498, %v3497
        %v3527 = vpack.c.b16 %v3500, %v3499
        %v3528 = vpack.c.b16 %v3502, %v3501
        %v3529 = vpack.c.b16 %v3504, %v3503
        %v3530 = vpack.c.b16 %v3506, %v3505
        %v3531 = vpack.c.b16 %v3508, %v3507
        %v3532 = vpack.c.b16 %v3510, %v3509
        %v3533 = vpack.c.b16 %v3512, %v3511
        %v3534 = vpack.c.b16 %v3514, %v3513
        %v3535 = vpack.c.b16 %v3516, %v3515
        %v3536 = vpack.c.b16 %v3518, %v3517
        %v3537 = vpack.c.b16 %v3520, %v3519
        %v3538 = vpack.c.b16 %v3522, %v3521
        %v3541 = vunpack.c.l.b16 %v3489
        %v3542 = vunpack.c.l.b16 %v3490
        %v3543 = vpack.c.b16 %v3542, %v3541
        %v3546 = vsel %vm664, %v3523, 0
        %v3549 = vsel %vm664, %v3524, 0
        %v3552 = vsel %vm664, %v3525, 0
        %v3555 = vsel %vm664, %v3526, 0
        %v3558 = vsel %vm664, %v3527, 0
        %v3561 = vsel %vm664, %v3528, 0
        %v3564 = vsel %vm664, %v3529, 0
        %v3567 = vsel %vm664, %v3530, 0
        %v3570 = vsel %vm664, %v3531, 0
        %v3573 = vsel %vm664, %v3532, 0
        %v3576 = vsel %vm664, %v3533, 0
        %v3579 = vsel %vm664, %v3534, 0
        %v3582 = vsel %vm664, %v3535, 0
        %v3585 = vsel %vm664, %v3536, 0
        %v3588 = vsel %vm664, %v3537, 0
        %v3591 = vsel %vm664, %v3538, 0
        %3593 = vmatpush.bf16.msra.mxu0 0
        %3594 = vmatpush.bf16.msra.mxu0 0
        %3595 = vmatpush.bf16.msra.mxu0 0
        %3596 = vmatpush.bf16.msra.mxu0 0
        %3597 = vmatpush.bf16.msra.mxu0 0
        %3598 = vmatpush.bf16.msra.mxu0 0
        %3599 = vmatpush.bf16.msra.mxu0 0
        %3600 = vmatpush.bf16.msra.mxu0 %v3543
        %3601 = vmatmul.bf16.gmra.mxu0 %v3546
        %v3602 = vpop.f32.mrf.mxu0
        %v3603 = vadd.f32 0.0, %v3602
        %v3604 = vpop.f32.mrf.mxu0
        %v3605 = vadd.f32 0.0, %v3604
        %3606 = vmatmul.bf16.gmra.mxu0 %v3549
        %v3607 = vpop.f32.mrf.mxu0
        %v3608 = vadd.f32 0.0, %v3607
        %v3609 = vpop.f32.mrf.mxu0
        %v3610 = vadd.f32 0.0, %v3609
        %3611 = vmatmul.bf16.gmra.mxu0 %v3552
        %v3612 = vpop.f32.mrf.mxu0
        %v3613 = vadd.f32 0.0, %v3612
        %v3614 = vpop.f32.mrf.mxu0
        %v3615 = vadd.f32 0.0, %v3614
        %3616 = vmatmul.bf16.gmra.mxu0 %v3555
        %v3617 = vpop.f32.mrf.mxu0
        %v3618 = vadd.f32 0.0, %v3617
        %v3619 = vpop.f32.mrf.mxu0
        %v3620 = vadd.f32 0.0, %v3619
        %3621 = vmatmul.bf16.gmra.mxu0 %v3558
        %v3622 = vpop.f32.mrf.mxu0
        %v3623 = vadd.f32 0.0, %v3622
        %v3624 = vpop.f32.mrf.mxu0
        %v3625 = vadd.f32 0.0, %v3624
        %3626 = vmatmul.bf16.gmra.mxu0 %v3561
        %v3627 = vpop.f32.mrf.mxu0
        %v3628 = vadd.f32 0.0, %v3627
        %v3629 = vpop.f32.mrf.mxu0
        %v3630 = vadd.f32 0.0, %v3629
        %3631 = vmatmul.bf16.gmra.mxu0 %v3564
        %v3632 = vpop.f32.mrf.mxu0
        %v3633 = vadd.f32 0.0, %v3632
        %v3634 = vpop.f32.mrf.mxu0
        %v3635 = vadd.f32 0.0, %v3634
        %3636 = vmatmul.bf16.gmra.mxu0 %v3567
        %v3637 = vpop.f32.mrf.mxu0
        %v3638 = vadd.f32 0.0, %v3637
        %v3639 = vpop.f32.mrf.mxu0
        %v3640 = vadd.f32 0.0, %v3639
        %3641 = vmatmul.bf16.gmra.mxu0 %v3570
        %v3642 = vpop.f32.mrf.mxu0
        %v3643 = vadd.f32 0.0, %v3642
        %v3644 = vpop.f32.mrf.mxu0
        %v3645 = vadd.f32 0.0, %v3644
        %3646 = vmatmul.bf16.gmra.mxu0 %v3573
        %v3647 = vpop.f32.mrf.mxu0
        %v3648 = vadd.f32 0.0, %v3647
        %v3649 = vpop.f32.mrf.mxu0
        %v3650 = vadd.f32 0.0, %v3649
        %3651 = vmatmul.bf16.gmra.mxu0 %v3576
        %v3652 = vpop.f32.mrf.mxu0
        %v3653 = vadd.f32 0.0, %v3652
        %v3654 = vpop.f32.mrf.mxu0
        %v3655 = vadd.f32 0.0, %v3654
        %3656 = vmatmul.bf16.gmra.mxu0 %v3579
        %v3657 = vpop.f32.mrf.mxu0
        %v3658 = vadd.f32 0.0, %v3657
        %v3659 = vpop.f32.mrf.mxu0
        %v3660 = vadd.f32 0.0, %v3659
        %3661 = vmatmul.bf16.gmra.mxu0 %v3582
        %v3662 = vpop.f32.mrf.mxu0
        %v3663 = vadd.f32 0.0, %v3662
        %v3664 = vpop.f32.mrf.mxu0
        %v3665 = vadd.f32 0.0, %v3664
        %3666 = vmatmul.bf16.gmra.mxu0 %v3585
        %v3667 = vpop.f32.mrf.mxu0
        %v3668 = vadd.f32 0.0, %v3667
        %v3669 = vpop.f32.mrf.mxu0
        %v3670 = vadd.f32 0.0, %v3669
        %3671 = vmatmul.bf16.gmra.mxu0 %v3588
        %v3672 = vpop.f32.mrf.mxu0
        %v3673 = vadd.f32 0.0, %v3672
        %v3674 = vpop.f32.mrf.mxu0
        %v3675 = vadd.f32 0.0, %v3674
        %3676 = vmatmul.bf16.gmra.mxu0 %v3591
        %v3677 = vpop.f32.mrf.mxu0
        %v3678 = vadd.f32 0.0, %v3677
        %v3679 = vpop.f32.mrf.mxu0
        %v3680 = vadd.f32 0.0, %v3679
        %3681 = vdwg.mxu0
        %v3682 = vadd.f32 %v3024, %v3603
        %v3683 = vadd.f32 %v3025, %v3605
        %v3684 = vadd.f32 %v3026, %v3608
        %v3685 = vadd.f32 %v3027, %v3610
        %v3686 = vadd.f32 %v3028, %v3613
        %v3687 = vadd.f32 %v3029, %v3615
        %v3688 = vadd.f32 %v3030, %v3618
        %v3689 = vadd.f32 %v3031, %v3620
        %v3690 = vadd.f32 %v3032, %v3623
        %v3691 = vadd.f32 %v3033, %v3625
        %v3692 = vadd.f32 %v3034, %v3628
        %v3693 = vadd.f32 %v3035, %v3630
        %v3694 = vadd.f32 %v3036, %v3633
        %v3695 = vadd.f32 %v3037, %v3635
        %v3696 = vadd.f32 %v3038, %v3638
        %v3697 = vadd.f32 %v3039, %v3640
        %v3698 = vadd.f32 %v3040, %v3643
        %v3699 = vadd.f32 %v3041, %v3645
        %v3700 = vadd.f32 %v3042, %v3648
        %v3701 = vadd.f32 %v3043, %v3650
        %v3702 = vadd.f32 %v3044, %v3653
        %v3703 = vadd.f32 %v3045, %v3655
        %v3704 = vadd.f32 %v3046, %v3658
        %v3705 = vadd.f32 %v3047, %v3660
        %v3706 = vadd.f32 %v3048, %v3663
        %v3707 = vadd.f32 %v3049, %v3665
        %v3708 = vadd.f32 %v3050, %v3668
        %v3709 = vadd.f32 %v3051, %v3670
        %v3710 = vadd.f32 %v3052, %v3673
        %v3711 = vadd.f32 %v3053, %v3675
        %v3712 = vadd.f32 %v3054, %v3678
        %v3713 = vadd.f32 %v3055, %v3680
        %v3714 = vld [vmem:[%s2765] sm:$0xe]
        %v3715 = vld [vmem:[%s2765 + $0xc] sm:$0xe]
        %v3716 = vld [vmem:[%s2765 + $0x18] sm:$0xe]
        %v3717 = vld [vmem:[%s2765 + $0x24] sm:$0xe]
        %v3718 = vld [vmem:[%s2765 + $0x30] sm:$0xe]
        %v3719 = vld [vmem:[%s2765 + $0x3c] sm:$0xe]
        %v3720 = vld [vmem:[%s2765 + $0x48] sm:$0xe]
        %v3721 = vld [vmem:[%s2765 + $0x54] sm:$0xe]
        %v3722 = vld [vmem:[%s2765 + $0x60] sm:$0xe]
        %v3723 = vld [vmem:[%s2765 + $0x6c] sm:$0xe]
        %v3724 = vld [vmem:[%s2765 + $0x78] sm:$0xe]
        %v3725 = vld [vmem:[%s2765 + $0x84] sm:$0xe]
        %v3726 = vld [vmem:[%s2765 + $0x90] sm:$0xe]
        %v3727 = vld [vmem:[%s2765 + $0x9c] sm:$0xe]
        %v3728 = vld [vmem:[%s2765 + $0xa8] sm:$0xe]
        %v3729 = vld [vmem:[%s2765 + $0xb4] sm:$0xe]
        %v3778 = vrot.slane %v3714, 5
        %v3779 = vrot.slane %v3778, 4
        %v3780 = vrot.slane %v3057, 5
        %v3781 = vsel %vm1075, %v3779, %v3780
        %v3782 = vrot.slane %v3780, 4
        %v3783 = vrot.slane %v3058, 5
        %v3784 = vsel %vm1075, %v3782, %v3783
        %v3785 = vrot.slane %v3715, 5
        %v3786 = vrot.slane %v3785, 4
        %v3787 = vrot.slane %v3060, 5
        %v3788 = vsel %vm1075, %v3786, %v3787
        %v3789 = vrot.slane %v3787, 4
        %v3790 = vrot.slane %v3061, 5
        %v3791 = vsel %vm1075, %v3789, %v3790
        %v3792 = vrot.slane %v3716, 5
        %v3793 = vrot.slane %v3792, 4
        %v3794 = vrot.slane %v3063, 5
        %v3795 = vsel %vm1075, %v3793, %v3794
        %v3796 = vrot.slane %v3794, 4
        %v3797 = vrot.slane %v3064, 5
        %v3798 = vsel %vm1075, %v3796, %v3797
        %v3799 = vrot.slane %v3717, 5
        %v3800 = vrot.slane %v3799, 4
        %v3801 = vrot.slane %v3066, 5
        %v3802 = vsel %vm1075, %v3800, %v3801
        %v3803 = vrot.slane %v3801, 4
        %v3804 = vrot.slane %v3067, 5
        %v3805 = vsel %vm1075, %v3803, %v3804
        %v3806 = vrot.slane %v3718, 5
        %v3807 = vrot.slane %v3806, 4
        %v3808 = vrot.slane %v3069, 5
        %v3809 = vsel %vm1075, %v3807, %v3808
        %v3810 = vrot.slane %v3808, 4
        %v3811 = vrot.slane %v3070, 5
        %v3812 = vsel %vm1075, %v3810, %v3811
        %v3813 = vrot.slane %v3719, 5
        %v3814 = vrot.slane %v3813, 4
        %v3815 = vrot.slane %v3072, 5
        %v3816 = vsel %vm1075, %v3814, %v3815
        %v3817 = vrot.slane %v3815, 4
        %v3818 = vrot.slane %v3073, 5
        %v3819 = vsel %vm1075, %v3817, %v3818
        %v3820 = vrot.slane %v3720, 5
        %v3821 = vrot.slane %v3820, 4
        %v3822 = vrot.slane %v3075, 5
        %v3823 = vsel %vm1075, %v3821, %v3822
        %v3824 = vrot.slane %v3822, 4
        %v3825 = vrot.slane %v3076, 5
        %v3826 = vsel %vm1075, %v3824, %v3825
        %v3827 = vrot.slane %v3721, 5
        %v3828 = vrot.slane %v3827, 4
        %v3829 = vrot.slane %v3078, 5
        %v3830 = vsel %vm1075, %v3828, %v3829
        %v3831 = vrot.slane %v3829, 4
        %v3832 = vrot.slane %v3079, 5
        %v3833 = vsel %vm1075, %v3831, %v3832
        %v3834 = vrot.slane %v3722, 5
        %v3835 = vrot.slane %v3834, 4
        %v3836 = vrot.slane %v3081, 5
        %v3837 = vsel %vm1075, %v3835, %v3836
        %v3838 = vrot.slane %v3836, 4
        %v3839 = vrot.slane %v3082, 5
        %v3840 = vsel %vm1075, %v3838, %v3839
        %v3841 = vrot.slane %v3723, 5
        %v3842 = vrot.slane %v3841, 4
        %v3843 = vrot.slane %v3084, 5
        %v3844 = vsel %vm1075, %v3842, %v3843
        %v3845 = vrot.slane %v3843, 4
        %v3846 = vrot.slane %v3085, 5
        %v3847 = vsel %vm1075, %v3845, %v3846
        %v3848 = vrot.slane %v3724, 5
        %v3849 = vrot.slane %v3848, 4
        %v3850 = vrot.slane %v3087, 5
        %v3851 = vsel %vm1075, %v3849, %v3850
        %v3852 = vrot.slane %v3850, 4
        %v3853 = vrot.slane %v3088, 5
        %v3854 = vsel %vm1075, %v3852, %v3853
        %v3855 = vrot.slane %v3725, 5
        %v3856 = vrot.slane %v3855, 4
        %v3857 = vrot.slane %v3090, 5
        %v3858 = vsel %vm1075, %v3856, %v3857
        %v3859 = vrot.slane %v3857, 4
        %v3860 = vrot.slane %v3091, 5
        %v3861 = vsel %vm1075, %v3859, %v3860
        %v3862 = vrot.slane %v3726, 5
        %v3863 = vrot.slane %v3862, 4
        %v3864 = vrot.slane %v3093, 5
        %v3865 = vsel %vm1075, %v3863, %v3864
        %v3866 = vrot.slane %v3864, 4
        %v3867 = vrot.slane %v3094, 5
        %v3868 = vsel %vm1075, %v3866, %v3867
        %v3869 = vrot.slane %v3727, 5
        %v3870 = vrot.slane %v3869, 4
        %v3871 = vrot.slane %v3096, 5
        %v3872 = vsel %vm1075, %v3870, %v3871
        %v3873 = vrot.slane %v3871, 4
        %v3874 = vrot.slane %v3097, 5
        %v3875 = vsel %vm1075, %v3873, %v3874
        %v3876 = vrot.slane %v3728, 5
        %v3877 = vrot.slane %v3876, 4
        %v3878 = vrot.slane %v3099, 5
        %v3879 = vsel %vm1075, %v3877, %v3878
        %v3880 = vrot.slane %v3878, 4
        %v3881 = vrot.slane %v3100, 5
        %v3882 = vsel %vm1075, %v3880, %v3881
        %v3883 = vrot.slane %v3729, 5
        %v3884 = vrot.slane %v3883, 4
        %v3885 = vrot.slane %v3102, 5
        %v3886 = vsel %vm1075, %v3884, %v3885
        %v3887 = vrot.slane %v3885, 4
        %v3888 = vrot.slane %v3103, 5
        %v3889 = vsel %vm1075, %v3887, %v3888
        %s3890 = scalar_lea.vmem %s1, 64
        %v3891 = vld [vmem:[%s3890] sm:$0xf]
        %v3892 = vld [vmem:[%s3890 + $0x4] sm:$0xf]
        %v3893 = vunpack.c.l.b16 %v3781
        %v3894 = vunpack.c.l.b16 %v3784
        %v3895 = vunpack.c.l.b16 %v3788
        %v3896 = vunpack.c.l.b16 %v3791
        %v3897 = vunpack.c.l.b16 %v3795
        %v3898 = vunpack.c.l.b16 %v3798
        %v3899 = vunpack.c.l.b16 %v3802
        %v3900 = vunpack.c.l.b16 %v3805
        %v3901 = vunpack.c.l.b16 %v3809
        %v3902 = vunpack.c.l.b16 %v3812
        %v3903 = vunpack.c.l.b16 %v3816
        %v3904 = vunpack.c.l.b16 %v3819
        %v3905 = vunpack.c.l.b16 %v3823
        %v3906 = vunpack.c.l.b16 %v3826
        %v3907 = vunpack.c.l.b16 %v3830
        %v3908 = vunpack.c.l.b16 %v3833
        %v3909 = vunpack.c.l.b16 %v3837
        %v3910 = vunpack.c.l.b16 %v3840
        %v3911 = vunpack.c.l.b16 %v3844
        %v3912 = vunpack.c.l.b16 %v3847
        %v3913 = vunpack.c.l.b16 %v3851
        %v3914 = vunpack.c.l.b16 %v3854
        %v3915 = vunpack.c.l.b16 %v3858
        %v3916 = vunpack.c.l.b16 %v3861
        %v3917 = vunpack.c.l.b16 %v3865
        %v3918 = vunpack.c.l.b16 %v3868
        %v3919 = vunpack.c.l.b16 %v3872
        %v3920 = vunpack.c.l.b16 %v3875
        %v3921 = vunpack.c.l.b16 %v3879
        %v3922 = vunpack.c.l.b16 %v3882
        %v3923 = vunpack.c.l.b16 %v3886
        %v3924 = vunpack.c.l.b16 %v3889
        %v3925 = vpack.c.b16 %v3894, %v3893
        %v3926 = vpack.c.b16 %v3896, %v3895
        %v3927 = vpack.c.b16 %v3898, %v3897
        %v3928 = vpack.c.b16 %v3900, %v3899
        %v3929 = vpack.c.b16 %v3902, %v3901
        %v3930 = vpack.c.b16 %v3904, %v3903
        %v3931 = vpack.c.b16 %v3906, %v3905
        %v3932 = vpack.c.b16 %v3908, %v3907
        %v3933 = vpack.c.b16 %v3910, %v3909
        %v3934 = vpack.c.b16 %v3912, %v3911
        %v3935 = vpack.c.b16 %v3914, %v3913
        %v3936 = vpack.c.b16 %v3916, %v3915
        %v3937 = vpack.c.b16 %v3918, %v3917
        %v3938 = vpack.c.b16 %v3920, %v3919
        %v3939 = vpack.c.b16 %v3922, %v3921
        %v3940 = vpack.c.b16 %v3924, %v3923
        %v3943 = vunpack.c.l.b16 %v3891
        %v3944 = vunpack.c.l.b16 %v3892
        %v3945 = vpack.c.b16 %v3944, %v3943
        %v3948 = vsel %vm664, %v3925, 0
        %v3951 = vsel %vm664, %v3926, 0
        %v3954 = vsel %vm664, %v3927, 0
        %v3957 = vsel %vm664, %v3928, 0
        %v3960 = vsel %vm664, %v3929, 0
        %v3963 = vsel %vm664, %v3930, 0
        %v3966 = vsel %vm664, %v3931, 0
        %v3969 = vsel %vm664, %v3932, 0
        %v3972 = vsel %vm664, %v3933, 0
        %v3975 = vsel %vm664, %v3934, 0
        %v3978 = vsel %vm664, %v3935, 0
        %v3981 = vsel %vm664, %v3936, 0
        %v3984 = vsel %vm664, %v3937, 0
        %v3987 = vsel %vm664, %v3938, 0
        %v3990 = vsel %vm664, %v3939, 0
        %v3993 = vsel %vm664, %v3940, 0
        %3995 = vmatpush.bf16.msra.mxu0 0
        %3996 = vmatpush.bf16.msra.mxu0 0
        %3997 = vmatpush.bf16.msra.mxu0 0
        %3998 = vmatpush.bf16.msra.mxu0 0
        %3999 = vmatpush.bf16.msra.mxu0 0
        %4000 = vmatpush.bf16.msra.mxu0 0
        %4001 = vmatpush.bf16.msra.mxu0 0
        %4002 = vmatpush.bf16.msra.mxu0 %v3945
        %4003 = vmatmul.bf16.gmra.mxu0 %v3948
        %v4004 = vpop.f32.mrf.mxu0
        %v4005 = vadd.f32 0.0, %v4004
        %v4006 = vpop.f32.mrf.mxu0
        %v4007 = vadd.f32 0.0, %v4006
        %4008 = vmatmul.bf16.gmra.mxu0 %v3951
        %v4009 = vpop.f32.mrf.mxu0
        %v4010 = vadd.f32 0.0, %v4009
        %v4011 = vpop.f32.mrf.mxu0
        %v4012 = vadd.f32 0.0, %v4011
        %4013 = vmatmul.bf16.gmra.mxu0 %v3954
        %v4014 = vpop.f32.mrf.mxu0
        %v4015 = vadd.f32 0.0, %v4014
        %v4016 = vpop.f32.mrf.mxu0
        %v4017 = vadd.f32 0.0, %v4016
        %4018 = vmatmul.bf16.gmra.mxu0 %v3957
        %v4019 = vpop.f32.mrf.mxu0
        %v4020 = vadd.f32 0.0, %v4019
        %v4021 = vpop.f32.mrf.mxu0
        %v4022 = vadd.f32 0.0, %v4021
        %4023 = vmatmul.bf16.gmra.mxu0 %v3960
        %v4024 = vpop.f32.mrf.mxu0
        %v4025 = vadd.f32 0.0, %v4024
        %v4026 = vpop.f32.mrf.mxu0
        %v4027 = vadd.f32 0.0, %v4026
        %4028 = vmatmul.bf16.gmra.mxu0 %v3963
        %v4029 = vpop.f32.mrf.mxu0
        %v4030 = vadd.f32 0.0, %v4029
        %v4031 = vpop.f32.mrf.mxu0
        %v4032 = vadd.f32 0.0, %v4031
        %4033 = vmatmul.bf16.gmra.mxu0 %v3966
        %v4034 = vpop.f32.mrf.mxu0
        %v4035 = vadd.f32 0.0, %v4034
        %v4036 = vpop.f32.mrf.mxu0
        %v4037 = vadd.f32 0.0, %v4036
        %4038 = vmatmul.bf16.gmra.mxu0 %v3969
        %v4039 = vpop.f32.mrf.mxu0
        %v4040 = vadd.f32 0.0, %v4039
        %v4041 = vpop.f32.mrf.mxu0
        %v4042 = vadd.f32 0.0, %v4041
        %4043 = vmatmul.bf16.gmra.mxu0 %v3972
        %v4044 = vpop.f32.mrf.mxu0
        %v4045 = vadd.f32 0.0, %v4044
        %v4046 = vpop.f32.mrf.mxu0
        %v4047 = vadd.f32 0.0, %v4046
        %4048 = vmatmul.bf16.gmra.mxu0 %v3975
        %v4049 = vpop.f32.mrf.mxu0
        %v4050 = vadd.f32 0.0, %v4049
        %v4051 = vpop.f32.mrf.mxu0
        %v4052 = vadd.f32 0.0, %v4051
        %4053 = vmatmul.bf16.gmra.mxu0 %v3978
        %v4054 = vpop.f32.mrf.mxu0
        %v4055 = vadd.f32 0.0, %v4054
        %v4056 = vpop.f32.mrf.mxu0
        %v4057 = vadd.f32 0.0, %v4056
        %4058 = vmatmul.bf16.gmra.mxu0 %v3981
        %v4059 = vpop.f32.mrf.mxu0
        %v4060 = vadd.f32 0.0, %v4059
        %v4061 = vpop.f32.mrf.mxu0
        %v4062 = vadd.f32 0.0, %v4061
        %4063 = vmatmul.bf16.gmra.mxu0 %v3984
        %v4064 = vpop.f32.mrf.mxu0
        %v4065 = vadd.f32 0.0, %v4064
        %v4066 = vpop.f32.mrf.mxu0
        %v4067 = vadd.f32 0.0, %v4066
        %4068 = vmatmul.bf16.gmra.mxu0 %v3987
        %v4069 = vpop.f32.mrf.mxu0
        %v4070 = vadd.f32 0.0, %v4069
        %v4071 = vpop.f32.mrf.mxu0
        %v4072 = vadd.f32 0.0, %v4071
        %4073 = vmatmul.bf16.gmra.mxu0 %v3990
        %v4074 = vpop.f32.mrf.mxu0
        %v4075 = vadd.f32 0.0, %v4074
        %v4076 = vpop.f32.mrf.mxu0
        %v4077 = vadd.f32 0.0, %v4076
        %4078 = vmatmul.bf16.gmra.mxu0 %v3993
        %v4079 = vpop.f32.mrf.mxu0
        %v4080 = vadd.f32 0.0, %v4079
        %v4081 = vpop.f32.mrf.mxu0
        %v4082 = vadd.f32 0.0, %v4081
        %4083 = vdwg.mxu0
        %v4084 = vadd.f32 %v3682, %v4005
        %v4085 = vadd.f32 %v3683, %v4007
        %v4086 = vadd.f32 %v3684, %v4010
        %v4087 = vadd.f32 %v3685, %v4012
        %v4088 = vadd.f32 %v3686, %v4015
        %v4089 = vadd.f32 %v3687, %v4017
        %v4090 = vadd.f32 %v3688, %v4020
        %v4091 = vadd.f32 %v3689, %v4022
        %v4092 = vadd.f32 %v3690, %v4025
        %v4093 = vadd.f32 %v3691, %v4027
        %v4094 = vadd.f32 %v3692, %v4030
        %v4095 = vadd.f32 %v3693, %v4032
        %v4096 = vadd.f32 %v3694, %v4035
        %v4097 = vadd.f32 %v3695, %v4037
        %v4098 = vadd.f32 %v3696, %v4040
        %v4099 = vadd.f32 %v3697, %v4042
        %v4100 = vadd.f32 %v3698, %v4045
        %v4101 = vadd.f32 %v3699, %v4047
        %v4102 = vadd.f32 %v3700, %v4050
        %v4103 = vadd.f32 %v3701, %v4052
        %v4104 = vadd.f32 %v3702, %v4055
        %v4105 = vadd.f32 %v3703, %v4057
        %v4106 = vadd.f32 %v3704, %v4060
        %v4107 = vadd.f32 %v3705, %v4062
        %v4108 = vadd.f32 %v3706, %v4065
        %v4109 = vadd.f32 %v3707, %v4067
        %v4110 = vadd.f32 %v3708, %v4070
        %v4111 = vadd.f32 %v3709, %v4072
        %v4112 = vadd.f32 %v3710, %v4075
        %v4113 = vadd.f32 %v3711, %v4077
        %v4114 = vadd.f32 %v3712, %v4080
        %v4115 = vadd.f32 %v3713, %v4082
        %v4116 = vld [vmem:[%s2] sm:$0x1]
        %v4118 = vperm.slane %v4116, 0
        %v4120 = vadd.f32 %v4084, %v4118
        %v4121 = vadd.f32 %v4085, %v4118
        %v4122 = vadd.f32 %v4086, %v4118
        %v4123 = vadd.f32 %v4087, %v4118
        %v4124 = vadd.f32 %v4088, %v4118
        %v4125 = vadd.f32 %v4089, %v4118
        %v4126 = vadd.f32 %v4090, %v4118
        %v4127 = vadd.f32 %v4091, %v4118
        %v4128 = vadd.f32 %v4092, %v4118
        %v4129 = vadd.f32 %v4093, %v4118
        %v4130 = vadd.f32 %v4094, %v4118
        %v4131 = vadd.f32 %v4095, %v4118
        %v4132 = vadd.f32 %v4096, %v4118
        %v4133 = vadd.f32 %v4097, %v4118
        %v4134 = vadd.f32 %v4098, %v4118
        %v4135 = vadd.f32 %v4099, %v4118
        %v4136 = vadd.f32 %v4100, %v4118
        %v4137 = vadd.f32 %v4101, %v4118
        %v4138 = vadd.f32 %v4102, %v4118
        %v4139 = vadd.f32 %v4103, %v4118
        %v4140 = vadd.f32 %v4104, %v4118
        %v4141 = vadd.f32 %v4105, %v4118
        %v4142 = vadd.f32 %v4106, %v4118
        %v4143 = vadd.f32 %v4107, %v4118
        %v4144 = vadd.f32 %v4108, %v4118
        %v4145 = vadd.f32 %v4109, %v4118
        %v4146 = vadd.f32 %v4110, %v4118
        %v4147 = vadd.f32 %v4111, %v4118
        %v4148 = vadd.f32 %v4112, %v4118
        %v4149 = vadd.f32 %v4113, %v4118
        %v4150 = vadd.f32 %v4114, %v4118
        %v4151 = vadd.f32 %v4115, %v4118
        %4152 = vst [vmem:[%s163] sm:$0xff] %v4120
        %4153 = vst [vmem:[%s163 + $0x8] sm:$0xff] %v4121
        %4154 = vst [vmem:[%s163 + $0x10] sm:$0xff] %v4122
        %4155 = vst [vmem:[%s163 + $0x18] sm:$0xff] %v4123
        %4156 = vst [vmem:[%s163 + $0x20] sm:$0xff] %v4124
        %4157 = vst [vmem:[%s163 + $0x28] sm:$0xff] %v4125
        %4158 = vst [vmem:[%s163 + $0x30] sm:$0xff] %v4126
        %4159 = vst [vmem:[%s163 + $0x38] sm:$0xff] %v4127
        %4160 = vst [vmem:[%s163 + $0x40] sm:$0xff] %v4128
        %4161 = vst [vmem:[%s163 + $0x48] sm:$0xff] %v4129
        %4162 = vst [vmem:[%s163 + $0x50] sm:$0xff] %v4130
        %4163 = vst [vmem:[%s163 + $0x58] sm:$0xff] %v4131
        %4164 = vst [vmem:[%s163 + $0x60] sm:$0xff] %v4132
        %4165 = vst [vmem:[%s163 + $0x68] sm:$0xff] %v4133
        %4166 = vst [vmem:[%s163 + $0x70] sm:$0xff] %v4134
        %4167 = vst [vmem:[%s163 + $0x78] sm:$0xff] %v4135
        %4168 = vst [vmem:[%s163 + $0x80] sm:$0xff] %v4136
        %4169 = vst [vmem:[%s163 + $0x88] sm:$0xff] %v4137
        %4170 = vst [vmem:[%s163 + $0x90] sm:$0xff] %v4138
        %4171 = vst [vmem:[%s163 + $0x98] sm:$0xff] %v4139
        %4172 = vst [vmem:[%s163 + $0xa0] sm:$0xff] %v4140
        %4173 = vst [vmem:[%s163 + $0xa8] sm:$0xff] %v4141
        %4174 = vst [vmem:[%s163 + $0xb0] sm:$0xff] %v4142
        %4175 = vst [vmem:[%s163 + $0xb8] sm:$0xff] %v4143
        %4176 = vst [vmem:[%s163 + $0xc0] sm:$0xff] %v4144
        %4177 = vst [vmem:[%s163 + $0xc8] sm:$0xff] %v4145
        %4178 = vst [vmem:[%s163 + $0xd0] sm:$0xff] %v4146
        %4179 = vst [vmem:[%s163 + $0xd8] sm:$0xff] %v4147
        %4180 = vst [vmem:[%s163 + $0xe0] sm:$0xff] %v4148
        %4181 = vst [vmem:[%s163 + $0xe8] sm:$0xff] %v4149
        %4182 = vst [vmem:[%s163 + $0xf0] sm:$0xff] %v4150
        %4183 = vst [vmem:[%s163 + $0xf8] sm:$0xff] %v4151
        %s4184 = sand.u32 %s93, 1
        %s4185 = scalar_lea.sflag [#allocation3], %s4184
        %s4186 = sand.u32 %s93, 1
        %s4187 = smul.addr %s4186, 256
        %s4188 = scalar_lea.vmem [#allocation2], %s4187
        // Predicated region
        $region33: #{a_call__.1} parent=31 // pred_check
          %p4189 = pneg %p103
        $region34: #{a_call__.1} parent=31 // pred_check_branch
          %4191 = sbr.rel (%p4189) target = $region36
        $region35: #{a_call__.1} parent=31 // pred_region
          %4193 = vsyncadd %s4185, 0
          %s4194 = smul.addr %s17, 32
          %s4195 = smul.addr %s4194, 8
          %s4196 = scalar_lea.hbm %s3, %s4195
          %s4197 = sshll.u32 %s4188, 4
          %s4198 = int_to_ptr.vmem [resolvable:$true] %s4197
          %s4199 = sshll.u32 %s4196, 4
          %s4200 = int_to_ptr.hbm [resolvable:$true] %s4199
          %4205 = dma.vmem_to_hbm [thread:$0]  %s4198, 4096, %s4200, %s4185, 128, 128, 8
        $region36: #{a_call__.1} parent=31 // pred_fallthru
          _
      $region32: #{a_call__.1} parent=5 // pred_fallthru
        _
      %p4206 = scmp.le.s32.totalorder 2, %s12
      // Predicated region
      $region37: #{a_call__.1} parent=5 // pred_check
        %p4207 = pneg %p4206
      $region38: #{a_call__.1} parent=5 // pred_check_branch
        %4209 = sbr.rel (%p4207) target = $region40
      $region39: #{a_call__.1} parent=5 // pred_region
        %s4210 = ssub.s32 %s12, 2
        // Predicated region
        $region41: #{a_call__.1} parent=39 // pred_check
          %p4211 = pneg %p109
        $region42: #{a_call__.1} parent=39 // pred_check_branch
          %4213 = sbr.rel (%p4211) target = $region44
        $region43: #{a_call__.1} parent=39 // pred_region
          %s4214 = sand.u32 %s94, 1
          %s4215 = scalar_lea.sflag [#allocation3], %s4214
          %s4216 = sand.u32 %s94, 1
          %s4217 = smul.addr %s4216, 256
          %s4218 = scalar_lea.vmem [#allocation2], %s4217
          %4220 = dma.done %s4215, 4096
        $region44: #{a_call__.1} parent=39 // pred_fallthru
          _
      $region40: #{a_call__.1} parent=5 // pred_fallthru
        _
    $region6: #{a_call__.1} parent=1 // loop_footer
      %s16 = sadd.s32 1, %s12
    $region7: #{a_call__.1} parent=1 // loop_footer_branch
      %11 = sbr.rel target = $region3
    $region8: #{a_call__.1} parent=1 // loop_exit
      _
    %4221 = vsyncpa [#allocation3], 1
    %s4222 = scalar_lea.sflag [#allocation3], 1
    %4223 = vsyncpa %s4222, 1

</llo_original>
